<compile_context>
chip_gen: v7x
topology: tpu7x:2x2x1
jax: 0.10.0
libtpu: 0.0.40
codegen_flags: <defaults>
</compile_context>

<pallas_src>
import functools
import math

import jax
import jax.numpy as jnp
from jax import lax
from jax.experimental import pallas as pl
from jax.experimental.pallas import tpu as pltpu


def _contrastive_kernel(feat_row_ref, feat_col_ref, lab_rows_ref, lab_cols_ref,
                        out_ref, a_ref, m_ref, s_ref, p_ref, c_ref, *,
                        inv_temp, block_m, block_n, n_valid, n_col_blocks,
                        resident):
    i = pl.program_id(0)                       # row block   ("parallel")
    j = pl.program_id(1)                       # col block   ("arbitrary", innermost)
    row_start = i * block_m
    col_start = j * block_n
    row_valid = row_start < n_valid            # block contains >= 1 real row
    col_valid = col_start < n_valid            # block contains >= 1 real column

    # ---- once per row block: init accumulators, stage scaled bf16 row tile --
    @pl.when((j == 0) & row_valid)
    def _():
        a_ref[...] = (feat_row_ref[...] * inv_temp).astype(a_ref.dtype)
        m_ref[...] = jnp.full((block_m, 1), -jnp.inf, dtype=jnp.float32)
        s_ref[...] = jnp.zeros((block_m, 1), dtype=jnp.float32)
        p_ref[...] = jnp.zeros((block_m, 1), dtype=jnp.float32)
        c_ref[...] = jnp.zeros((block_m, 1), dtype=jnp.float32)

    # ---- main tile: skipped entirely for all-padding row/column blocks ------
    @pl.when(row_valid & col_valid)
    def _():
        if resident:
            c0 = pl.multiple_of(col_start, block_n)
            b = feat_col_ref[pl.ds(c0, block_n), :]            # (TN, D) bf16
        else:
            b = feat_col_ref[...]                              # (TN, D) bf16
        sim = lax.dot_general(a_ref[...], b, (((1,), (1,)), ((), ())),
                              preferred_element_type=jnp.float32)  # (TM, TN) f32

        lab_i = lab_rows_ref[...]                              # (TM, 1) int32
        lab_j = lab_cols_ref[...]                              # (1, TN) int32
        ri = row_start + lax.broadcasted_iota(jnp.int32, (block_m, 1), 0)
        cj = col_start + lax.broadcasted_iota(jnp.int32, (1, block_n), 1)
        # Pad columns carry label -1 and real labels are remapped to >= 0 in
        # the wrapper, so no explicit `cj < n_valid` term is needed.
        pos = (lab_i == lab_j) & (ri != cj)                    # (TM, TN) bool

        m_prev = m_ref[...]
        m_new = jnp.maximum(m_prev, jnp.max(sim, axis=1, keepdims=True))
        alpha = jnp.exp(m_prev - m_new)
        e = jnp.where(pos, jnp.exp(sim - m_new), 0.0)
        s_ref[...] = s_ref[...] * alpha + jnp.sum(e, axis=1, keepdims=True)
        p_ref[...] = p_ref[...] + jnp.sum(jnp.where(pos, sim, 0.0),
                                          axis=1, keepdims=True)
        c_ref[...] = c_ref[...] + jnp.sum(pos.astype(jnp.float32),
                                          axis=1, keepdims=True)
        m_ref[...] = m_new

    # ---- finalize on the last column block -----------------------------------
    # Note: (TM, 1) output is not lane-dense; total volume is only N floats so
    # this is kept simple on purpose (review item marked low priority).
    @pl.when(j == n_col_blocks - 1)
    def _():
        @pl.when(row_valid)
        def _():
            ri = row_start + lax.broadcasted_iota(jnp.int32, (block_m, 1), 0)
            val = p_ref[...] / c_ref[...] - m_ref[...] - jnp.log(s_ref[...])
            # padded rows are forced to exact 0.0 so sum/N is the masked mean
            out_ref[...] = jnp.where(ri < n_valid, val, 0.0)

        @pl.when(jnp.logical_not(row_valid))
        def _():
            out_ref[...] = jnp.zeros_like(out_ref)


def _round_up(x: int, m: int) -> int:
    return (x + m - 1) // m * m


def _vmem_capacity_bytes() -> int:
    try:
        return int(pltpu.get_tpu_info().vmem_capacity_bytes)
    except Exception:
        return 64 * 1024 * 1024          # conservative fallback (v7x per-TC)


@functools.partial(
    jax.jit, static_argnames=("temperature", "block_m", "block_n", "resident"))
def contrastive_loss(features, labels, temperature: float = 0.5,
                     block_m: int = 256, block_n: int = 256,
                     resident=None):
    """Pallas forward of ContrastiveLoss. features: (N, D) float; labels: (N,) int."""
    n, d = features.shape
    n_pad = _round_up(n, math.lcm(block_m, block_n))
    d_pad = _round_up(d, 128)                     # lane-dense contraction dim

    # Pad + cast to bf16 in one fused XLA op (halves DMA bytes & VMEM bytes).
    feat = jnp.pad(features.astype(jnp.bfloat16),
                   ((0, n_pad - n), (0, d_pad - d)))
    # Remap labels to >= 0 so the pad label (-1) can never match a real label.
    lab = labels.astype(jnp.int32)
    lab = lab - jnp.min(lab)
    lab = jnp.pad(lab, (0, n_pad - n), constant_values=-1)
    lab_rows = lab.reshape(n_pad, 1)
    lab_cols = lab.reshape(1, n_pad)

    n_row_blocks = n_pad // block_m
    n_col_blocks = n_pad // block_n

    # ---- per-generation VMEM budget (per TensorCore, not per chip) ----------
    vmem_cap = _vmem_capacity_bytes()
    vmem_limit = int(vmem_cap * 7 // 8)           # ~112 MiB v5e/v6e, ~56 MiB v7x
    bpe = 2                                       # bf16 feature bytes
    work_bytes = (2 * block_m * d_pad * bpe       # row tiles (double-buffered)
                  + block_m * d_pad * bpe         # scaled-row scratch
                  + 2 * block_m * block_n * 4     # f32 sim tile + mask temps
                  + 8 * block_m * 4               # accumulators (w/ headroom)
                  + 4 * (block_m + block_n))      # label tiles
    resident_bytes = 2 * n_pad * d_pad * bpe      # whole matrix, double-buffered
    # TODO(synk): with pipeline_mode=pl.Buffered(1) on the resident spec the
    # factor 2 above drops to 1 (doubling the largest resident N); left out to
    # keep the lowering path maximally portable across jax versions.
    if resident is None:
        resident = resident_bytes + work_bytes <= int(0.7 * vmem_limit)
    resident = bool(resident)

    if resident:
        col_spec = pl.BlockSpec((n_pad, d_pad), lambda i, j: (0, 0))
        col_stream_bytes = n_pad * d_pad * bpe                    # read once
    else:
        col_spec = pl.BlockSpec((block_n, d_pad), lambda i, j: (j, 0))
        col_stream_bytes = n_row_blocks * n_pad * d_pad * bpe     # re-streamed

    kernel = functools.partial(
        _contrastive_kernel,
        inv_temp=float(1.0 / temperature),
        block_m=block_m, block_n=block_n, n_valid=n,
        n_col_blocks=n_col_blocks, resident=resident)

    cost = pl.CostEstimate(
        flops=2 * n_pad * n_pad * d_pad,
        transcendentals=n_pad * n_pad,
        bytes_accessed=(n_pad * d_pad * bpe       # row tiles
                        + col_stream_bytes        # column operand
                        + 2 * n_pad * 4           # labels (row + col views)
                        + n_pad * 4))             # per-row output

    per_row = pl.pallas_call(
        kernel,
        out_shape=jax.ShapeDtypeStruct((n_pad, 1), jnp.float32),
        grid_spec=pltpu.PrefetchScalarGridSpec(
            num_scalar_prefetch=0,
            grid=(n_row_blocks, n_col_blocks),
            in_specs=[
                pl.BlockSpec((block_m, d_pad), lambda i, j: (i, 0)),  # row tile
                col_spec,                                             # col operand
                pl.BlockSpec((block_m, 1), lambda i, j: (i, 0)),      # row labels
                pl.BlockSpec((1, block_n), lambda i, j: (0, j)),      # col labels
            ],
            out_specs=pl.BlockSpec((block_m, 1), lambda i, j: (i, 0)),
            scratch_shapes=[
                pltpu.VMEM((block_m, d_pad), jnp.bfloat16),   # scaled row tile
                pltpu.VMEM((block_m, 1), jnp.float32),        # m (running max)
                pltpu.VMEM((block_m, 1), jnp.float32),        # S (masked expsum)
                pltpu.VMEM((block_m, 1), jnp.float32),        # P (masked sim sum)
                pltpu.VMEM((block_m, 1), jnp.float32),        # C (mask count)
            ],
        ),
        compiler_params=pltpu.CompilerParams(
            dimension_semantics=("parallel", "arbitrary"),
            vmem_limit_bytes=vmem_limit),
        cost_estimate=cost,
    )(feat, feat, lab_rows, lab_cols)

    # padded rows contribute exact zeros, so sum / n is the mean over real rows
    return -(jnp.sum(per_row) / n)


def contrastive_loss_ref(features, labels, temperature: float = 0.5):
    """Pure-JAX f32 reference mirroring the PyTorch module line-by-line."""
    labels = labels.reshape(-1, 1)
    mask = (labels == labels.T).astype(jnp.float32)
    sim = jnp.matmul(features, features.T) / temperature
    logits_max = jnp.max(sim, axis=1, keepdims=True)
    logits = sim - logits_max
    n = features.shape[0]
    mask = mask * (1.0 - jnp.eye(n, dtype=jnp.float32))
    exp_logits = jnp.exp(logits) * mask
    log_prob = logits - jnp.log(exp_logits.sum(1, keepdims=True))
    mean_log_prob_pos = (mask * log_prob).sum(1) / mask.sum(1)
    return -mean_log_prob_pos.mean()


if __name__ == "__main__":
    key = jax.random.PRNGKey(0)
    k1, k2 = jax.random.split(key)

    # --- test 1: tiny batch, single padded tile (resident path) ---------------
    N1, D1 = 8, 32
    f1 = jax.random.normal(k1, (N1, D1), dtype=jnp.float32)
    f1 = f1 / jnp.linalg.norm(f1, axis=1, keepdims=True)
    l1 = jnp.array([0, 1, 0, 1, 2, 2, 0, 1], dtype=jnp.int32)   # every label >= 2x

    out1 = contrastive_loss(f1, l1, temperature=0.5)
    jax.block_until_ready(out1)
    ref1 = contrastive_loss_ref(f1, l1, temperature=0.5)
    assert jnp.allclose(out1, ref1, rtol=3e-2, atol=3e-2), (out1, ref1)

    # --- test 2: multi-tile grid, row/col padding, negative labels (remap) ----
    N2, D2 = 300, 48
    f2 = jax.random.normal(k2, (N2, D2), dtype=jnp.float32)
    f2 = f2 / jnp.linalg.norm(f2, axis=1, keepdims=True)
    l2 = (jnp.arange(N2, dtype=jnp.int32) % 6) - 3              # 6 classes, 50 each

    out2 = contrastive_loss(f2, l2, temperature=0.5)
    jax.block_until_ready(out2)
    ref2 = contrastive_loss_ref(f2, l2, temperature=0.5)
    assert jnp.allclose(out2, ref2, rtol=3e-2, atol=3e-2), (out2, ref2)

    # --- test 3: force the streaming (large-N) code path on the same data -----
    out3 = contrastive_loss(f2, l2, temperature=0.5, resident=False)
    jax.block_until_ready(out3)
    assert jnp.allclose(out3, ref2, rtol=3e-2, atol=3e-2), (out3, ref2)

    print("KERNEL_OK")
</pallas_src>

<mosaic_0001>
module attributes {stable_mosaic.version = 11 : i64} {
  func.func @_contrastive_kernel(%arg0: i32, %arg1: i32, %arg2: memref<256x128xbf16, #tpu.memory_space<vmem>>, %arg3: memref<256x128xbf16, #tpu.memory_space<vmem>>, %arg4: memref<256x1xi32, #tpu.memory_space<vmem>>, %arg5: memref<1x256xi32, #tpu.memory_space<vmem>>, %arg6: memref<256x1xf32, #tpu.memory_space<vmem>>, %arg7: memref<256x128xbf16, #tpu.memory_space<vmem>>, %arg8: memref<256x1xf32, #tpu.memory_space<vmem>>, %arg9: memref<256x1xf32, #tpu.memory_space<vmem>>, %arg10: memref<256x1xf32, #tpu.memory_space<vmem>>, %arg11: memref<256x1xf32, #tpu.memory_space<vmem>>) attributes {dimension_semantics = [#tpu.dimension_semantics<parallel>, #tpu.dimension_semantics<arbitrary>], iteration_bounds = array<i64: 1, 1>, scalar_prefetch = 0 : i64, scratch_operands = 5 : i64, tpu.core_type = #tpu.core_type<tc>, window_params = [{transform_indices = @transform_0, window_bounds = array<i64: 256, 128>}, {pipeline_mode = #tpu.pipeline_mode<synchronous>, transform_indices = @transform_1, window_bounds = array<i64: 256, 128>}, {transform_indices = @transform_2, window_bounds = array<i64: 256, 1>}, {transform_indices = @transform_3, window_bounds = array<i64: 1, 256>}, {transform_indices = @transform_4, window_bounds = array<i64: 256, 1>}]} {
    %c256_i32 = arith.constant 256 : i32
    %0 = arith.muli %arg0, %c256_i32 : i32
    %c256_i32_0 = arith.constant 256 : i32
    %1 = arith.muli %arg1, %c256_i32_0 : i32
    %c8_i32 = arith.constant 8 : i32
    %2 = arith.cmpi slt, %0, %c8_i32 : i32
    %c8_i32_1 = arith.constant 8 : i32
    %3 = arith.cmpi slt, %1, %c8_i32_1 : i32
    %c0_i32 = arith.constant 0 : i32
    %4 = arith.cmpi eq, %arg1, %c0_i32 : i32
    %5 = arith.andi %4, %2 : i1
    %6 = arith.extui %5 : i1 to i32
    %c0_i32_2 = arith.constant 0 : i32
    %7 = arith.cmpi ne, %6, %c0_i32_2 : i32
    scf.if %7 {
      %c0 = arith.constant 0 : index
      %c0_6 = arith.constant 0 : index
      %14 = vector.load %arg2[%c0, %c0_6] : memref<256x128xbf16, #tpu.memory_space<vmem>>, vector<256x128xbf16>
      %cst = arith.constant 2.000000e+00 : bf16
      %15 = vector.broadcast %cst : bf16 to vector<256x128xbf16>
      %16 = arith.mulf %14, %15 : vector<256x128xbf16>
      %c0_7 = arith.constant 0 : index
      %c0_8 = arith.constant 0 : index
      %17 = vector.load %arg7[%c0_7, %c0_8] : memref<256x128xbf16, #tpu.memory_space<vmem>>, vector<256x128xbf16>
      tpu.vector_store %arg7[%c0_7, %c0_8], %16 {strides = array<i32>} : memref<256x128xbf16, #tpu.memory_space<vmem>>, vector<256x128xbf16>,
      %cst_9 = arith.constant 0xFF800000 : f32
      %18 = vector.broadcast %cst_9 : f32 to vector<256x1xf32>
      %c0_10 = arith.constant 0 : index
      %c0_11 = arith.constant 0 : index
      %19 = vector.load %arg8[%c0_10, %c0_11] : memref<256x1xf32, #tpu.memory_space<vmem>>, vector<256x1xf32>
      tpu.vector_store %arg8[%c0_10, %c0_11], %18 {strides = array<i32>} : memref<256x1xf32, #tpu.memory_space<vmem>>, vector<256x1xf32>,
      %cst_12 = arith.constant 0.000000e+00 : f32
      %20 = vector.broadcast %cst_12 : f32 to vector<256x1xf32>
      %c0_13 = arith.constant 0 : index
      %c0_14 = arith.constant 0 : index
      %21 = vector.load %arg9[%c0_13, %c0_14] : memref<256x1xf32, #tpu.memory_space<vmem>>, vector<256x1xf32>
      tpu.vector_store %arg9[%c0_13, %c0_14], %20 {strides = array<i32>} : memref<256x1xf32, #tpu.memory_space<vmem>>, vector<256x1xf32>,
      %cst_15 = arith.constant 0.000000e+00 : f32
      %22 = vector.broadcast %cst_15 : f32 to vector<256x1xf32>
      %c0_16 = arith.constant 0 : index
      %c0_17 = arith.constant 0 : index
      %23 = vector.load %arg10[%c0_16, %c0_17] : memref<256x1xf32, #tpu.memory_space<vmem>>, vector<256x1xf32>
      tpu.vector_store %arg10[%c0_16, %c0_17], %22 {strides = array<i32>} : memref<256x1xf32, #tpu.memory_space<vmem>>, vector<256x1xf32>,
      %cst_18 = arith.constant 0.000000e+00 : f32
      %24 = vector.broadcast %cst_18 : f32 to vector<256x1xf32>
      %c0_19 = arith.constant 0 : index
      %c0_20 = arith.constant 0 : index
      %25 = vector.load %arg11[%c0_19, %c0_20] : memref<256x1xf32, #tpu.memory_space<vmem>>, vector<256x1xf32>
      tpu.vector_store %arg11[%c0_19, %c0_20], %24 {strides = array<i32>} : memref<256x1xf32, #tpu.memory_space<vmem>>, vector<256x1xf32>,
    } else {
    }
    %8 = arith.andi %2, %3 : i1
    %9 = arith.extui %8 : i1 to i32
    %c0_i32_3 = arith.constant 0 : i32
    %10 = arith.cmpi ne, %9, %c0_i32_3 : i32
    scf.if %10 {
      %14 = tpu.assume_multiple %1, 256 : i32
      %15 = arith.index_cast %14 : i32 to index
      %c0 = arith.constant 0 : index
      %16 = vector.load %arg3[%15, %c0] : memref<256x128xbf16, #tpu.memory_space<vmem>>, vector<256x128xbf16>
      %c0_6 = arith.constant 0 : index
      %c0_7 = arith.constant 0 : index
      %17 = vector.load %arg7[%c0_6, %c0_7] : memref<256x128xbf16, #tpu.memory_space<vmem>>, vector<256x128xbf16>
      %cst = arith.constant dense<0.000000e+00> : vector<256x256xf32>
      %18 = tpu.matmul %17, %16, %cst {dimension_numbers = #tpu.dot_dimension_numbers<[1], [1], [0], [0], [0, 0, 1, 0], [], []>} : vector<256x128xbf16>, vector<256x128xbf16>, vector<256x256xf32> -> vector<256x256xf32>
      %c0_8 = arith.constant 0 : index
      %c0_9 = arith.constant 0 : index
      %19 = vector.load %arg4[%c0_8, %c0_9] : memref<256x1xi32, #tpu.memory_space<vmem>>, vector<256x1xi32>
      %c0_10 = arith.constant 0 : index
      %c0_11 = arith.constant 0 : index
      %20 = vector.load %arg5[%c0_10, %c0_11] : memref<1x256xi32, #tpu.memory_space<vmem>>, vector<1x256xi32>
      %21 = tpu.iota {dimensions = array<i32: 0>} : vector<256x1xi32>
      %22 = vector.broadcast %0 : i32 to vector<256x1xi32>
      %23 = arith.addi %22, %21 : vector<256x1xi32>
      %24 = tpu.iota {dimensions = array<i32: 1>} : vector<1x256xi32>
      %25 = vector.broadcast %1 : i32 to vector<1x256xi32>
      %26 = arith.addi %25, %24 : vector<1x256xi32>
      %27 = vector.broadcast %19 : vector<256x1xi32> to vector<256x256xi32>
      %28 = vector.broadcast %20 : vector<1x256xi32> to vector<256x256xi32>
      %29 = arith.cmpi eq, %27, %28 : vector<256x256xi32>
      %30 = vector.broadcast %23 : vector<256x1xi32> to vector<256x256xi32>
      %31 = vector.broadcast %26 : vector<1x256xi32> to vector<256x256xi32>
      %32 = arith.cmpi ne, %30, %31 : vector<256x256xi32>
      %33 = arith.andi %29, %32 : vector<256x256xi1>
      %c0_12 = arith.constant 0 : index
      %c0_13 = arith.constant 0 : index
      %34 = vector.load %arg8[%c0_12, %c0_13] : memref<256x1xf32, #tpu.memory_space<vmem>>, vector<256x1xf32>
      %cst_14 = arith.constant dense<0xFF800000> : vector<256xf32>
      %35 = vector.multi_reduction <maximumf>, %18, %cst_14 [1] : vector<256x256xf32> to vector<256xf32>
      %36 = vector.shape_cast %35 : vector<256xf32> to vector<256x1xf32>
      %37 = arith.maximumf %34, %36 : vector<256x1xf32>
      %38 = arith.subf %34, %37 : vector<256x1xf32>
      %39 = math.exp %38 : vector<256x1xf32>
      %40 = vector.broadcast %37 : vector<256x1xf32> to vector<256x256xf32>
      %41 = arith.subf %18, %40 : vector<256x256xf32>
      %42 = math.exp %41 : vector<256x256xf32>
      %cst_15 = arith.constant 0.000000e+00 : f32
      %43 = vector.broadcast %cst_15 : f32 to vector<256x256xf32>
      %44 = arith.select %33, %42, %43 : vector<256x256xi1>, vector<256x256xf32>
      %c0_16 = arith.constant 0 : index
      %c0_17 = arith.constant 0 : index
      %45 = vector.load %arg9[%c0_16, %c0_17] : memref<256x1xf32, #tpu.memory_space<vmem>>, vector<256x1xf32>
      %46 = arith.mulf %45, %39 : vector<256x1xf32>
      %cst_18 = arith.constant dense<0.000000e+00> : vector<256xf32>
      %47 = vector.multi_reduction <add>, %44, %cst_18 [1] : vector<256x256xf32> to vector<256xf32>
      %48 = vector.shape_cast %47 : vector<256xf32> to vector<256x1xf32>
      %49 = arith.addf %46, %48 : vector<256x1xf32>
      %c0_19 = arith.constant 0 : index
      %c0_20 = arith.constant 0 : index
      %50 = vector.load %arg9[%c0_19, %c0_20] : memref<256x1xf32, #tpu.memory_space<vmem>>, vector<256x1xf32>
      tpu.vector_store %arg9[%c0_19, %c0_20], %49 {strides = array<i32>} : memref<256x1xf32, #tpu.memory_space<vmem>>, vector<256x1xf32>,
      %c0_21 = arith.constant 0 : index
      %c0_22 = arith.constant 0 : index
      %51 = vector.load %arg10[%c0_21, %c0_22] : memref<256x1xf32, #tpu.memory_space<vmem>>, vector<256x1xf32>
      %cst_23 = arith.constant 0.000000e+00 : f32
      %52 = vector.broadcast %cst_23 : f32 to vector<256x256xf32>
      %53 = arith.select %33, %18, %52 : vector<256x256xi1>, vector<256x256xf32>
      %cst_24 = arith.constant dense<0.000000e+00> : vector<256xf32>
      %54 = vector.multi_reduction <add>, %53, %cst_24 [1] : vector<256x256xf32> to vector<256xf32>
      %55 = vector.shape_cast %54 : vector<256xf32> to vector<256x1xf32>
      %56 = arith.addf %51, %55 : vector<256x1xf32>
      %c0_25 = arith.constant 0 : index
      %c0_26 = arith.constant 0 : index
      %57 = vector.load %arg10[%c0_25, %c0_26] : memref<256x1xf32, #tpu.memory_space<vmem>>, vector<256x1xf32>
      tpu.vector_store %arg10[%c0_25, %c0_26], %56 {strides = array<i32>} : memref<256x1xf32, #tpu.memory_space<vmem>>, vector<256x1xf32>,
      %c0_27 = arith.constant 0 : index
      %c0_28 = arith.constant 0 : index
      %58 = vector.load %arg11[%c0_27, %c0_28] : memref<256x1xf32, #tpu.memory_space<vmem>>, vector<256x1xf32>
      %59 = arith.extui %33 : vector<256x256xi1> to vector<256x256xi32>
      %60 = arith.sitofp %59 : vector<256x256xi32> to vector<256x256xf32>
      %cst_29 = arith.constant dense<0.000000e+00> : vector<256xf32>
      %61 = vector.multi_reduction <add>, %60, %cst_29 [1] : vector<256x256xf32> to vector<256xf32>
      %62 = vector.shape_cast %61 : vector<256xf32> to vector<256x1xf32>
      %63 = arith.addf %58, %62 : vector<256x1xf32>
      %c0_30 = arith.constant 0 : index
      %c0_31 = arith.constant 0 : index
      %64 = vector.load %arg11[%c0_30, %c0_31] : memref<256x1xf32, #tpu.memory_space<vmem>>, vector<256x1xf32>
      tpu.vector_store %arg11[%c0_30, %c0_31], %63 {strides = array<i32>} : memref<256x1xf32, #tpu.memory_space<vmem>>, vector<256x1xf32>,
      %c0_32 = arith.constant 0 : index
      %c0_33 = arith.constant 0 : index
      %65 = vector.load %arg8[%c0_32, %c0_33] : memref<256x1xf32, #tpu.memory_space<vmem>>, vector<256x1xf32>
      tpu.vector_store %arg8[%c0_32, %c0_33], %37 {strides = array<i32>} : memref<256x1xf32, #tpu.memory_space<vmem>>, vector<256x1xf32>,
    } else {
    }
    %c0_i32_4 = arith.constant 0 : i32
    %11 = arith.cmpi eq, %arg1, %c0_i32_4 : i32
    %12 = arith.extui %11 : i1 to i32
    %c0_i32_5 = arith.constant 0 : i32
    %13 = arith.cmpi ne, %12, %c0_i32_5 : i32
    scf.if %13 {
      %14 = arith.extui %2 : i1 to i32
      %c0_i32_6 = arith.constant 0 : i32
      %15 = arith.cmpi ne, %14, %c0_i32_6 : i32
      scf.if %15 {
        %19 = tpu.iota {dimensions = array<i32: 0>} : vector<256x1xi32>
        %20 = vector.broadcast %0 : i32 to vector<256x1xi32>
        %21 = arith.addi %20, %19 : vector<256x1xi32>
        %c0 = arith.constant 0 : index
        %c0_8 = arith.constant 0 : index
        %22 = vector.load %arg10[%c0, %c0_8] : memref<256x1xf32, #tpu.memory_space<vmem>>, vector<256x1xf32>
        %c0_9 = arith.constant 0 : index
        %c0_10 = arith.constant 0 : index
        %23 = vector.load %arg11[%c0_9, %c0_10] : memref<256x1xf32, #tpu.memory_space<vmem>>, vector<256x1xf32>
        %24 = arith.divf %22, %23 : vector<256x1xf32>
        %c0_11 = arith.constant 0 : index
        %c0_12 = arith.constant 0 : index
        %25 = vector.load %arg8[%c0_11, %c0_12] : memref<256x1xf32, #tpu.memory_space<vmem>>, vector<256x1xf32>
        %26 = arith.subf %24, %25 : vector<256x1xf32>
        %c0_13 = arith.constant 0 : index
        %c0_14 = arith.constant 0 : index
        %27 = vector.load %arg9[%c0_13, %c0_14] : memref<256x1xf32, #tpu.memory_space<vmem>>, vector<256x1xf32>
        %28 = math.log %27 : vector<256x1xf32>
        %29 = arith.subf %26, %28 : vector<256x1xf32>
        %c8_i32_15 = arith.constant 8 : i32
        %30 = vector.broadcast %c8_i32_15 : i32 to vector<256x1xi32>
        %31 = arith.cmpi slt, %21, %30 : vector<256x1xi32>
        %cst = arith.constant 0.000000e+00 : f32
        %32 = vector.broadcast %cst : f32 to vector<256x1xf32>
        %33 = arith.select %31, %29, %32 : vector<256x1xi1>, vector<256x1xf32>
        %c0_16 = arith.constant 0 : index
        %c0_17 = arith.constant 0 : index
        %34 = vector.load %arg6[%c0_16, %c0_17] : memref<256x1xf32, #tpu.memory_space<vmem>>, vector<256x1xf32>
        tpu.vector_store %arg6[%c0_16, %c0_17], %33 {strides = array<i32>} : memref<256x1xf32, #tpu.memory_space<vmem>>, vector<256x1xf32>,
      } else {
      }
      %true = arith.constant true
      %16 = arith.xori %2, %true : i1
      %17 = arith.extui %16 : i1 to i32
      %c0_i32_7 = arith.constant 0 : i32
      %18 = arith.cmpi ne, %17, %c0_i32_7 : i32
      scf.if %18 {
        %cst = arith.constant 0.000000e+00 : f32
        %19 = vector.broadcast %cst : f32 to vector<256x1xf32>
        %c0 = arith.constant 0 : index
        %c0_8 = arith.constant 0 : index
        %20 = vector.load %arg6[%c0, %c0_8] : memref<256x1xf32, #tpu.memory_space<vmem>>, vector<256x1xf32>
        tpu.vector_store %arg6[%c0, %c0_8], %19 {strides = array<i32>} : memref<256x1xf32, #tpu.memory_space<vmem>>, vector<256x1xf32>,
      } else {
      }
    } else {
    }
    return
  }
  func.func @transform_0(%arg0: i32, %arg1: i32) -> (i32, i32) {
    %c0_i32 = arith.constant 0 : i32
    %c0_i32_0 = arith.constant 0 : i32
    return %arg0, %c0_i32 : i32, i32
  }
  func.func @transform_1(%arg0: i32, %arg1: i32) -> (i32, i32) {
    %c0_i32 = arith.constant 0 : i32
    %c0_i32_0 = arith.constant 0 : i32
    %c0_i32_1 = arith.constant 0 : i32
    return %c0_i32, %c0_i32_0 : i32, i32
  }
  func.func @transform_2(%arg0: i32, %arg1: i32) -> (i32, i32) {
    %c0_i32 = arith.constant 0 : i32
    %c0_i32_0 = arith.constant 0 : i32
    return %arg0, %c0_i32 : i32, i32
  }
  func.func @transform_3(%arg0: i32, %arg1: i32) -> (i32, i32) {
    %c0_i32 = arith.constant 0 : i32
    %c0_i32_0 = arith.constant 0 : i32
    return %c0_i32, %arg1 : i32, i32
  }
  func.func @transform_4(%arg0: i32, %arg1: i32) -> (i32, i32) {
    %c0_i32 = arith.constant 0 : i32
    %c0_i32_0 = arith.constant 0 : i32
    return %arg0, %c0_i32 : i32, i32
  }
}

</mosaic_0001>

<llo_original>
// kernel: contrastive_loss.1
$region0: #{contrastive_loss.1}
  #allocation0 [shape = 'u32[]', space=smem, size = 0x4, offset = 0x4, fixed_abs, tag = 'smem constant byte address 0x4 - core index']
  #allocation1 [shape = 'u32[144,128]{1,0:T(1,128)}', space=vmem, size = 0x12000, scoped, tag = 'internal scratch']
  #allocation2 [shape = 'bf16[256,128]{1,0:T(16,128)(2,1)}', space=vmem, size = 0x10000, scoped, tag = 'scratch operand']
  #allocation3 [shape = 'f32[256,1]{1,0:T(8,128)}', space=vmem, size = 0x20000, scoped, tag = 'scratch operand']
  #allocation4 [shape = 'f32[256,1]{1,0:T(8,128)}', space=vmem, size = 0x20000, scoped, tag = 'scratch operand']
  #allocation5 [shape = 'f32[256,1]{1,0:T(8,128)}', space=vmem, size = 0x20000, scoped, tag = 'scratch operand']
  #allocation6 [shape = 'f32[256,1]{1,0:T(8,128)}', space=vmem, size = 0x20000, scoped, tag = 'scratch operand']
  %s0 = inlined_call_operand.vmem [shape: bf16[256,128], index: 0, kind: input, shape index: {}, may-alias: {0,1}]
  %s1 = inlined_call_operand.vmem [shape: bf16[256,128], index: 1, kind: input, shape index: {}, may-alias: {0,1}]
  %s2 = inlined_call_operand.vmem [shape: s32[256,1], index: 2, kind: input, shape index: {}]
  %s3 = inlined_call_operand.vmem [shape: s32[1,256], index: 3, kind: input, shape index: {}]
  %s4 = inlined_call_operand.vmem [shape: f32[256,1], index: 4, kind: output, shape index: {}]
  %s5 = sld [smem:[#allocation0]]
  $region46: #{contrastive_loss.1} parent=0
    _
  %s7 = ssub.s32 1, %s5
  %s8 = scalar_select 0, %s7, %s5
  // Predicated region
  $region2: #{contrastive_loss.1} parent=0 // pred_check
    _
  $region3: #{contrastive_loss.1} parent=0 // pred_check_branch
    %10 = sbr.rel (0) target = $region5
  $region4: #{contrastive_loss.1} parent=0 // pred_region
    _
  $region5: #{contrastive_loss.1} parent=0 // pred_fallthru
    _
  // Predicated region
  $region6: #{contrastive_loss.1} parent=0 // pred_check
    _
  $region7: #{contrastive_loss.1} parent=0 // pred_check_branch
    %12 = sbr.rel (0) target = $region9
  $region8: #{contrastive_loss.1} parent=0 // pred_region
    _
  $region9: #{contrastive_loss.1} parent=0 // pred_fallthru
    _
  // Predicated region
  $region10: #{contrastive_loss.1} parent=0 // pred_check
    _
  $region11: #{contrastive_loss.1} parent=0 // pred_check_branch
    %14 = sbr.rel (0) target = $region13
  $region12: #{contrastive_loss.1} parent=0 // pred_region
    _
  $region13: #{contrastive_loss.1} parent=0 // pred_fallthru
    _
  // Predicated region
  $region14: #{contrastive_loss.1} parent=0 // pred_check
    _
  $region15: #{contrastive_loss.1} parent=0 // pred_check_branch
    %16 = sbr.rel (0) target = $region17
  $region16: #{contrastive_loss.1} parent=0 // pred_region
    _
  $region17: #{contrastive_loss.1} parent=0 // pred_fallthru
    _
  %s19 = smul.u32 0, 256
  %s20 = smul.u32 0, 256
  %p21 = scmp.lt.s32.totalorder %s19, 8
  %p22 = scmp.lt.s32.totalorder %s20, 8
  %p23 = scmp.eq.s32.totalorder 0, 0
  %p24 = pnand %p23, %p21
  %p25 = pneg %p24
  // Predicated region
  $region18: #{contrastive_loss.1} parent=0 // pred_check
    _
  $region19: #{contrastive_loss.1} parent=0 // pred_check_branch
    %27 = sbr.rel (%p24) target = $region21
  $region20: #{contrastive_loss.1} parent=0 // pred_region
    %v28 = vld [vmem:[%s0] sm:$0xf]
    %v29 = vld [vmem:[%s0 + $0x4] sm:$0xf]
    %v30 = vld [vmem:[%s0 + $0x8] sm:$0xf]
    %v31 = vld [vmem:[%s0 + $0xc] sm:$0xf]
    %v32 = vld [vmem:[%s0 + $0x10] sm:$0xf]
    %v33 = vld [vmem:[%s0 + $0x14] sm:$0xf]
    %v34 = vld [vmem:[%s0 + $0x18] sm:$0xf]
    %v35 = vld [vmem:[%s0 + $0x1c] sm:$0xf]
    %v36 = vld [vmem:[%s0 + $0x20] sm:$0xf]
    %v37 = vld [vmem:[%s0 + $0x24] sm:$0xf]
    %v38 = vld [vmem:[%s0 + $0x28] sm:$0xf]
    %v39 = vld [vmem:[%s0 + $0x2c] sm:$0xf]
    %v40 = vld [vmem:[%s0 + $0x30] sm:$0xf]
    %v41 = vld [vmem:[%s0 + $0x34] sm:$0xf]
    %v42 = vld [vmem:[%s0 + $0x38] sm:$0xf]
    %v43 = vld [vmem:[%s0 + $0x3c] sm:$0xf]
    %v44 = vld [vmem:[%s0 + $0x40] sm:$0xf]
    %v45 = vld [vmem:[%s0 + $0x44] sm:$0xf]
    %v46 = vld [vmem:[%s0 + $0x48] sm:$0xf]
    %v47 = vld [vmem:[%s0 + $0x4c] sm:$0xf]
    %v48 = vld [vmem:[%s0 + $0x50] sm:$0xf]
    %v49 = vld [vmem:[%s0 + $0x54] sm:$0xf]
    %v50 = vld [vmem:[%s0 + $0x58] sm:$0xf]
    %v51 = vld [vmem:[%s0 + $0x5c] sm:$0xf]
    %v52 = vld [vmem:[%s0 + $0x60] sm:$0xf]
    %v53 = vld [vmem:[%s0 + $0x64] sm:$0xf]
    %v54 = vld [vmem:[%s0 + $0x68] sm:$0xf]
    %v55 = vld [vmem:[%s0 + $0x6c] sm:$0xf]
    %v56 = vld [vmem:[%s0 + $0x70] sm:$0xf]
    %v57 = vld [vmem:[%s0 + $0x74] sm:$0xf]
    %v58 = vld [vmem:[%s0 + $0x78] sm:$0xf]
    %v59 = vld [vmem:[%s0 + $0x7c] sm:$0xf]
    %v60 = vmul.bf16 %v28, 1073758208
    %v61 = vmul.bf16 %v29, 1073758208
    %v62 = vmul.bf16 %v30, 1073758208
    %v63 = vmul.bf16 %v31, 1073758208
    %v64 = vmul.bf16 %v32, 1073758208
    %v65 = vmul.bf16 %v33, 1073758208
    %v66 = vmul.bf16 %v34, 1073758208
    %v67 = vmul.bf16 %v35, 1073758208
    %v68 = vmul.bf16 %v36, 1073758208
    %v69 = vmul.bf16 %v37, 1073758208
    %v70 = vmul.bf16 %v38, 1073758208
    %v71 = vmul.bf16 %v39, 1073758208
    %v72 = vmul.bf16 %v40, 1073758208
    %v73 = vmul.bf16 %v41, 1073758208
    %v74 = vmul.bf16 %v42, 1073758208
    %v75 = vmul.bf16 %v43, 1073758208
    %v76 = vmul.bf16 %v44, 1073758208
    %v77 = vmul.bf16 %v45, 1073758208
    %v78 = vmul.bf16 %v46, 1073758208
    %v79 = vmul.bf16 %v47, 1073758208
    %v80 = vmul.bf16 %v48, 1073758208
    %v81 = vmul.bf16 %v49, 1073758208
    %v82 = vmul.bf16 %v50, 1073758208
    %v83 = vmul.bf16 %v51, 1073758208
    %v84 = vmul.bf16 %v52, 1073758208
    %v85 = vmul.bf16 %v53, 1073758208
    %v86 = vmul.bf16 %v54, 1073758208
    %v87 = vmul.bf16 %v55, 1073758208
    %v88 = vmul.bf16 %v56, 1073758208
    %v89 = vmul.bf16 %v57, 1073758208
    %v90 = vmul.bf16 %v58, 1073758208
    %v91 = vmul.bf16 %v59, 1073758208
    %v124 = vunpack.c.l.b16 %v60
    %v125 = vunpack.c.l.b16 %v61
    %v126 = vunpack.c.l.b16 %v62
    %v127 = vunpack.c.l.b16 %v63
    %v128 = vunpack.c.l.b16 %v64
    %v129 = vunpack.c.l.b16 %v65
    %v130 = vunpack.c.l.b16 %v66
    %v131 = vunpack.c.l.b16 %v67
    %v132 = vunpack.c.l.b16 %v68
    %v133 = vunpack.c.l.b16 %v69
    %v134 = vunpack.c.l.b16 %v70
    %v135 = vunpack.c.l.b16 %v71
    %v136 = vunpack.c.l.b16 %v72
    %v137 = vunpack.c.l.b16 %v73
    %v138 = vunpack.c.l.b16 %v74
    %v139 = vunpack.c.l.b16 %v75
    %v140 = vunpack.c.l.b16 %v76
    %v141 = vunpack.c.l.b16 %v77
    %v142 = vunpack.c.l.b16 %v78
    %v143 = vunpack.c.l.b16 %v79
    %v144 = vunpack.c.l.b16 %v80
    %v145 = vunpack.c.l.b16 %v81
    %v146 = vunpack.c.l.b16 %v82
    %v147 = vunpack.c.l.b16 %v83
    %v148 = vunpack.c.l.b16 %v84
    %v149 = vunpack.c.l.b16 %v85
    %v150 = vunpack.c.l.b16 %v86
    %v151 = vunpack.c.l.b16 %v87
    %v152 = vunpack.c.l.b16 %v88
    %v153 = vunpack.c.l.b16 %v89
    %v154 = vunpack.c.l.b16 %v90
    %v155 = vunpack.c.l.b16 %v91
    %v156 = vpack.c.b16 %v125, %v124
    %v157 = vpack.c.b16 %v127, %v126
    %v158 = vpack.c.b16 %v129, %v128
    %v159 = vpack.c.b16 %v131, %v130
    %v160 = vpack.c.b16 %v133, %v132
    %v161 = vpack.c.b16 %v135, %v134
    %v162 = vpack.c.b16 %v137, %v136
    %v163 = vpack.c.b16 %v139, %v138
    %v164 = vpack.c.b16 %v141, %v140
    %v165 = vpack.c.b16 %v143, %v142
    %v166 = vpack.c.b16 %v145, %v144
    %v167 = vpack.c.b16 %v147, %v146
    %v168 = vpack.c.b16 %v149, %v148
    %v169 = vpack.c.b16 %v151, %v150
    %v170 = vpack.c.b16 %v153, %v152
    %v171 = vpack.c.b16 %v155, %v154
    %188 = vst [vmem:[#allocation2] sm:$0xff] %v156
    %189 = vst [vmem:[#allocation2 + $0x8] sm:$0xff] %v157
    %190 = vst [vmem:[#allocation2 + $0x10] sm:$0xff] %v158
    %191 = vst [vmem:[#allocation2 + $0x18] sm:$0xff] %v159
    %192 = vst [vmem:[#allocation2 + $0x20] sm:$0xff] %v160
    %193 = vst [vmem:[#allocation2 + $0x28] sm:$0xff] %v161
    %194 = vst [vmem:[#allocation2 + $0x30] sm:$0xff] %v162
    %195 = vst [vmem:[#allocation2 + $0x38] sm:$0xff] %v163
    %196 = vst [vmem:[#allocation2 + $0x40] sm:$0xff] %v164
    %197 = vst [vmem:[#allocation2 + $0x48] sm:$0xff] %v165
    %198 = vst [vmem:[#allocation2 + $0x50] sm:$0xff] %v166
    %199 = vst [vmem:[#allocation2 + $0x58] sm:$0xff] %v167
    %200 = vst [vmem:[#allocation2 + $0x60] sm:$0xff] %v168
    %201 = vst [vmem:[#allocation2 + $0x68] sm:$0xff] %v169
    %202 = vst [vmem:[#allocation2 + $0x70] sm:$0xff] %v170
    %203 = vst [vmem:[#allocation2 + $0x78] sm:$0xff] %v171
    %vm204 = vcmask 7168
    %205 = vst.msk [vmem:[#allocation3] sm:$0xff] %vm204, -inf
    %206 = vst.msk [vmem:[#allocation3 + $0x8] sm:$0xff] %vm204, -inf
    %207 = vst.msk [vmem:[#allocation3 + $0x10] sm:$0xff] %vm204, -inf
    %208 = vst.msk [vmem:[#allocation3 + $0x18] sm:$0xff] %vm204, -inf
    %209 = vst.msk [vmem:[#allocation3 + $0x20] sm:$0xff] %vm204, -inf
    %210 = vst.msk [vmem:[#allocation3 + $0x28] sm:$0xff] %vm204, -inf
    %211 = vst.msk [vmem:[#allocation3 + $0x30] sm:$0xff] %vm204, -inf
    %212 = vst.msk [vmem:[#allocation3 + $0x38] sm:$0xff] %vm204, -inf
    %213 = vst.msk [vmem:[#allocation3 + $0x40] sm:$0xff] %vm204, -inf
    %214 = vst.msk [vmem:[#allocation3 + $0x48] sm:$0xff] %vm204, -inf
    %215 = vst.msk [vmem:[#allocation3 + $0x50] sm:$0xff] %vm204, -inf
    %216 = vst.msk [vmem:[#allocation3 + $0x58] sm:$0xff] %vm204, -inf
    %217 = vst.msk [vmem:[#allocation3 + $0x60] sm:$0xff] %vm204, -inf
    %218 = vst.msk [vmem:[#allocation3 + $0x68] sm:$0xff] %vm204, -inf
    %219 = vst.msk [vmem:[#allocation3 + $0x70] sm:$0xff] %vm204, -inf
    %220 = vst.msk [vmem:[#allocation3 + $0x78] sm:$0xff] %vm204, -inf
    %221 = vst.msk [vmem:[#allocation3 + $0x80] sm:$0xff] %vm204, -inf
    %222 = vst.msk [vmem:[#allocation3 + $0x88] sm:$0xff] %vm204, -inf
    %223 = vst.msk [vmem:[#allocation3 + $0x90] sm:$0xff] %vm204, -inf
    %224 = vst.msk [vmem:[#allocation3 + $0x98] sm:$0xff] %vm204, -inf
    %225 = vst.msk [vmem:[#allocation3 + $0xa0] sm:$0xff] %vm204, -inf
    %226 = vst.msk [vmem:[#allocation3 + $0xa8] sm:$0xff] %vm204, -inf
    %227 = vst.msk [vmem:[#allocation3 + $0xb0] sm:$0xff] %vm204, -inf
    %228 = vst.msk [vmem:[#allocation3 + $0xb8] sm:$0xff] %vm204, -inf
    %229 = vst.msk [vmem:[#allocation3 + $0xc0] sm:$0xff] %vm204, -inf
    %230 = vst.msk [vmem:[#allocation3 + $0xc8] sm:$0xff] %vm204, -inf
    %231 = vst.msk [vmem:[#allocation3 + $0xd0] sm:$0xff] %vm204, -inf
    %232 = vst.msk [vmem:[#allocation3 + $0xd8] sm:$0xff] %vm204, -inf
    %233 = vst.msk [vmem:[#allocation3 + $0xe0] sm:$0xff] %vm204, -inf
    %234 = vst.msk [vmem:[#allocation3 + $0xe8] sm:$0xff] %vm204, -inf
    %235 = vst.msk [vmem:[#allocation3 + $0xf0] sm:$0xff] %vm204, -inf
    %236 = vst.msk [vmem:[#allocation3 + $0xf8] sm:$0xff] %vm204, -inf
    %237 = vst.msk [vmem:[#allocation4] sm:$0xff] %vm204, 0.0
    %238 = vst.msk [vmem:[#allocation4 + $0x8] sm:$0xff] %vm204, 0.0
    %239 = vst.msk [vmem:[#allocation4 + $0x10] sm:$0xff] %vm204, 0.0
    %240 = vst.msk [vmem:[#allocation4 + $0x18] sm:$0xff] %vm204, 0.0
    %241 = vst.msk [vmem:[#allocation4 + $0x20] sm:$0xff] %vm204, 0.0
    %242 = vst.msk [vmem:[#allocation4 + $0x28] sm:$0xff] %vm204, 0.0
    %243 = vst.msk [vmem:[#allocation4 + $0x30] sm:$0xff] %vm204, 0.0
    %244 = vst.msk [vmem:[#allocation4 + $0x38] sm:$0xff] %vm204, 0.0
    %245 = vst.msk [vmem:[#allocation4 + $0x40] sm:$0xff] %vm204, 0.0
    %246 = vst.msk [vmem:[#allocation4 + $0x48] sm:$0xff] %vm204, 0.0
    %247 = vst.msk [vmem:[#allocation4 + $0x50] sm:$0xff] %vm204, 0.0
    %248 = vst.msk [vmem:[#allocation4 + $0x58] sm:$0xff] %vm204, 0.0
    %249 = vst.msk [vmem:[#allocation4 + $0x60] sm:$0xff] %vm204, 0.0
    %250 = vst.msk [vmem:[#allocation4 + $0x68] sm:$0xff] %vm204, 0.0
    %251 = vst.msk [vmem:[#allocation4 + $0x70] sm:$0xff] %vm204, 0.0
    %252 = vst.msk [vmem:[#allocation4 + $0x78] sm:$0xff] %vm204, 0.0
    %253 = vst.msk [vmem:[#allocation4 + $0x80] sm:$0xff] %vm204, 0.0
    %254 = vst.msk [vmem:[#allocation4 + $0x88] sm:$0xff] %vm204, 0.0
    %255 = vst.msk [vmem:[#allocation4 + $0x90] sm:$0xff] %vm204, 0.0
    %256 = vst.msk [vmem:[#allocation4 + $0x98] sm:$0xff] %vm204, 0.0
    %257 = vst.msk [vmem:[#allocation4 + $0xa0] sm:$0xff] %vm204, 0.0
    %258 = vst.msk [vmem:[#allocation4 + $0xa8] sm:$0xff] %vm204, 0.0
    %259 = vst.msk [vmem:[#allocation4 + $0xb0] sm:$0xff] %vm204, 0.0
    %260 = vst.msk [vmem:[#allocation4 + $0xb8] sm:$0xff] %vm204, 0.0
    %261 = vst.msk [vmem:[#allocation4 + $0xc0] sm:$0xff] %vm204, 0.0
    %262 = vst.msk [vmem:[#allocation4 + $0xc8] sm:$0xff] %vm204, 0.0
    %263 = vst.msk [vmem:[#allocation4 + $0xd0] sm:$0xff] %vm204, 0.0
    %264 = vst.msk [vmem:[#allocation4 + $0xd8] sm:$0xff] %vm204, 0.0
    %265 = vst.msk [vmem:[#allocation4 + $0xe0] sm:$0xff] %vm204, 0.0
    %266 = vst.msk [vmem:[#allocation4 + $0xe8] sm:$0xff] %vm204, 0.0
    %267 = vst.msk [vmem:[#allocation4 + $0xf0] sm:$0xff] %vm204, 0.0
    %268 = vst.msk [vmem:[#allocation4 + $0xf8] sm:$0xff] %vm204, 0.0
    %269 = vst.msk [vmem:[#allocation5] sm:$0xff] %vm204, 0.0
    %270 = vst.msk [vmem:[#allocation5 + $0x8] sm:$0xff] %vm204, 0.0
    %271 = vst.msk [vmem:[#allocation5 + $0x10] sm:$0xff] %vm204, 0.0
    %272 = vst.msk [vmem:[#allocation5 + $0x18] sm:$0xff] %vm204, 0.0
    %273 = vst.msk [vmem:[#allocation5 + $0x20] sm:$0xff] %vm204, 0.0
    %274 = vst.msk [vmem:[#allocation5 + $0x28] sm:$0xff] %vm204, 0.0
    %275 = vst.msk [vmem:[#allocation5 + $0x30] sm:$0xff] %vm204, 0.0
    %276 = vst.msk [vmem:[#allocation5 + $0x38] sm:$0xff] %vm204, 0.0
    %277 = vst.msk [vmem:[#allocation5 + $0x40] sm:$0xff] %vm204, 0.0
    %278 = vst.msk [vmem:[#allocation5 + $0x48] sm:$0xff] %vm204, 0.0
    %279 = vst.msk [vmem:[#allocation5 + $0x50] sm:$0xff] %vm204, 0.0
    %280 = vst.msk [vmem:[#allocation5 + $0x58] sm:$0xff] %vm204, 0.0
    %281 = vst.msk [vmem:[#allocation5 + $0x60] sm:$0xff] %vm204, 0.0
    %282 = vst.msk [vmem:[#allocation5 + $0x68] sm:$0xff] %vm204, 0.0
    %283 = vst.msk [vmem:[#allocation5 + $0x70] sm:$0xff] %vm204, 0.0
    %284 = vst.msk [vmem:[#allocation5 + $0x78] sm:$0xff] %vm204, 0.0
    %285 = vst.msk [vmem:[#allocation5 + $0x80] sm:$0xff] %vm204, 0.0
    %286 = vst.msk [vmem:[#allocation5 + $0x88] sm:$0xff] %vm204, 0.0
    %287 = vst.msk [vmem:[#allocation5 + $0x90] sm:$0xff] %vm204, 0.0
    %288 = vst.msk [vmem:[#allocation5 + $0x98] sm:$0xff] %vm204, 0.0
    %289 = vst.msk [vmem:[#allocation5 + $0xa0] sm:$0xff] %vm204, 0.0
    %290 = vst.msk [vmem:[#allocation5 + $0xa8] sm:$0xff] %vm204, 0.0
    %291 = vst.msk [vmem:[#allocation5 + $0xb0] sm:$0xff] %vm204, 0.0
    %292 = vst.msk [vmem:[#allocation5 + $0xb8] sm:$0xff] %vm204, 0.0
    %293 = vst.msk [vmem:[#allocation5 + $0xc0] sm:$0xff] %vm204, 0.0
    %294 = vst.msk [vmem:[#allocation5 + $0xc8] sm:$0xff] %vm204, 0.0
    %295 = vst.msk [vmem:[#allocation5 + $0xd0] sm:$0xff] %vm204, 0.0
    %296 = vst.msk [vmem:[#allocation5 + $0xd8] sm:$0xff] %vm204, 0.0
    %297 = vst.msk [vmem:[#allocation5 + $0xe0] sm:$0xff] %vm204, 0.0
    %298 = vst.msk [vmem:[#allocation5 + $0xe8] sm:$0xff] %vm204, 0.0
    %299 = vst.msk [vmem:[#allocation5 + $0xf0] sm:$0xff] %vm204, 0.0
    %300 = vst.msk [vmem:[#allocation5 + $0xf8] sm:$0xff] %vm204, 0.0
    %301 = vst.msk [vmem:[#allocation6] sm:$0xff] %vm204, 0.0
    %302 = vst.msk [vmem:[#allocation6 + $0x8] sm:$0xff] %vm204, 0.0
    %303 = vst.msk [vmem:[#allocation6 + $0x10] sm:$0xff] %vm204, 0.0
    %304 = vst.msk [vmem:[#allocation6 + $0x18] sm:$0xff] %vm204, 0.0
    %305 = vst.msk [vmem:[#allocation6 + $0x20] sm:$0xff] %vm204, 0.0
    %306 = vst.msk [vmem:[#allocation6 + $0x28] sm:$0xff] %vm204, 0.0
    %307 = vst.msk [vmem:[#allocation6 + $0x30] sm:$0xff] %vm204, 0.0
    %308 = vst.msk [vmem:[#allocation6 + $0x38] sm:$0xff] %vm204, 0.0
    %309 = vst.msk [vmem:[#allocation6 + $0x40] sm:$0xff] %vm204, 0.0
    %310 = vst.msk [vmem:[#allocation6 + $0x48] sm:$0xff] %vm204, 0.0
    %311 = vst.msk [vmem:[#allocation6 + $0x50] sm:$0xff] %vm204, 0.0
    %312 = vst.msk [vmem:[#allocation6 + $0x58] sm:$0xff] %vm204, 0.0
    %313 = vst.msk [vmem:[#allocation6 + $0x60] sm:$0xff] %vm204, 0.0
    %314 = vst.msk [vmem:[#allocation6 + $0x68] sm:$0xff] %vm204, 0.0
    %315 = vst.msk [vmem:[#allocation6 + $0x70] sm:$0xff] %vm204, 0.0
    %316 = vst.msk [vmem:[#allocation6 + $0x78] sm:$0xff] %vm204, 0.0
    %317 = vst.msk [vmem:[#allocation6 + $0x80] sm:$0xff] %vm204, 0.0
    %318 = vst.msk [vmem:[#allocation6 + $0x88] sm:$0xff] %vm204, 0.0
    %319 = vst.msk [vmem:[#allocation6 + $0x90] sm:$0xff] %vm204, 0.0
    %320 = vst.msk [vmem:[#allocation6 + $0x98] sm:$0xff] %vm204, 0.0
    %321 = vst.msk [vmem:[#allocation6 + $0xa0] sm:$0xff] %vm204, 0.0
    %322 = vst.msk [vmem:[#allocation6 + $0xa8] sm:$0xff] %vm204, 0.0
    %323 = vst.msk [vmem:[#allocation6 + $0xb0] sm:$0xff] %vm204, 0.0
    %324 = vst.msk [vmem:[#allocation6 + $0xb8] sm:$0xff] %vm204, 0.0
    %325 = vst.msk [vmem:[#allocation6 + $0xc0] sm:$0xff] %vm204, 0.0
    %326 = vst.msk [vmem:[#allocation6 + $0xc8] sm:$0xff] %vm204, 0.0
    %327 = vst.msk [vmem:[#allocation6 + $0xd0] sm:$0xff] %vm204, 0.0
    %328 = vst.msk [vmem:[#allocation6 + $0xd8] sm:$0xff] %vm204, 0.0
    %329 = vst.msk [vmem:[#allocation6 + $0xe0] sm:$0xff] %vm204, 0.0
    %330 = vst.msk [vmem:[#allocation6 + $0xe8] sm:$0xff] %vm204, 0.0
    %331 = vst.msk [vmem:[#allocation6 + $0xf0] sm:$0xff] %vm204, 0.0
    %332 = vst.msk [vmem:[#allocation6 + $0xf8] sm:$0xff] %vm204, 0.0
  $region21: #{contrastive_loss.1} parent=0 // pred_fallthru
    _
  %p333 = pnand %p21, %p22
  %p334 = pneg %p333
  // Predicated region
  $region22: #{contrastive_loss.1} parent=0 // pred_check
    _
  $region23: #{contrastive_loss.1} parent=0 // pred_check_branch
    %336 = sbr.rel (%p333) target = $region25
  $region24: #{contrastive_loss.1} parent=0 // pred_region
    %s337 = sshra.s32 %s20, 3
    %s338 = sand.u32 %s20, 7
    %s339 = smul.addr %s337, 4
    %s340 = scalar_lea.vmem %s1, %s339
    %v341 = vld [vmem:[%s340] sm:$0xf]
    %v342 = vld [vmem:[%s340 + $0x4] sm:$0xf]
    %v343 = vld [vmem:[%s340 + $0x8] sm:$0xf]
    %v344 = vld [vmem:[%s340 + $0xc] sm:$0xf]
    %v345 = vld [vmem:[%s340 + $0x10] sm:$0xf]
    %v346 = vld [vmem:[%s340 + $0x14] sm:$0xf]
    %v347 = vld [vmem:[%s340 + $0x18] sm:$0xf]
    %v348 = vld [vmem:[%s340 + $0x1c] sm:$0xf]
    %v349 = vld [vmem:[%s340 + $0x20] sm:$0xf]
    %v350 = vld [vmem:[%s340 + $0x24] sm:$0xf]
    %v351 = vld [vmem:[%s340 + $0x28] sm:$0xf]
    %v352 = vld [vmem:[%s340 + $0x2c] sm:$0xf]
    %v353 = vld [vmem:[%s340 + $0x30] sm:$0xf]
    %v354 = vld [vmem:[%s340 + $0x34] sm:$0xf]
    %v355 = vld [vmem:[%s340 + $0x38] sm:$0xf]
    %v356 = vld [vmem:[%s340 + $0x3c] sm:$0xf]
    %v357 = vld [vmem:[%s340 + $0x40] sm:$0xf]
    %v358 = vld [vmem:[%s340 + $0x44] sm:$0xf]
    %v359 = vld [vmem:[%s340 + $0x48] sm:$0xf]
    %v360 = vld [vmem:[%s340 + $0x4c] sm:$0xf]
    %v361 = vld [vmem:[%s340 + $0x50] sm:$0xf]
    %v362 = vld [vmem:[%s340 + $0x54] sm:$0xf]
    %v363 = vld [vmem:[%s340 + $0x58] sm:$0xf]
    %v364 = vld [vmem:[%s340 + $0x5c] sm:$0xf]
    %v365 = vld [vmem:[%s340 + $0x60] sm:$0xf]
    %v366 = vld [vmem:[%s340 + $0x64] sm:$0xf]
    %v367 = vld [vmem:[%s340 + $0x68] sm:$0xf]
    %v368 = vld [vmem:[%s340 + $0x6c] sm:$0xf]
    %v369 = vld [vmem:[%s340 + $0x70] sm:$0xf]
    %v370 = vld [vmem:[%s340 + $0x74] sm:$0xf]
    %v371 = vld [vmem:[%s340 + $0x78] sm:$0xf]
    %v372 = vld [vmem:[%s340 + $0x7c] sm:$0xf]
    %v373 = vld [vmem:[#allocation2] sm:$0xff]
    %v374 = vld [vmem:[#allocation2 + $0x8] sm:$0xff]
    %v375 = vld [vmem:[#allocation2 + $0x10] sm:$0xff]
    %v376 = vld [vmem:[#allocation2 + $0x18] sm:$0xff]
    %v377 = vld [vmem:[#allocation2 + $0x20] sm:$0xff]
    %v378 = vld [vmem:[#allocation2 + $0x28] sm:$0xff]
    %v379 = vld [vmem:[#allocation2 + $0x30] sm:$0xff]
    %v380 = vld [vmem:[#allocation2 + $0x38] sm:$0xff]
    %v381 = vld [vmem:[#allocation2 + $0x40] sm:$0xff]
    %v382 = vld [vmem:[#allocation2 + $0x48] sm:$0xff]
    %v383 = vld [vmem:[#allocation2 + $0x50] sm:$0xff]
    %v384 = vld [vmem:[#allocation2 + $0x58] sm:$0xff]
    %v385 = vld [vmem:[#allocation2 + $0x60] sm:$0xff]
    %v386 = vld [vmem:[#allocation2 + $0x68] sm:$0xff]
    %v387 = vld [vmem:[#allocation2 + $0x70] sm:$0xff]
    %v388 = vld [vmem:[#allocation2 + $0x78] sm:$0xff]
    %v421 = vunpack.c.l.b16 %v341
    %v422 = vunpack.c.l.b16 %v342
    %v423 = vunpack.c.l.b16 %v343
    %v424 = vunpack.c.l.b16 %v344
    %v425 = vunpack.c.l.b16 %v345
    %v426 = vunpack.c.l.b16 %v346
    %v427 = vunpack.c.l.b16 %v347
    %v428 = vunpack.c.l.b16 %v348
    %v429 = vunpack.c.l.b16 %v349
    %v430 = vunpack.c.l.b16 %v350
    %v431 = vunpack.c.l.b16 %v351
    %v432 = vunpack.c.l.b16 %v352
    %v433 = vunpack.c.l.b16 %v353
    %v434 = vunpack.c.l.b16 %v354
    %v435 = vunpack.c.l.b16 %v355
    %v436 = vunpack.c.l.b16 %v356
    %v437 = vunpack.c.l.b16 %v357
    %v438 = vunpack.c.l.b16 %v358
    %v439 = vunpack.c.l.b16 %v359
    %v440 = vunpack.c.l.b16 %v360
    %v441 = vunpack.c.l.b16 %v361
    %v442 = vunpack.c.l.b16 %v362
    %v443 = vunpack.c.l.b16 %v363
    %v444 = vunpack.c.l.b16 %v364
    %v445 = vunpack.c.l.b16 %v365
    %v446 = vunpack.c.l.b16 %v366
    %v447 = vunpack.c.l.b16 %v367
    %v448 = vunpack.c.l.b16 %v368
    %v449 = vunpack.c.l.b16 %v369
    %v450 = vunpack.c.l.b16 %v370
    %v451 = vunpack.c.l.b16 %v371
    %v452 = vunpack.c.l.b16 %v372
    %v453 = vpack.c.b16 %v422, %v421
    %v454 = vpack.c.b16 %v424, %v423
    %v455 = vpack.c.b16 %v426, %v425
    %v456 = vpack.c.b16 %v428, %v427
    %v457 = vpack.c.b16 %v430, %v429
    %v458 = vpack.c.b16 %v432, %v431
    %v459 = vpack.c.b16 %v434, %v433
    %v460 = vpack.c.b16 %v436, %v435
    %v461 = vpack.c.b16 %v438, %v437
    %v462 = vpack.c.b16 %v440, %v439
    %v463 = vpack.c.b16 %v442, %v441
    %v464 = vpack.c.b16 %v444, %v443
    %v465 = vpack.c.b16 %v446, %v445
    %v466 = vpack.c.b16 %v448, %v447
    %v467 = vpack.c.b16 %v450, %v449
    %v468 = vpack.c.b16 %v452, %v451
    %485 = vmatprep.subr.bf16.mxu0 0
    %486 = vmatpush1.bf16.xpose.msra.mxu0 %v453
    %487 = vmatprep.subr.bf16.mxu0 0
    %488 = vmatpush1.bf16.xpose.msra.mxu0 %v454
    %489 = vmatprep.subr.bf16.mxu0 0
    %490 = vmatpush1.bf16.xpose.msra.mxu0 %v455
    %491 = vmatprep.subr.bf16.mxu0 0
    %492 = vmatpush1.bf16.xpose.msra.mxu0 %v456
    %493 = vmatprep.subr.bf16.mxu0 0
    %494 = vmatpush1.bf16.xpose.msra.mxu0 %v457
    %495 = vmatprep.subr.bf16.mxu0 0
    %496 = vmatpush1.bf16.xpose.msra.mxu0 %v458
    %497 = vmatprep.subr.bf16.mxu0 0
    %498 = vmatpush1.bf16.xpose.msra.mxu0 %v459
    %499 = vmatprep.subr.bf16.mxu0 0
    %500 = vmatpush1.bf16.xpose.msra.mxu0 %v460
    %501 = vmatprep.subr.bf16.mxu0 0
    %502 = vmatpush1.bf16.xpose.msra.mxu0 %v461
    %503 = vmatprep.subr.bf16.mxu0 0
    %504 = vmatpush1.bf16.xpose.msra.mxu0 %v462
    %505 = vmatprep.subr.bf16.mxu0 0
    %506 = vmatpush1.bf16.xpose.msra.mxu0 %v463
    %507 = vmatprep.subr.bf16.mxu0 0
    %508 = vmatpush1.bf16.xpose.msra.mxu0 %v464
    %509 = vmatprep.subr.bf16.mxu0 0
    %510 = vmatpush1.bf16.xpose.msra.mxu0 %v465
    %511 = vmatprep.subr.bf16.mxu0 0
    %512 = vmatpush1.bf16.xpose.msra.mxu0 %v466
    %513 = vmatprep.subr.bf16.mxu0 0
    %514 = vmatpush1.bf16.xpose.msra.mxu0 %v467
    %515 = vmatprep.subr.bf16.mxu0 0
    %516 = vmatpush1.bf16.xpose.msra.mxu0 %v468
    %517 = vmatprep.mubr.bf16.mxu0 0
    %518 = vmatmul.mubr.bf16.gmra.mrb[0].mxu0 %v373
    %v519 = vpop.f32.mrb[0].mxu0
    %v520 = vadd.f32 0.0, %v519
    %v521 = vpop.f32.mrb[0].mxu0
    %v522 = vadd.f32 0.0, %v521
    %v523 = vpop.f32.mrb[0].mxu0
    %v524 = vadd.f32 0.0, %v523
    %v525 = vpop.f32.mrb[0].mxu0
    %v526 = vadd.f32 0.0, %v525
    %527 = vmatprep.mubr.bf16.mxu0 0
    %528 = vmatmul.mubr.bf16.gmra.mrb[0].mxu0 %v374
    %v529 = vpop.f32.mrb[0].mxu0
    %v530 = vadd.f32 0.0, %v529
    %v531 = vpop.f32.mrb[0].mxu0
    %v532 = vadd.f32 0.0, %v531
    %v533 = vpop.f32.mrb[0].mxu0
    %v534 = vadd.f32 0.0, %v533
    %v535 = vpop.f32.mrb[0].mxu0
    %v536 = vadd.f32 0.0, %v535
    %537 = vmatprep.mubr.bf16.mxu0 0
    %538 = vmatmul.mubr.bf16.gmra.mrb[0].mxu0 %v375
    %v539 = vpop.f32.mrb[0].mxu0
    %v540 = vadd.f32 0.0, %v539
    %v541 = vpop.f32.mrb[0].mxu0
    %v542 = vadd.f32 0.0, %v541
    %v543 = vpop.f32.mrb[0].mxu0
    %v544 = vadd.f32 0.0, %v543
    %v545 = vpop.f32.mrb[0].mxu0
    %v546 = vadd.f32 0.0, %v545
    %547 = vmatprep.mubr.bf16.mxu0 0
    %548 = vmatmul.mubr.bf16.gmra.mrb[0].mxu0 %v376
    %v549 = vpop.f32.mrb[0].mxu0
    %v550 = vadd.f32 0.0, %v549
    %v551 = vpop.f32.mrb[0].mxu0
    %v552 = vadd.f32 0.0, %v551
    %v553 = vpop.f32.mrb[0].mxu0
    %v554 = vadd.f32 0.0, %v553
    %v555 = vpop.f32.mrb[0].mxu0
    %v556 = vadd.f32 0.0, %v555
    %557 = vmatprep.mubr.bf16.mxu0 0
    %558 = vmatmul.mubr.bf16.gmra.mrb[0].mxu0 %v377
    %v559 = vpop.f32.mrb[0].mxu0
    %v560 = vadd.f32 0.0, %v559
    %v561 = vpop.f32.mrb[0].mxu0
    %v562 = vadd.f32 0.0, %v561
    %v563 = vpop.f32.mrb[0].mxu0
    %v564 = vadd.f32 0.0, %v563
    %v565 = vpop.f32.mrb[0].mxu0
    %v566 = vadd.f32 0.0, %v565
    %567 = vmatprep.mubr.bf16.mxu0 0
    %568 = vmatmul.mubr.bf16.gmra.mrb[0].mxu0 %v378
    %v569 = vpop.f32.mrb[0].mxu0
    %v570 = vadd.f32 0.0, %v569
    %v571 = vpop.f32.mrb[0].mxu0
    %v572 = vadd.f32 0.0, %v571
    %v573 = vpop.f32.mrb[0].mxu0
    %v574 = vadd.f32 0.0, %v573
    %v575 = vpop.f32.mrb[0].mxu0
    %v576 = vadd.f32 0.0, %v575
    %577 = vmatprep.mubr.bf16.mxu0 0
    %578 = vmatmul.mubr.bf16.gmra.mrb[0].mxu0 %v379
    %v579 = vpop.f32.mrb[0].mxu0
    %v580 = vadd.f32 0.0, %v579
    %v581 = vpop.f32.mrb[0].mxu0
    %v582 = vadd.f32 0.0, %v581
    %v583 = vpop.f32.mrb[0].mxu0
    %v584 = vadd.f32 0.0, %v583
    %v585 = vpop.f32.mrb[0].mxu0
    %v586 = vadd.f32 0.0, %v585
    %587 = vmatprep.mubr.bf16.mxu0 0
    %588 = vmatmul.mubr.bf16.gmra.mrb[0].mxu0 %v380
    %v589 = vpop.f32.mrb[0].mxu0
    %v590 = vadd.f32 0.0, %v589
    %v591 = vpop.f32.mrb[0].mxu0
    %v592 = vadd.f32 0.0, %v591
    %v593 = vpop.f32.mrb[0].mxu0
    %v594 = vadd.f32 0.0, %v593
    %v595 = vpop.f32.mrb[0].mxu0
    %v596 = vadd.f32 0.0, %v595
    %597 = vmatprep.mubr.bf16.mxu0 0
    %598 = vmatmul.mubr.bf16.gmra.mrb[0].mxu0 %v381
    %v599 = vpop.f32.mrb[0].mxu0
    %v600 = vadd.f32 0.0, %v599
    %v601 = vpop.f32.mrb[0].mxu0
    %v602 = vadd.f32 0.0, %v601
    %v603 = vpop.f32.mrb[0].mxu0
    %v604 = vadd.f32 0.0, %v603
    %v605 = vpop.f32.mrb[0].mxu0
    %v606 = vadd.f32 0.0, %v605
    %607 = vmatprep.mubr.bf16.mxu0 0
    %608 = vmatmul.mubr.bf16.gmra.mrb[0].mxu0 %v382
    %v609 = vpop.f32.mrb[0].mxu0
    %v610 = vadd.f32 0.0, %v609
    %v611 = vpop.f32.mrb[0].mxu0
    %v612 = vadd.f32 0.0, %v611
    %v613 = vpop.f32.mrb[0].mxu0
    %v614 = vadd.f32 0.0, %v613
    %v615 = vpop.f32.mrb[0].mxu0
    %v616 = vadd.f32 0.0, %v615
    %617 = vmatprep.mubr.bf16.mxu0 0
    %618 = vmatmul.mubr.bf16.gmra.mrb[0].mxu0 %v383
    %v619 = vpop.f32.mrb[0].mxu0
    %v620 = vadd.f32 0.0, %v619
    %v621 = vpop.f32.mrb[0].mxu0
    %v622 = vadd.f32 0.0, %v621
    %v623 = vpop.f32.mrb[0].mxu0
    %v624 = vadd.f32 0.0, %v623
    %v625 = vpop.f32.mrb[0].mxu0
    %v626 = vadd.f32 0.0, %v625
    %627 = vmatprep.mubr.bf16.mxu0 0
    %628 = vmatmul.mubr.bf16.gmra.mrb[0].mxu0 %v384
    %v629 = vpop.f32.mrb[0].mxu0
    %v630 = vadd.f32 0.0, %v629
    %v631 = vpop.f32.mrb[0].mxu0
    %v632 = vadd.f32 0.0, %v631
    %v633 = vpop.f32.mrb[0].mxu0
    %v634 = vadd.f32 0.0, %v633
    %v635 = vpop.f32.mrb[0].mxu0
    %v636 = vadd.f32 0.0, %v635
    %637 = vmatprep.mubr.bf16.mxu0 0
    %638 = vmatmul.mubr.bf16.gmra.mrb[0].mxu0 %v385
    %v639 = vpop.f32.mrb[0].mxu0
    %v640 = vadd.f32 0.0, %v639
    %v641 = vpop.f32.mrb[0].mxu0
    %v642 = vadd.f32 0.0, %v641
    %v643 = vpop.f32.mrb[0].mxu0
    %v644 = vadd.f32 0.0, %v643
    %v645 = vpop.f32.mrb[0].mxu0
    %v646 = vadd.f32 0.0, %v645
    %647 = vmatprep.mubr.bf16.mxu0 0
    %648 = vmatmul.mubr.bf16.gmra.mrb[0].mxu0 %v386
    %v649 = vpop.f32.mrb[0].mxu0
    %v650 = vadd.f32 0.0, %v649
    %v651 = vpop.f32.mrb[0].mxu0
    %v652 = vadd.f32 0.0, %v651
    %v653 = vpop.f32.mrb[0].mxu0
    %v654 = vadd.f32 0.0, %v653
    %v655 = vpop.f32.mrb[0].mxu0
    %v656 = vadd.f32 0.0, %v655
    %657 = vmatprep.mubr.bf16.mxu0 0
    %658 = vmatmul.mubr.bf16.gmra.mrb[0].mxu0 %v387
    %v659 = vpop.f32.mrb[0].mxu0
    %v660 = vadd.f32 0.0, %v659
    %v661 = vpop.f32.mrb[0].mxu0
    %v662 = vadd.f32 0.0, %v661
    %v663 = vpop.f32.mrb[0].mxu0
    %v664 = vadd.f32 0.0, %v663
    %v665 = vpop.f32.mrb[0].mxu0
    %v666 = vadd.f32 0.0, %v665
    %667 = vmatprep.mubr.bf16.mxu0 0
    %668 = vmatmul.mubr.bf16.gmra.mrb[0].mxu0 %v388
    %v669 = vpop.f32.mrb[0].mxu0
    %v670 = vadd.f32 0.0, %v669
    %v671 = vpop.f32.mrb[0].mxu0
    %v672 = vadd.f32 0.0, %v671
    %v673 = vpop.f32.mrb[0].mxu0
    %v674 = vadd.f32 0.0, %v673
    %v675 = vpop.f32.mrb[0].mxu0
    %v676 = vadd.f32 0.0, %v675
    %677 = vdwg.mxu0
    %v678 = vld [vmem:[%s2] sm:$0xff]
    %v679 = vld [vmem:[%s2 + $0x8] sm:$0xff]
    %v680 = vld [vmem:[%s2 + $0x10] sm:$0xff]
    %v681 = vld [vmem:[%s2 + $0x18] sm:$0xff]
    %v682 = vld [vmem:[%s2 + $0x20] sm:$0xff]
    %v683 = vld [vmem:[%s2 + $0x28] sm:$0xff]
    %v684 = vld [vmem:[%s2 + $0x30] sm:$0xff]
    %v685 = vld [vmem:[%s2 + $0x38] sm:$0xff]
    %v686 = vld [vmem:[%s2 + $0x40] sm:$0xff]
    %v687 = vld [vmem:[%s2 + $0x48] sm:$0xff]
    %v688 = vld [vmem:[%s2 + $0x50] sm:$0xff]
    %v689 = vld [vmem:[%s2 + $0x58] sm:$0xff]
    %v690 = vld [vmem:[%s2 + $0x60] sm:$0xff]
    %v691 = vld [vmem:[%s2 + $0x68] sm:$0xff]
    %v692 = vld [vmem:[%s2 + $0x70] sm:$0xff]
    %v693 = vld [vmem:[%s2 + $0x78] sm:$0xff]
    %v694 = vld [vmem:[%s2 + $0x80] sm:$0xff]
    %v695 = vld [vmem:[%s2 + $0x88] sm:$0xff]
    %v696 = vld [vmem:[%s2 + $0x90] sm:$0xff]
    %v697 = vld [vmem:[%s2 + $0x98] sm:$0xff]
    %v698 = vld [vmem:[%s2 + $0xa0] sm:$0xff]
    %v699 = vld [vmem:[%s2 + $0xa8] sm:$0xff]
    %v700 = vld [vmem:[%s2 + $0xb0] sm:$0xff]
    %v701 = vld [vmem:[%s2 + $0xb8] sm:$0xff]
    %v702 = vld [vmem:[%s2 + $0xc0] sm:$0xff]
    %v703 = vld [vmem:[%s2 + $0xc8] sm:$0xff]
    %v704 = vld [vmem:[%s2 + $0xd0] sm:$0xff]
    %v705 = vld [vmem:[%s2 + $0xd8] sm:$0xff]
    %v706 = vld [vmem:[%s2 + $0xe0] sm:$0xff]
    %v707 = vld [vmem:[%s2 + $0xe8] sm:$0xff]
    %v708 = vld [vmem:[%s2 + $0xf0] sm:$0xff]
    %v709 = vld [vmem:[%s2 + $0xf8] sm:$0xff]
    %v710 = vld [vmem:[%s3] sm:$0x3]
    %v711 = vlaneseq
    %v712 = vshrl.u32 %v711, 7
    %v713 = vadd.s32 %v712, 8
    %v714 = vadd.s32 %v712, 16
    %v715 = vadd.s32 %v712, 24
    %v716 = vadd.s32 %v712, 32
    %v717 = vadd.s32 %v712, 40
    %v718 = vadd.s32 %v712, 48
    %v719 = vadd.s32 %v712, 56
    %v720 = vadd.s32 %v712, 64
    %v721 = vadd.s32 %v712, 72
    %v722 = vadd.s32 %v712, 80
    %v723 = vadd.s32 %v712, 88
    %v724 = vadd.s32 %v712, 96
    %v725 = vadd.s32 %v712, 104
    %v726 = vadd.s32 %v712, 112
    %v727 = vadd.s32 %v712, 120
    %v728 = vadd.s32 %v712, 128
    %v729 = vadd.s32 %v712, 136
    %v730 = vadd.s32 %v712, 144
    %v731 = vadd.s32 %v712, 152
    %v732 = vadd.s32 %v712, 160
    %v733 = vadd.s32 %v712, 168
    %v734 = vadd.s32 %v712, 176
    %v735 = vadd.s32 %v712, 184
    %v736 = vadd.s32 %v712, 192
    %v737 = vadd.s32 %v712, 200
    %v738 = vadd.s32 %v712, 208
    %v739 = vadd.s32 %v712, 216
    %v740 = vadd.s32 %v712, 224
    %v741 = vadd.s32 %v712, 232
    %v742 = vadd.s32 %v712, 240
    %v743 = vadd.s32 %v712, 248
    %v744 = vstv %s19
    %v745 = vadd.s32 %v744, %v712
    %v746 = vadd.s32 %v744, %v713
    %v747 = vadd.s32 %v744, %v714
    %v748 = vadd.s32 %v744, %v715
    %v749 = vadd.s32 %v744, %v716
    %v750 = vadd.s32 %v744, %v717
    %v751 = vadd.s32 %v744, %v718
    %v752 = vadd.s32 %v744, %v719
    %v753 = vadd.s32 %v744, %v720
    %v754 = vadd.s32 %v744, %v721
    %v755 = vadd.s32 %v744, %v722
    %v756 = vadd.s32 %v744, %v723
    %v757 = vadd.s32 %v744, %v724
    %v758 = vadd.s32 %v744, %v725
    %v759 = vadd.s32 %v744, %v726
    %v760 = vadd.s32 %v744, %v727
    %v761 = vadd.s32 %v744, %v728
    %v762 = vadd.s32 %v744, %v729
    %v763 = vadd.s32 %v744, %v730
    %v764 = vadd.s32 %v744, %v731
    %v765 = vadd.s32 %v744, %v732
    %v766 = vadd.s32 %v744, %v733
    %v767 = vadd.s32 %v744, %v734
    %v768 = vadd.s32 %v744, %v735
    %v769 = vadd.s32 %v744, %v736
    %v770 = vadd.s32 %v744, %v737
    %v771 = vadd.s32 %v744, %v738
    %v772 = vadd.s32 %v744, %v739
    %v773 = vadd.s32 %v744, %v740
    %v774 = vadd.s32 %v744, %v741
    %v775 = vadd.s32 %v744, %v742
    %v776 = vadd.s32 %v744, %v743
    %v777 = vlaneseq
    %v778 = vand.u32 %v777, 127
    %v779 = vadd.s32 %v778, 128
    %v780 = vstv %s20
    %v781 = vadd.s32 %v780, %v778
    %v782 = vadd.s32 %v780, %v779
    %783 = vset.pattern.permute.xlu0 0
    %784 = vperm.xlu0 %783, %v678
    %v785 = vpop.permute.xlu0 %784
    %786 = vset.pattern.permute.xlu0 0
    %787 = vperm.xlu0 %786, %v679
    %v788 = vpop.permute.xlu0 %787
    %789 = vset.pattern.permute.xlu0 0
    %790 = vperm.xlu0 %789, %v680
    %v791 = vpop.permute.xlu0 %790
    %792 = vset.pattern.permute.xlu0 0
    %793 = vperm.xlu0 %792, %v681
    %v794 = vpop.permute.xlu0 %793
    %795 = vset.pattern.permute.xlu0 0
    %796 = vperm.xlu0 %795, %v682
    %v797 = vpop.permute.xlu0 %796
    %798 = vset.pattern.permute.xlu0 0
    %799 = vperm.xlu0 %798, %v683
    %v800 = vpop.permute.xlu0 %799
    %801 = vset.pattern.permute.xlu0 0
    %802 = vperm.xlu0 %801, %v684
    %v803 = vpop.permute.xlu0 %802
    %804 = vset.pattern.permute.xlu0 0
    %805 = vperm.xlu0 %804, %v685
    %v806 = vpop.permute.xlu0 %805
    %807 = vset.pattern.permute.xlu0 0
    %808 = vperm.xlu0 %807, %v686
    %v809 = vpop.permute.xlu0 %808
    %810 = vset.pattern.permute.xlu0 0
    %811 = vperm.xlu0 %810, %v687
    %v812 = vpop.permute.xlu0 %811
    %813 = vset.pattern.permute.xlu0 0
    %814 = vperm.xlu0 %813, %v688
    %v815 = vpop.permute.xlu0 %814
    %816 = vset.pattern.permute.xlu0 0
    %817 = vperm.xlu0 %816, %v689
    %v818 = vpop.permute.xlu0 %817
    %819 = vset.pattern.permute.xlu0 0
    %820 = vperm.xlu0 %819, %v690
    %v821 = vpop.permute.xlu0 %820
    %822 = vset.pattern.permute.xlu0 0
    %823 = vperm.xlu0 %822, %v691
    %v824 = vpop.permute.xlu0 %823
    %825 = vset.pattern.permute.xlu0 0
    %826 = vperm.xlu0 %825, %v692
    %v827 = vpop.permute.xlu0 %826
    %828 = vset.pattern.permute.xlu0 0
    %829 = vperm.xlu0 %828, %v693
    %v830 = vpop.permute.xlu0 %829
    %831 = vset.pattern.permute.xlu0 0
    %832 = vperm.xlu0 %831, %v694
    %v833 = vpop.permute.xlu0 %832
    %834 = vset.pattern.permute.xlu0 0
    %835 = vperm.xlu0 %834, %v695
    %v836 = vpop.permute.xlu0 %835
    %837 = vset.pattern.permute.xlu0 0
    %838 = vperm.xlu0 %837, %v696
    %v839 = vpop.permute.xlu0 %838
    %840 = vset.pattern.permute.xlu0 0
    %841 = vperm.xlu0 %840, %v697
    %v842 = vpop.permute.xlu0 %841
    %843 = vset.pattern.permute.xlu0 0
    %844 = vperm.xlu0 %843, %v698
    %v845 = vpop.permute.xlu0 %844
    %846 = vset.pattern.permute.xlu0 0
    %847 = vperm.xlu0 %846, %v699
    %v848 = vpop.permute.xlu0 %847
    %849 = vset.pattern.permute.xlu0 0
    %850 = vperm.xlu0 %849, %v700
    %v851 = vpop.permute.xlu0 %850
    %852 = vset.pattern.permute.xlu0 0
    %853 = vperm.xlu0 %852, %v701
    %v854 = vpop.permute.xlu0 %853
    %855 = vset.pattern.permute.xlu0 0
    %856 = vperm.xlu0 %855, %v702
    %v857 = vpop.permute.xlu0 %856
    %858 = vset.pattern.permute.xlu0 0
    %859 = vperm.xlu0 %858, %v703
    %v860 = vpop.permute.xlu0 %859
    %861 = vset.pattern.permute.xlu0 0
    %862 = vperm.xlu0 %861, %v704
    %v863 = vpop.permute.xlu0 %862
    %864 = vset.pattern.permute.xlu0 0
    %865 = vperm.xlu0 %864, %v705
    %v866 = vpop.permute.xlu0 %865
    %867 = vset.pattern.permute.xlu0 0
    %868 = vperm.xlu0 %867, %v706
    %v869 = vpop.permute.xlu0 %868
    %870 = vset.pattern.permute.xlu0 0
    %871 = vperm.xlu0 %870, %v707
    %v872 = vpop.permute.xlu0 %871
    %873 = vset.pattern.permute.xlu0 0
    %874 = vperm.xlu0 %873, %v708
    %v875 = vpop.permute.xlu0 %874
    %876 = vset.pattern.permute.xlu0 0
    %877 = vperm.xlu0 %876, %v709
    %v878 = vpop.permute.xlu0 %877
    %v879 = vlaneseq
    %v880 = vshrl.u32 %v879, 7
    %v881 = vsub.s32 0, %v880
    %v882 = vrot.slane %v710, %v881
    %v883 = vlaneseq
    %v884 = vshrl.u32 %v883, 7
    %v885 = vsub.s32 1, %v884
    %v886 = vrot.slane %v710, %v885
    %vm887 = vcmp.eq.s32.totalorder %v785, %v882
    %vm888 = vcmp.eq.s32.totalorder %v785, %v886
    %vm889 = vcmp.eq.s32.totalorder %v788, %v882
    %vm890 = vcmp.eq.s32.totalorder %v788, %v886
    %vm891 = vcmp.eq.s32.totalorder %v791, %v882
    %vm892 = vcmp.eq.s32.totalorder %v791, %v886
    %vm893 = vcmp.eq.s32.totalorder %v794, %v882
    %vm894 = vcmp.eq.s32.totalorder %v794, %v886
    %vm895 = vcmp.eq.s32.totalorder %v797, %v882
    %vm896 = vcmp.eq.s32.totalorder %v797, %v886
    %vm897 = vcmp.eq.s32.totalorder %v800, %v882
    %vm898 = vcmp.eq.s32.totalorder %v800, %v886
    %vm899 = vcmp.eq.s32.totalorder %v803, %v882
    %vm900 = vcmp.eq.s32.totalorder %v803, %v886
    %vm901 = vcmp.eq.s32.totalorder %v806, %v882
    %vm902 = vcmp.eq.s32.totalorder %v806, %v886
    %vm903 = vcmp.eq.s32.totalorder %v809, %v882
    %vm904 = vcmp.eq.s32.totalorder %v809, %v886
    %vm905 = vcmp.eq.s32.totalorder %v812, %v882
    %vm906 = vcmp.eq.s32.totalorder %v812, %v886
    %vm907 = vcmp.eq.s32.totalorder %v815, %v882
    %vm908 = vcmp.eq.s32.totalorder %v815, %v886
    %vm909 = vcmp.eq.s32.totalorder %v818, %v882
    %vm910 = vcmp.eq.s32.totalorder %v818, %v886
    %vm911 = vcmp.eq.s32.totalorder %v821, %v882
    %vm912 = vcmp.eq.s32.totalorder %v821, %v886
    %vm913 = vcmp.eq.s32.totalorder %v824, %v882
    %vm914 = vcmp.eq.s32.totalorder %v824, %v886
    %vm915 = vcmp.eq.s32.totalorder %v827, %v882
    %vm916 = vcmp.eq.s32.totalorder %v827, %v886
    %vm917 = vcmp.eq.s32.totalorder %v830, %v882
    %vm918 = vcmp.eq.s32.totalorder %v830, %v886
    %vm919 = vcmp.eq.s32.totalorder %v833, %v882
    %vm920 = vcmp.eq.s32.totalorder %v833, %v886
    %vm921 = vcmp.eq.s32.totalorder %v836, %v882
    %vm922 = vcmp.eq.s32.totalorder %v836, %v886
    %vm923 = vcmp.eq.s32.totalorder %v839, %v882
    %vm924 = vcmp.eq.s32.totalorder %v839, %v886
    %vm925 = vcmp.eq.s32.totalorder %v842, %v882
    %vm926 = vcmp.eq.s32.totalorder %v842, %v886
    %vm927 = vcmp.eq.s32.totalorder %v845, %v882
    %vm928 = vcmp.eq.s32.totalorder %v845, %v886
    %vm929 = vcmp.eq.s32.totalorder %v848, %v882
    %vm930 = vcmp.eq.s32.totalorder %v848, %v886
    %vm931 = vcmp.eq.s32.totalorder %v851, %v882
    %vm932 = vcmp.eq.s32.totalorder %v851, %v886
    %vm933 = vcmp.eq.s32.totalorder %v854, %v882
    %vm934 = vcmp.eq.s32.totalorder %v854, %v886
    %vm935 = vcmp.eq.s32.totalorder %v857, %v882
    %vm936 = vcmp.eq.s32.totalorder %v857, %v886
    %vm937 = vcmp.eq.s32.totalorder %v860, %v882
    %vm938 = vcmp.eq.s32.totalorder %v860, %v886
    %vm939 = vcmp.eq.s32.totalorder %v863, %v882
    %vm940 = vcmp.eq.s32.totalorder %v863, %v886
    %vm941 = vcmp.eq.s32.totalorder %v866, %v882
    %vm942 = vcmp.eq.s32.totalorder %v866, %v886
    %vm943 = vcmp.eq.s32.totalorder %v869, %v882
    %vm944 = vcmp.eq.s32.totalorder %v869, %v886
    %vm945 = vcmp.eq.s32.totalorder %v872, %v882
    %vm946 = vcmp.eq.s32.totalorder %v872, %v886
    %vm947 = vcmp.eq.s32.totalorder %v875, %v882
    %vm948 = vcmp.eq.s32.totalorder %v875, %v886
    %vm949 = vcmp.eq.s32.totalorder %v878, %v882
    %vm950 = vcmp.eq.s32.totalorder %v878, %v886
    %vm951 = vcmp.ne.s32.totalorder %v745, %v781
    %vm952 = vcmp.ne.s32.totalorder %v745, %v782
    %vm953 = vcmp.ne.s32.totalorder %v746, %v781
    %vm954 = vcmp.ne.s32.totalorder %v746, %v782
    %vm955 = vcmp.ne.s32.totalorder %v747, %v781
    %vm956 = vcmp.ne.s32.totalorder %v747, %v782
    %vm957 = vcmp.ne.s32.totalorder %v748, %v781
    %vm958 = vcmp.ne.s32.totalorder %v748, %v782
    %vm959 = vcmp.ne.s32.totalorder %v749, %v781
    %vm960 = vcmp.ne.s32.totalorder %v749, %v782
    %vm961 = vcmp.ne.s32.totalorder %v750, %v781
    %vm962 = vcmp.ne.s32.totalorder %v750, %v782
    %vm963 = vcmp.ne.s32.totalorder %v751, %v781
    %vm964 = vcmp.ne.s32.totalorder %v751, %v782
    %vm965 = vcmp.ne.s32.totalorder %v752, %v781
    %vm966 = vcmp.ne.s32.totalorder %v752, %v782
    %vm967 = vcmp.ne.s32.totalorder %v753, %v781
    %vm968 = vcmp.ne.s32.totalorder %v753, %v782
    %vm969 = vcmp.ne.s32.totalorder %v754, %v781
    %vm970 = vcmp.ne.s32.totalorder %v754, %v782
    %vm971 = vcmp.ne.s32.totalorder %v755, %v781
    %vm972 = vcmp.ne.s32.totalorder %v755, %v782
    %vm973 = vcmp.ne.s32.totalorder %v756, %v781
    %vm974 = vcmp.ne.s32.totalorder %v756, %v782
    %vm975 = vcmp.ne.s32.totalorder %v757, %v781
    %vm976 = vcmp.ne.s32.totalorder %v757, %v782
    %vm977 = vcmp.ne.s32.totalorder %v758, %v781
    %vm978 = vcmp.ne.s32.totalorder %v758, %v782
    %vm979 = vcmp.ne.s32.totalorder %v759, %v781
    %vm980 = vcmp.ne.s32.totalorder %v759, %v782
    %vm981 = vcmp.ne.s32.totalorder %v760, %v781
    %vm982 = vcmp.ne.s32.totalorder %v760, %v782
    %vm983 = vcmp.ne.s32.totalorder %v761, %v781
    %vm984 = vcmp.ne.s32.totalorder %v761, %v782
    %vm985 = vcmp.ne.s32.totalorder %v762, %v781
    %vm986 = vcmp.ne.s32.totalorder %v762, %v782
    %vm987 = vcmp.ne.s32.totalorder %v763, %v781
    %vm988 = vcmp.ne.s32.totalorder %v763, %v782
    %vm989 = vcmp.ne.s32.totalorder %v764, %v781
    %vm990 = vcmp.ne.s32.totalorder %v764, %v782
    %vm991 = vcmp.ne.s32.totalorder %v765, %v781
    %vm992 = vcmp.ne.s32.totalorder %v765, %v782
    %vm993 = vcmp.ne.s32.totalorder %v766, %v781
    %vm994 = vcmp.ne.s32.totalorder %v766, %v782
    %vm995 = vcmp.ne.s32.totalorder %v767, %v781
    %vm996 = vcmp.ne.s32.totalorder %v767, %v782
    %vm997 = vcmp.ne.s32.totalorder %v768, %v781
    %vm998 = vcmp.ne.s32.totalorder %v768, %v782
    %vm999 = vcmp.ne.s32.totalorder %v769, %v781
    %vm1000 = vcmp.ne.s32.totalorder %v769, %v782
    %vm1001 = vcmp.ne.s32.totalorder %v770, %v781
    %vm1002 = vcmp.ne.s32.totalorder %v770, %v782
    %vm1003 = vcmp.ne.s32.totalorder %v771, %v781
    %vm1004 = vcmp.ne.s32.totalorder %v771, %v782
    %vm1005 = vcmp.ne.s32.totalorder %v772, %v781
    %vm1006 = vcmp.ne.s32.totalorder %v772, %v782
    %vm1007 = vcmp.ne.s32.totalorder %v773, %v781
    %vm1008 = vcmp.ne.s32.totalorder %v773, %v782
    %vm1009 = vcmp.ne.s32.totalorder %v774, %v781
    %vm1010 = vcmp.ne.s32.totalorder %v774, %v782
    %vm1011 = vcmp.ne.s32.totalorder %v775, %v781
    %vm1012 = vcmp.ne.s32.totalorder %v775, %v782
    %vm1013 = vcmp.ne.s32.totalorder %v776, %v781
    %vm1014 = vcmp.ne.s32.totalorder %v776, %v782
    %vm1015 = vmand %vm887, %vm951
    %vm1016 = vmand %vm888, %vm952
    %vm1017 = vmand %vm889, %vm953
    %vm1018 = vmand %vm890, %vm954
    %vm1019 = vmand %vm891, %vm955
    %vm1020 = vmand %vm892, %vm956
    %vm1021 = vmand %vm893, %vm957
    %vm1022 = vmand %vm894, %vm958
    %vm1023 = vmand %vm895, %vm959
    %vm1024 = vmand %vm896, %vm960
    %vm1025 = vmand %vm897, %vm961
    %vm1026 = vmand %vm898, %vm962
    %vm1027 = vmand %vm899, %vm963
    %vm1028 = vmand %vm900, %vm964
    %vm1029 = vmand %vm901, %vm965
    %vm1030 = vmand %vm902, %vm966
    %vm1031 = vmand %vm903, %vm967
    %vm1032 = vmand %vm904, %vm968
    %vm1033 = vmand %vm905, %vm969
    %vm1034 = vmand %vm906, %vm970
    %vm1035 = vmand %vm907, %vm971
    %vm1036 = vmand %vm908, %vm972
    %vm1037 = vmand %vm909, %vm973
    %vm1038 = vmand %vm910, %vm974
    %vm1039 = vmand %vm911, %vm975
    %vm1040 = vmand %vm912, %vm976
    %vm1041 = vmand %vm913, %vm977
    %vm1042 = vmand %vm914, %vm978
    %vm1043 = vmand %vm915, %vm979
    %vm1044 = vmand %vm916, %vm980
    %vm1045 = vmand %vm917, %vm981
    %vm1046 = vmand %vm918, %vm982
    %vm1047 = vmand %vm919, %vm983
    %vm1048 = vmand %vm920, %vm984
    %vm1049 = vmand %vm921, %vm985
    %vm1050 = vmand %vm922, %vm986
    %vm1051 = vmand %vm923, %vm987
    %vm1052 = vmand %vm924, %vm988
    %vm1053 = vmand %vm925, %vm989
    %vm1054 = vmand %vm926, %vm990
    %vm1055 = vmand %vm927, %vm991
    %vm1056 = vmand %vm928, %vm992
    %vm1057 = vmand %vm929, %vm993
    %vm1058 = vmand %vm930, %vm994
    %vm1059 = vmand %vm931, %vm995
    %vm1060 = vmand %vm932, %vm996
    %vm1061 = vmand %vm933, %vm997
    %vm1062 = vmand %vm934, %vm998
    %vm1063 = vmand %vm935, %vm999
    %vm1064 = vmand %vm936, %vm1000
    %vm1065 = vmand %vm937, %vm1001
    %vm1066 = vmand %vm938, %vm1002
    %vm1067 = vmand %vm939, %vm1003
    %vm1068 = vmand %vm940, %vm1004
    %vm1069 = vmand %vm941, %vm1005
    %vm1070 = vmand %vm942, %vm1006
    %vm1071 = vmand %vm943, %vm1007
    %vm1072 = vmand %vm944, %vm1008
    %vm1073 = vmand %vm945, %vm1009
    %vm1074 = vmand %vm946, %vm1010
    %vm1075 = vmand %vm947, %vm1011
    %vm1076 = vmand %vm948, %vm1012
    %vm1077 = vmand %vm949, %vm1013
    %vm1078 = vmand %vm950, %vm1014
    %v1079 = vld [vmem:[#allocation3] sm:$0xff]
    %v1080 = vld [vmem:[#allocation3 + $0x8] sm:$0xff]
    %v1081 = vld [vmem:[#allocation3 + $0x10] sm:$0xff]
    %v1082 = vld [vmem:[#allocation3 + $0x18] sm:$0xff]
    %v1083 = vld [vmem:[#allocation3 + $0x20] sm:$0xff]
    %v1084 = vld [vmem:[#allocation3 + $0x28] sm:$0xff]
    %v1085 = vld [vmem:[#allocation3 + $0x30] sm:$0xff]
    %v1086 = vld [vmem:[#allocation3 + $0x38] sm:$0xff]
    %v1087 = vld [vmem:[#allocation3 + $0x40] sm:$0xff]
    %v1088 = vld [vmem:[#allocation3 + $0x48] sm:$0xff]
    %v1089 = vld [vmem:[#allocation3 + $0x50] sm:$0xff]
    %v1090 = vld [vmem:[#allocation3 + $0x58] sm:$0xff]
    %v1091 = vld [vmem:[#allocation3 + $0x60] sm:$0xff]
    %v1092 = vld [vmem:[#allocation3 + $0x68] sm:$0xff]
    %v1093 = vld [vmem:[#allocation3 + $0x70] sm:$0xff]
    %v1094 = vld [vmem:[#allocation3 + $0x78] sm:$0xff]
    %v1095 = vld [vmem:[#allocation3 + $0x80] sm:$0xff]
    %v1096 = vld [vmem:[#allocation3 + $0x88] sm:$0xff]
    %v1097 = vld [vmem:[#allocation3 + $0x90] sm:$0xff]
    %v1098 = vld [vmem:[#allocation3 + $0x98] sm:$0xff]
    %v1099 = vld [vmem:[#allocation3 + $0xa0] sm:$0xff]
    %v1100 = vld [vmem:[#allocation3 + $0xa8] sm:$0xff]
    %v1101 = vld [vmem:[#allocation3 + $0xb0] sm:$0xff]
    %v1102 = vld [vmem:[#allocation3 + $0xb8] sm:$0xff]
    %v1103 = vld [vmem:[#allocation3 + $0xc0] sm:$0xff]
    %v1104 = vld [vmem:[#allocation3 + $0xc8] sm:$0xff]
    %v1105 = vld [vmem:[#allocation3 + $0xd0] sm:$0xff]
    %v1106 = vld [vmem:[#allocation3 + $0xd8] sm:$0xff]
    %v1107 = vld [vmem:[#allocation3 + $0xe0] sm:$0xff]
    %v1108 = vld [vmem:[#allocation3 + $0xe8] sm:$0xff]
    %v1109 = vld [vmem:[#allocation3 + $0xf0] sm:$0xff]
    %v1110 = vld [vmem:[#allocation3 + $0xf8] sm:$0xff]
    %v1111 = vmax.f32 %v520, %v522
    %1112 = vmax.xlane.f32.xlu0 %v1111
    %v1113 = vpop.xlane.xlu0 %1112
    %v1114 = vmax.f32 %v524, %v526
    %1115 = vmax.xlane.f32.xlu0 %v1114
    %v1116 = vpop.xlane.xlu0 %1115
    %v1117 = vmax.f32 %v530, %v532
    %1118 = vmax.xlane.f32.xlu0 %v1117
    %v1119 = vpop.xlane.xlu0 %1118
    %v1120 = vmax.f32 %v534, %v536
    %1121 = vmax.xlane.f32.xlu0 %v1120
    %v1122 = vpop.xlane.xlu0 %1121
    %v1123 = vmax.f32 %v540, %v542
    %1124 = vmax.xlane.f32.xlu0 %v1123
    %v1125 = vpop.xlane.xlu0 %1124
    %v1126 = vmax.f32 %v544, %v546
    %1127 = vmax.xlane.f32.xlu0 %v1126
    %v1128 = vpop.xlane.xlu0 %1127
    %v1129 = vmax.f32 %v550, %v552
    %1130 = vmax.xlane.f32.xlu0 %v1129
    %v1131 = vpop.xlane.xlu0 %1130
    %v1132 = vmax.f32 %v554, %v556
    %1133 = vmax.xlane.f32.xlu0 %v1132
    %v1134 = vpop.xlane.xlu0 %1133
    %v1135 = vmax.f32 %v560, %v562
    %1136 = vmax.xlane.f32.xlu0 %v1135
    %v1137 = vpop.xlane.xlu0 %1136
    %v1138 = vmax.f32 %v564, %v566
    %1139 = vmax.xlane.f32.xlu0 %v1138
    %v1140 = vpop.xlane.xlu0 %1139
    %v1141 = vmax.f32 %v570, %v572
    %1142 = vmax.xlane.f32.xlu0 %v1141
    %v1143 = vpop.xlane.xlu0 %1142
    %v1144 = vmax.f32 %v574, %v576
    %1145 = vmax.xlane.f32.xlu0 %v1144
    %v1146 = vpop.xlane.xlu0 %1145
    %v1147 = vmax.f32 %v580, %v582
    %1148 = vmax.xlane.f32.xlu0 %v1147
    %v1149 = vpop.xlane.xlu0 %1148
    %v1150 = vmax.f32 %v584, %v586
    %1151 = vmax.xlane.f32.xlu0 %v1150
    %v1152 = vpop.xlane.xlu0 %1151
    %v1153 = vmax.f32 %v590, %v592
    %1154 = vmax.xlane.f32.xlu0 %v1153
    %v1155 = vpop.xlane.xlu0 %1154
    %v1156 = vmax.f32 %v594, %v596
    %1157 = vmax.xlane.f32.xlu0 %v1156
    %v1158 = vpop.xlane.xlu0 %1157
    %v1159 = vmax.f32 %v600, %v602
    %1160 = vmax.xlane.f32.xlu0 %v1159
    %v1161 = vpop.xlane.xlu0 %1160
    %v1162 = vmax.f32 %v604, %v606
    %1163 = vmax.xlane.f32.xlu0 %v1162
    %v1164 = vpop.xlane.xlu0 %1163
    %v1165 = vmax.f32 %v610, %v612
    %1166 = vmax.xlane.f32.xlu0 %v1165
    %v1167 = vpop.xlane.xlu0 %1166
    %v1168 = vmax.f32 %v614, %v616
    %1169 = vmax.xlane.f32.xlu0 %v1168
    %v1170 = vpop.xlane.xlu0 %1169
    %v1171 = vmax.f32 %v620, %v622
    %1172 = vmax.xlane.f32.xlu0 %v1171
    %v1173 = vpop.xlane.xlu0 %1172
    %v1174 = vmax.f32 %v624, %v626
    %1175 = vmax.xlane.f32.xlu0 %v1174
    %v1176 = vpop.xlane.xlu0 %1175
    %v1177 = vmax.f32 %v630, %v632
    %1178 = vmax.xlane.f32.xlu0 %v1177
    %v1179 = vpop.xlane.xlu0 %1178
    %v1180 = vmax.f32 %v634, %v636
    %1181 = vmax.xlane.f32.xlu0 %v1180
    %v1182 = vpop.xlane.xlu0 %1181
    %v1183 = vmax.f32 %v640, %v642
    %1184 = vmax.xlane.f32.xlu0 %v1183
    %v1185 = vpop.xlane.xlu0 %1184
    %v1186 = vmax.f32 %v644, %v646
    %1187 = vmax.xlane.f32.xlu0 %v1186
    %v1188 = vpop.xlane.xlu0 %1187
    %v1189 = vmax.f32 %v650, %v652
    %1190 = vmax.xlane.f32.xlu0 %v1189
    %v1191 = vpop.xlane.xlu0 %1190
    %v1192 = vmax.f32 %v654, %v656
    %1193 = vmax.xlane.f32.xlu0 %v1192
    %v1194 = vpop.xlane.xlu0 %1193
    %v1195 = vmax.f32 %v660, %v662
    %1196 = vmax.xlane.f32.xlu0 %v1195
    %v1197 = vpop.xlane.xlu0 %1196
    %v1198 = vmax.f32 %v664, %v666
    %1199 = vmax.xlane.f32.xlu0 %v1198
    %v1200 = vpop.xlane.xlu0 %1199
    %v1201 = vmax.f32 %v670, %v672
    %1202 = vmax.xlane.f32.xlu0 %v1201
    %v1203 = vpop.xlane.xlu0 %1202
    %v1204 = vmax.f32 %v674, %v676
    %1205 = vmax.xlane.f32.xlu0 %v1204
    %v1206 = vpop.xlane.xlu0 %1205
    %v1207 = vmax.f32 %v1079, %v1113
    %v1208 = vmax.f32 %v1080, %v1116
    %v1209 = vmax.f32 %v1081, %v1119
    %v1210 = vmax.f32 %v1082, %v1122
    %v1211 = vmax.f32 %v1083, %v1125
    %v1212 = vmax.f32 %v1084, %v1128
    %v1213 = vmax.f32 %v1085, %v1131
    %v1214 = vmax.f32 %v1086, %v1134
    %v1215 = vmax.f32 %v1087, %v1137
    %v1216 = vmax.f32 %v1088, %v1140
    %v1217 = vmax.f32 %v1089, %v1143
    %v1218 = vmax.f32 %v1090, %v1146
    %v1219 = vmax.f32 %v1091, %v1149
    %v1220 = vmax.f32 %v1092, %v1152
    %v1221 = vmax.f32 %v1093, %v1155
    %v1222 = vmax.f32 %v1094, %v1158
    %v1223 = vmax.f32 %v1095, %v1161
    %v1224 = vmax.f32 %v1096, %v1164
    %v1225 = vmax.f32 %v1097, %v1167
    %v1226 = vmax.f32 %v1098, %v1170
    %v1227 = vmax.f32 %v1099, %v1173
    %v1228 = vmax.f32 %v1100, %v1176
    %v1229 = vmax.f32 %v1101, %v1179
    %v1230 = vmax.f32 %v1102, %v1182
    %v1231 = vmax.f32 %v1103, %v1185
    %v1232 = vmax.f32 %v1104, %v1188
    %v1233 = vmax.f32 %v1105, %v1191
    %v1234 = vmax.f32 %v1106, %v1194
    %v1235 = vmax.f32 %v1107, %v1197
    %v1236 = vmax.f32 %v1108, %v1200
    %v1237 = vmax.f32 %v1109, %v1203
    %v1238 = vmax.f32 %v1110, %v1206
    %v1239 = vsub.f32 %v1079, %v1207
    %v1240 = vsub.f32 %v1080, %v1208
    %v1241 = vsub.f32 %v1081, %v1209
    %v1242 = vsub.f32 %v1082, %v1210
    %v1243 = vsub.f32 %v1083, %v1211
    %v1244 = vsub.f32 %v1084, %v1212
    %v1245 = vsub.f32 %v1085, %v1213
    %v1246 = vsub.f32 %v1086, %v1214
    %v1247 = vsub.f32 %v1087, %v1215
    %v1248 = vsub.f32 %v1088, %v1216
    %v1249 = vsub.f32 %v1089, %v1217
    %v1250 = vsub.f32 %v1090, %v1218
    %v1251 = vsub.f32 %v1091, %v1219
    %v1252 = vsub.f32 %v1092, %v1220
    %v1253 = vsub.f32 %v1093, %v1221
    %v1254 = vsub.f32 %v1094, %v1222
    %v1255 = vsub.f32 %v1095, %v1223
    %v1256 = vsub.f32 %v1096, %v1224
    %v1257 = vsub.f32 %v1097, %v1225
    %v1258 = vsub.f32 %v1098, %v1226
    %v1259 = vsub.f32 %v1099, %v1227
    %v1260 = vsub.f32 %v1100, %v1228
    %v1261 = vsub.f32 %v1101, %v1229
    %v1262 = vsub.f32 %v1102, %v1230
    %v1263 = vsub.f32 %v1103, %v1231
    %v1264 = vsub.f32 %v1104, %v1232
    %v1265 = vsub.f32 %v1105, %v1233
    %v1266 = vsub.f32 %v1106, %v1234
    %v1267 = vsub.f32 %v1107, %v1235
    %v1268 = vsub.f32 %v1108, %v1236
    %v1269 = vsub.f32 %v1109, %v1237
    %v1270 = vsub.f32 %v1110, %v1238
    %v1271 = vmul.f32 %v1239, 1.442695
    %v1272 = vpow.pop %v1271
    %v1273 = vmul.f32 %v1240, 1.442695
    %v1274 = vpow.pop %v1273
    %v1275 = vmul.f32 %v1241, 1.442695
    %v1276 = vpow.pop %v1275
    %v1277 = vmul.f32 %v1242, 1.442695
    %v1278 = vpow.pop %v1277
    %v1279 = vmul.f32 %v1243, 1.442695
    %v1280 = vpow.pop %v1279
    %v1281 = vmul.f32 %v1244, 1.442695
    %v1282 = vpow.pop %v1281
    %v1283 = vmul.f32 %v1245, 1.442695
    %v1284 = vpow.pop %v1283
    %v1285 = vmul.f32 %v1246, 1.442695
    %v1286 = vpow.pop %v1285
    %v1287 = vmul.f32 %v1247, 1.442695
    %v1288 = vpow.pop %v1287
    %v1289 = vmul.f32 %v1248, 1.442695
    %v1290 = vpow.pop %v1289
    %v1291 = vmul.f32 %v1249, 1.442695
    %v1292 = vpow.pop %v1291
    %v1293 = vmul.f32 %v1250, 1.442695
    %v1294 = vpow.pop %v1293
    %v1295 = vmul.f32 %v1251, 1.442695
    %v1296 = vpow.pop %v1295
    %v1297 = vmul.f32 %v1252, 1.442695
    %v1298 = vpow.pop %v1297
    %v1299 = vmul.f32 %v1253, 1.442695
    %v1300 = vpow.pop %v1299
    %v1301 = vmul.f32 %v1254, 1.442695
    %v1302 = vpow.pop %v1301
    %v1303 = vmul.f32 %v1255, 1.442695
    %v1304 = vpow.pop %v1303
    %v1305 = vmul.f32 %v1256, 1.442695
    %v1306 = vpow.pop %v1305
    %v1307 = vmul.f32 %v1257, 1.442695
    %v1308 = vpow.pop %v1307
    %v1309 = vmul.f32 %v1258, 1.442695
    %v1310 = vpow.pop %v1309
    %v1311 = vmul.f32 %v1259, 1.442695
    %v1312 = vpow.pop %v1311
    %v1313 = vmul.f32 %v1260, 1.442695
    %v1314 = vpow.pop %v1313
    %v1315 = vmul.f32 %v1261, 1.442695
    %v1316 = vpow.pop %v1315
    %v1317 = vmul.f32 %v1262, 1.442695
    %v1318 = vpow.pop %v1317
    %v1319 = vmul.f32 %v1263, 1.442695
    %v1320 = vpow.pop %v1319
    %v1321 = vmul.f32 %v1264, 1.442695
    %v1322 = vpow.pop %v1321
    %v1323 = vmul.f32 %v1265, 1.442695
    %v1324 = vpow.pop %v1323
    %v1325 = vmul.f32 %v1266, 1.442695
    %v1326 = vpow.pop %v1325
    %v1327 = vmul.f32 %v1267, 1.442695
    %v1328 = vpow.pop %v1327
    %v1329 = vmul.f32 %v1268, 1.442695
    %v1330 = vpow.pop %v1329
    %v1331 = vmul.f32 %v1269, 1.442695
    %v1332 = vpow.pop %v1331
    %v1333 = vmul.f32 %v1270, 1.442695
    %v1334 = vpow.pop %v1333
    %1336 = vset.pattern.permute.xlu0 0
    %1337 = vperm.xlu0 %1336, %v1207
    %v1338 = vpop.permute.xlu0 %1337
    %1341 = vset.pattern.permute.xlu0 0
    %1342 = vperm.xlu0 %1341, %v1208
    %v1343 = vpop.permute.xlu0 %1342
    %1346 = vset.pattern.permute.xlu0 0
    %1347 = vperm.xlu0 %1346, %v1209
    %v1348 = vpop.permute.xlu0 %1347
    %1351 = vset.pattern.permute.xlu0 0
    %1352 = vperm.xlu0 %1351, %v1210
    %v1353 = vpop.permute.xlu0 %1352
    %1356 = vset.pattern.permute.xlu0 0
    %1357 = vperm.xlu0 %1356, %v1211
    %v1358 = vpop.permute.xlu0 %1357
    %1361 = vset.pattern.permute.xlu0 0
    %1362 = vperm.xlu0 %1361, %v1212
    %v1363 = vpop.permute.xlu0 %1362
    %1366 = vset.pattern.permute.xlu0 0
    %1367 = vperm.xlu0 %1366, %v1213
    %v1368 = vpop.permute.xlu0 %1367
    %1371 = vset.pattern.permute.xlu0 0
    %1372 = vperm.xlu0 %1371, %v1214
    %v1373 = vpop.permute.xlu0 %1372
    %1376 = vset.pattern.permute.xlu0 0
    %1377 = vperm.xlu0 %1376, %v1215
    %v1378 = vpop.permute.xlu0 %1377
    %1381 = vset.pattern.permute.xlu0 0
    %1382 = vperm.xlu0 %1381, %v1216
    %v1383 = vpop.permute.xlu0 %1382
    %1386 = vset.pattern.permute.xlu0 0
    %1387 = vperm.xlu0 %1386, %v1217
    %v1388 = vpop.permute.xlu0 %1387
    %1391 = vset.pattern.permute.xlu0 0
    %1392 = vperm.xlu0 %1391, %v1218
    %v1393 = vpop.permute.xlu0 %1392
    %1396 = vset.pattern.permute.xlu0 0
    %1397 = vperm.xlu0 %1396, %v1219
    %v1398 = vpop.permute.xlu0 %1397
    %1401 = vset.pattern.permute.xlu0 0
    %1402 = vperm.xlu0 %1401, %v1220
    %v1403 = vpop.permute.xlu0 %1402
    %1406 = vset.pattern.permute.xlu0 0
    %1407 = vperm.xlu0 %1406, %v1221
    %v1408 = vpop.permute.xlu0 %1407
    %1411 = vset.pattern.permute.xlu0 0
    %1412 = vperm.xlu0 %1411, %v1222
    %v1413 = vpop.permute.xlu0 %1412
    %1416 = vset.pattern.permute.xlu0 0
    %1417 = vperm.xlu0 %1416, %v1223
    %v1418 = vpop.permute.xlu0 %1417
    %1421 = vset.pattern.permute.xlu0 0
    %1422 = vperm.xlu0 %1421, %v1224
    %v1423 = vpop.permute.xlu0 %1422
    %1426 = vset.pattern.permute.xlu0 0
    %1427 = vperm.xlu0 %1426, %v1225
    %v1428 = vpop.permute.xlu0 %1427
    %1431 = vset.pattern.permute.xlu0 0
    %1432 = vperm.xlu0 %1431, %v1226
    %v1433 = vpop.permute.xlu0 %1432
    %1436 = vset.pattern.permute.xlu0 0
    %1437 = vperm.xlu0 %1436, %v1227
    %v1438 = vpop.permute.xlu0 %1437
    %1441 = vset.pattern.permute.xlu0 0
    %1442 = vperm.xlu0 %1441, %v1228
    %v1443 = vpop.permute.xlu0 %1442
    %1446 = vset.pattern.permute.xlu0 0
    %1447 = vperm.xlu0 %1446, %v1229
    %v1448 = vpop.permute.xlu0 %1447
    %1451 = vset.pattern.permute.xlu0 0
    %1452 = vperm.xlu0 %1451, %v1230
    %v1453 = vpop.permute.xlu0 %1452
    %1456 = vset.pattern.permute.xlu0 0
    %1457 = vperm.xlu0 %1456, %v1231
    %v1458 = vpop.permute.xlu0 %1457
    %1461 = vset.pattern.permute.xlu0 0
    %1462 = vperm.xlu0 %1461, %v1232
    %v1463 = vpop.permute.xlu0 %1462
    %1466 = vset.pattern.permute.xlu0 0
    %1467 = vperm.xlu0 %1466, %v1233
    %v1468 = vpop.permute.xlu0 %1467
    %1471 = vset.pattern.permute.xlu0 0
    %1472 = vperm.xlu0 %1471, %v1234
    %v1473 = vpop.permute.xlu0 %1472
    %1476 = vset.pattern.permute.xlu0 0
    %1477 = vperm.xlu0 %1476, %v1235
    %v1478 = vpop.permute.xlu0 %1477
    %1481 = vset.pattern.permute.xlu0 0
    %1482 = vperm.xlu0 %1481, %v1236
    %v1483 = vpop.permute.xlu0 %1482
    %1486 = vset.pattern.permute.xlu0 0
    %1487 = vperm.xlu0 %1486, %v1237
    %v1488 = vpop.permute.xlu0 %1487
    %1491 = vset.pattern.permute.xlu0 0
    %1492 = vperm.xlu0 %1491, %v1238
    %v1493 = vpop.permute.xlu0 %1492
    %v1495 = vsub.f32 %v520, %v1338
    %v1496 = vsub.f32 %v522, %v1338
    %v1497 = vsub.f32 %v524, %v1343
    %v1498 = vsub.f32 %v526, %v1343
    %v1499 = vsub.f32 %v530, %v1348
    %v1500 = vsub.f32 %v532, %v1348
    %v1501 = vsub.f32 %v534, %v1353
    %v1502 = vsub.f32 %v536, %v1353
    %v1503 = vsub.f32 %v540, %v1358
    %v1504 = vsub.f32 %v542, %v1358
    %v1505 = vsub.f32 %v544, %v1363
    %v1506 = vsub.f32 %v546, %v1363
    %v1507 = vsub.f32 %v550, %v1368
    %v1508 = vsub.f32 %v552, %v1368
    %v1509 = vsub.f32 %v554, %v1373
    %v1510 = vsub.f32 %v556, %v1373
    %v1511 = vsub.f32 %v560, %v1378
    %v1512 = vsub.f32 %v562, %v1378
    %v1513 = vsub.f32 %v564, %v1383
    %v1514 = vsub.f32 %v566, %v1383
    %v1515 = vsub.f32 %v570, %v1388
    %v1516 = vsub.f32 %v572, %v1388
    %v1517 = vsub.f32 %v574, %v1393
    %v1518 = vsub.f32 %v576, %v1393
    %v1519 = vsub.f32 %v580, %v1398
    %v1520 = vsub.f32 %v582, %v1398
    %v1521 = vsub.f32 %v584, %v1403
    %v1522 = vsub.f32 %v586, %v1403
    %v1523 = vsub.f32 %v590, %v1408
    %v1524 = vsub.f32 %v592, %v1408
    %v1525 = vsub.f32 %v594, %v1413
    %v1526 = vsub.f32 %v596, %v1413
    %v1527 = vsub.f32 %v600, %v1418
    %v1528 = vsub.f32 %v602, %v1418
    %v1529 = vsub.f32 %v604, %v1423
    %v1530 = vsub.f32 %v606, %v1423
    %v1531 = vsub.f32 %v610, %v1428
    %v1532 = vsub.f32 %v612, %v1428
    %v1533 = vsub.f32 %v614, %v1433
    %v1534 = vsub.f32 %v616, %v1433
    %v1535 = vsub.f32 %v620, %v1438
    %v1536 = vsub.f32 %v622, %v1438
    %v1537 = vsub.f32 %v624, %v1443
    %v1538 = vsub.f32 %v626, %v1443
    %v1539 = vsub.f32 %v630, %v1448
    %v1540 = vsub.f32 %v632, %v1448
    %v1541 = vsub.f32 %v634, %v1453
    %v1542 = vsub.f32 %v636, %v1453
    %v1543 = vsub.f32 %v640, %v1458
    %v1544 = vsub.f32 %v642, %v1458
    %v1545 = vsub.f32 %v644, %v1463
    %v1546 = vsub.f32 %v646, %v1463
    %v1547 = vsub.f32 %v650, %v1468
    %v1548 = vsub.f32 %v652, %v1468
    %v1549 = vsub.f32 %v654, %v1473
    %v1550 = vsub.f32 %v656, %v1473
    %v1551 = vsub.f32 %v660, %v1478
    %v1552 = vsub.f32 %v662, %v1478
    %v1553 = vsub.f32 %v664, %v1483
    %v1554 = vsub.f32 %v666, %v1483
    %v1555 = vsub.f32 %v670, %v1488
    %v1556 = vsub.f32 %v672, %v1488
    %v1557 = vsub.f32 %v674, %v1493
    %v1558 = vsub.f32 %v676, %v1493
    %v1559 = vmul.f32 %v1495, 1.442695
    %v1560 = vpow.pop %v1559
    %v1561 = vmul.f32 %v1496, 1.442695
    %v1562 = vpow.pop %v1561
    %v1563 = vmul.f32 %v1497, 1.442695
    %v1564 = vpow.pop %v1563
    %v1565 = vmul.f32 %v1498, 1.442695
    %v1566 = vpow.pop %v1565
    %v1567 = vmul.f32 %v1499, 1.442695
    %v1568 = vpow.pop %v1567
    %v1569 = vmul.f32 %v1500, 1.442695
    %v1570 = vpow.pop %v1569
    %v1571 = vmul.f32 %v1501, 1.442695
    %v1572 = vpow.pop %v1571
    %v1573 = vmul.f32 %v1502, 1.442695
    %v1574 = vpow.pop %v1573
    %v1575 = vmul.f32 %v1503, 1.442695
    %v1576 = vpow.pop %v1575
    %v1577 = vmul.f32 %v1504, 1.442695
    %v1578 = vpow.pop %v1577
    %v1579 = vmul.f32 %v1505, 1.442695
    %v1580 = vpow.pop %v1579
    %v1581 = vmul.f32 %v1506, 1.442695
    %v1582 = vpow.pop %v1581
    %v1583 = vmul.f32 %v1507, 1.442695
    %v1584 = vpow.pop %v1583
    %v1585 = vmul.f32 %v1508, 1.442695
    %v1586 = vpow.pop %v1585
    %v1587 = vmul.f32 %v1509, 1.442695
    %v1588 = vpow.pop %v1587
    %v1589 = vmul.f32 %v1510, 1.442695
    %v1590 = vpow.pop %v1589
    %v1591 = vmul.f32 %v1511, 1.442695
    %v1592 = vpow.pop %v1591
    %v1593 = vmul.f32 %v1512, 1.442695
    %v1594 = vpow.pop %v1593
    %v1595 = vmul.f32 %v1513, 1.442695
    %v1596 = vpow.pop %v1595
    %v1597 = vmul.f32 %v1514, 1.442695
    %v1598 = vpow.pop %v1597
    %v1599 = vmul.f32 %v1515, 1.442695
    %v1600 = vpow.pop %v1599
    %v1601 = vmul.f32 %v1516, 1.442695
    %v1602 = vpow.pop %v1601
    %v1603 = vmul.f32 %v1517, 1.442695
    %v1604 = vpow.pop %v1603
    %v1605 = vmul.f32 %v1518, 1.442695
    %v1606 = vpow.pop %v1605
    %v1607 = vmul.f32 %v1519, 1.442695
    %v1608 = vpow.pop %v1607
    %v1609 = vmul.f32 %v1520, 1.442695
    %v1610 = vpow.pop %v1609
    %v1611 = vmul.f32 %v1521, 1.442695
    %v1612 = vpow.pop %v1611
    %v1613 = vmul.f32 %v1522, 1.442695
    %v1614 = vpow.pop %v1613
    %v1615 = vmul.f32 %v1523, 1.442695
    %v1616 = vpow.pop %v1615
    %v1617 = vmul.f32 %v1524, 1.442695
    %v1618 = vpow.pop %v1617
    %v1619 = vmul.f32 %v1525, 1.442695
    %v1620 = vpow.pop %v1619
    %v1621 = vmul.f32 %v1526, 1.442695
    %v1622 = vpow.pop %v1621
    %v1623 = vmul.f32 %v1527, 1.442695
    %v1624 = vpow.pop %v1623
    %v1625 = vmul.f32 %v1528, 1.442695
    %v1626 = vpow.pop %v1625
    %v1627 = vmul.f32 %v1529, 1.442695
    %v1628 = vpow.pop %v1627
    %v1629 = vmul.f32 %v1530, 1.442695
    %v1630 = vpow.pop %v1629
    %v1631 = vmul.f32 %v1531, 1.442695
    %v1632 = vpow.pop %v1631
    %v1633 = vmul.f32 %v1532, 1.442695
    %v1634 = vpow.pop %v1633
    %v1635 = vmul.f32 %v1533, 1.442695
    %v1636 = vpow.pop %v1635
    %v1637 = vmul.f32 %v1534, 1.442695
    %v1638 = vpow.pop %v1637
    %v1639 = vmul.f32 %v1535, 1.442695
    %v1640 = vpow.pop %v1639
    %v1641 = vmul.f32 %v1536, 1.442695
    %v1642 = vpow.pop %v1641
    %v1643 = vmul.f32 %v1537, 1.442695
    %v1644 = vpow.pop %v1643
    %v1645 = vmul.f32 %v1538, 1.442695
    %v1646 = vpow.pop %v1645
    %v1647 = vmul.f32 %v1539, 1.442695
    %v1648 = vpow.pop %v1647
    %v1649 = vmul.f32 %v1540, 1.442695
    %v1650 = vpow.pop %v1649
    %v1651 = vmul.f32 %v1541, 1.442695
    %v1652 = vpow.pop %v1651
    %v1653 = vmul.f32 %v1542, 1.442695
    %v1654 = vpow.pop %v1653
    %v1655 = vmul.f32 %v1543, 1.442695
    %v1656 = vpow.pop %v1655
    %v1657 = vmul.f32 %v1544, 1.442695
    %v1658 = vpow.pop %v1657
    %v1659 = vmul.f32 %v1545, 1.442695
    %v1660 = vpow.pop %v1659
    %v1661 = vmul.f32 %v1546, 1.442695
    %v1662 = vpow.pop %v1661
    %v1663 = vmul.f32 %v1547, 1.442695
    %v1664 = vpow.pop %v1663
    %v1665 = vmul.f32 %v1548, 1.442695
    %v1666 = vpow.pop %v1665
    %v1667 = vmul.f32 %v1549, 1.442695
    %v1668 = vpow.pop %v1667
    %v1669 = vmul.f32 %v1550, 1.442695
    %v1670 = vpow.pop %v1669
    %v1671 = vmul.f32 %v1551, 1.442695
    %v1672 = vpow.pop %v1671
    %v1673 = vmul.f32 %v1552, 1.442695
    %v1674 = vpow.pop %v1673
    %v1675 = vmul.f32 %v1553, 1.442695
    %v1676 = vpow.pop %v1675
    %v1677 = vmul.f32 %v1554, 1.442695
    %v1678 = vpow.pop %v1677
    %v1679 = vmul.f32 %v1555, 1.442695
    %v1680 = vpow.pop %v1679
    %v1681 = vmul.f32 %v1556, 1.442695
    %v1682 = vpow.pop %v1681
    %v1683 = vmul.f32 %v1557, 1.442695
    %v1684 = vpow.pop %v1683
    %v1685 = vmul.f32 %v1558, 1.442695
    %v1686 = vpow.pop %v1685
    %v1687 = vsel %vm1015, %v1560, 0.0
    %v1688 = vsel %vm1016, %v1562, 0.0
    %v1689 = vsel %vm1017, %v1564, 0.0
    %v1690 = vsel %vm1018, %v1566, 0.0
    %v1691 = vsel %vm1019, %v1568, 0.0
    %v1692 = vsel %vm1020, %v1570, 0.0
    %v1693 = vsel %vm1021, %v1572, 0.0
    %v1694 = vsel %vm1022, %v1574, 0.0
    %v1695 = vsel %vm1023, %v1576, 0.0
    %v1696 = vsel %vm1024, %v1578, 0.0
    %v1697 = vsel %vm1025, %v1580, 0.0
    %v1698 = vsel %vm1026, %v1582, 0.0
    %v1699 = vsel %vm1027, %v1584, 0.0
    %v1700 = vsel %vm1028, %v1586, 0.0
    %v1701 = vsel %vm1029, %v1588, 0.0
    %v1702 = vsel %vm1030, %v1590, 0.0
    %v1703 = vsel %vm1031, %v1592, 0.0
    %v1704 = vsel %vm1032, %v1594, 0.0
    %v1705 = vsel %vm1033, %v1596, 0.0
    %v1706 = vsel %vm1034, %v1598, 0.0
    %v1707 = vsel %vm1035, %v1600, 0.0
    %v1708 = vsel %vm1036, %v1602, 0.0
    %v1709 = vsel %vm1037, %v1604, 0.0
    %v1710 = vsel %vm1038, %v1606, 0.0
    %v1711 = vsel %vm1039, %v1608, 0.0
    %v1712 = vsel %vm1040, %v1610, 0.0
    %v1713 = vsel %vm1041, %v1612, 0.0
    %v1714 = vsel %vm1042, %v1614, 0.0
    %v1715 = vsel %vm1043, %v1616, 0.0
    %v1716 = vsel %vm1044, %v1618, 0.0
    %v1717 = vsel %vm1045, %v1620, 0.0
    %v1718 = vsel %vm1046, %v1622, 0.0
    %v1719 = vsel %vm1047, %v1624, 0.0
    %v1720 = vsel %vm1048, %v1626, 0.0
    %v1721 = vsel %vm1049, %v1628, 0.0
    %v1722 = vsel %vm1050, %v1630, 0.0
    %v1723 = vsel %vm1051, %v1632, 0.0
    %v1724 = vsel %vm1052, %v1634, 0.0
    %v1725 = vsel %vm1053, %v1636, 0.0
    %v1726 = vsel %vm1054, %v1638, 0.0
    %v1727 = vsel %vm1055, %v1640, 0.0
    %v1728 = vsel %vm1056, %v1642, 0.0
    %v1729 = vsel %vm1057, %v1644, 0.0
    %v1730 = vsel %vm1058, %v1646, 0.0
    %v1731 = vsel %vm1059, %v1648, 0.0
    %v1732 = vsel %vm1060, %v1650, 0.0
    %v1733 = vsel %vm1061, %v1652, 0.0
    %v1734 = vsel %vm1062, %v1654, 0.0
    %v1735 = vsel %vm1063, %v1656, 0.0
    %v1736 = vsel %vm1064, %v1658, 0.0
    %v1737 = vsel %vm1065, %v1660, 0.0
    %v1738 = vsel %vm1066, %v1662, 0.0
    %v1739 = vsel %vm1067, %v1664, 0.0
    %v1740 = vsel %vm1068, %v1666, 0.0
    %v1741 = vsel %vm1069, %v1668, 0.0
    %v1742 = vsel %vm1070, %v1670, 0.0
    %v1743 = vsel %vm1071, %v1672, 0.0
    %v1744 = vsel %vm1072, %v1674, 0.0
    %v1745 = vsel %vm1073, %v1676, 0.0
    %v1746 = vsel %vm1074, %v1678, 0.0
    %v1747 = vsel %vm1075, %v1680, 0.0
    %v1748 = vsel %vm1076, %v1682, 0.0
    %v1749 = vsel %vm1077, %v1684, 0.0
    %v1750 = vsel %vm1078, %v1686, 0.0
    %v1751 = vld [vmem:[#allocation4] sm:$0xff]
    %v1752 = vld [vmem:[#allocation4 + $0x8] sm:$0xff]
    %v1753 = vld [vmem:[#allocation4 + $0x10] sm:$0xff]
    %v1754 = vld [vmem:[#allocation4 + $0x18] sm:$0xff]
    %v1755 = vld [vmem:[#allocation4 + $0x20] sm:$0xff]
    %v1756 = vld [vmem:[#allocation4 + $0x28] sm:$0xff]
    %v1757 = vld [vmem:[#allocation4 + $0x30] sm:$0xff]
    %v1758 = vld [vmem:[#allocation4 + $0x38] sm:$0xff]
    %v1759 = vld [vmem:[#allocation4 + $0x40] sm:$0xff]
    %v1760 = vld [vmem:[#allocation4 + $0x48] sm:$0xff]
    %v1761 = vld [vmem:[#allocation4 + $0x50] sm:$0xff]
    %v1762 = vld [vmem:[#allocation4 + $0x58] sm:$0xff]
    %v1763 = vld [vmem:[#allocation4 + $0x60] sm:$0xff]
    %v1764 = vld [vmem:[#allocation4 + $0x68] sm:$0xff]
    %v1765 = vld [vmem:[#allocation4 + $0x70] sm:$0xff]
    %v1766 = vld [vmem:[#allocation4 + $0x78] sm:$0xff]
    %v1767 = vld [vmem:[#allocation4 + $0x80] sm:$0xff]
    %v1768 = vld [vmem:[#allocation4 + $0x88] sm:$0xff]
    %v1769 = vld [vmem:[#allocation4 + $0x90] sm:$0xff]
    %v1770 = vld [vmem:[#allocation4 + $0x98] sm:$0xff]
    %v1771 = vld [vmem:[#allocation4 + $0xa0] sm:$0xff]
    %v1772 = vld [vmem:[#allocation4 + $0xa8] sm:$0xff]
    %v1773 = vld [vmem:[#allocation4 + $0xb0] sm:$0xff]
    %v1774 = vld [vmem:[#allocation4 + $0xb8] sm:$0xff]
    %v1775 = vld [vmem:[#allocation4 + $0xc0] sm:$0xff]
    %v1776 = vld [vmem:[#allocation4 + $0xc8] sm:$0xff]
    %v1777 = vld [vmem:[#allocation4 + $0xd0] sm:$0xff]
    %v1778 = vld [vmem:[#allocation4 + $0xd8] sm:$0xff]
    %v1779 = vld [vmem:[#allocation4 + $0xe0] sm:$0xff]
    %v1780 = vld [vmem:[#allocation4 + $0xe8] sm:$0xff]
    %v1781 = vld [vmem:[#allocation4 + $0xf0] sm:$0xff]
    %v1782 = vld [vmem:[#allocation4 + $0xf8] sm:$0xff]
    %v1783 = vmul.f32 %v1751, %v1272
    %v1784 = vmul.f32 %v1752, %v1274
    %v1785 = vmul.f32 %v1753, %v1276
    %v1786 = vmul.f32 %v1754, %v1278
    %v1787 = vmul.f32 %v1755, %v1280
    %v1788 = vmul.f32 %v1756, %v1282
    %v1789 = vmul.f32 %v1757, %v1284
    %v1790 = vmul.f32 %v1758, %v1286
    %v1791 = vmul.f32 %v1759, %v1288
    %v1792 = vmul.f32 %v1760, %v1290
    %v1793 = vmul.f32 %v1761, %v1292
    %v1794 = vmul.f32 %v1762, %v1294
    %v1795 = vmul.f32 %v1763, %v1296
    %v1796 = vmul.f32 %v1764, %v1298
    %v1797 = vmul.f32 %v1765, %v1300
    %v1798 = vmul.f32 %v1766, %v1302
    %v1799 = vmul.f32 %v1767, %v1304
    %v1800 = vmul.f32 %v1768, %v1306
    %v1801 = vmul.f32 %v1769, %v1308
    %v1802 = vmul.f32 %v1770, %v1310
    %v1803 = vmul.f32 %v1771, %v1312
    %v1804 = vmul.f32 %v1772, %v1314
    %v1805 = vmul.f32 %v1773, %v1316
    %v1806 = vmul.f32 %v1774, %v1318
    %v1807 = vmul.f32 %v1775, %v1320
    %v1808 = vmul.f32 %v1776, %v1322
    %v1809 = vmul.f32 %v1777, %v1324
    %v1810 = vmul.f32 %v1778, %v1326
    %v1811 = vmul.f32 %v1779, %v1328
    %v1812 = vmul.f32 %v1780, %v1330
    %v1813 = vmul.f32 %v1781, %v1332
    %v1814 = vmul.f32 %v1782, %v1334
    %v1815 = vadd.f32 %v1687, %v1688
    %1816 = vadd.xlane.f32.xlu0 %v1815
    %v1817 = vpop.xlane.xlu0 %1816
    %v1818 = vadd.f32 %v1689, %v1690
    %1819 = vadd.xlane.f32.xlu0 %v1818
    %v1820 = vpop.xlane.xlu0 %1819
    %v1821 = vadd.f32 %v1691, %v1692
    %1822 = vadd.xlane.f32.xlu0 %v1821
    %v1823 = vpop.xlane.xlu0 %1822
    %v1824 = vadd.f32 %v1693, %v1694
    %1825 = vadd.xlane.f32.xlu0 %v1824
    %v1826 = vpop.xlane.xlu0 %1825
    %v1827 = vadd.f32 %v1695, %v1696
    %1828 = vadd.xlane.f32.xlu0 %v1827
    %v1829 = vpop.xlane.xlu0 %1828
    %v1830 = vadd.f32 %v1697, %v1698
    %1831 = vadd.xlane.f32.xlu0 %v1830
    %v1832 = vpop.xlane.xlu0 %1831
    %v1833 = vadd.f32 %v1699, %v1700
    %1834 = vadd.xlane.f32.xlu0 %v1833
    %v1835 = vpop.xlane.xlu0 %1834
    %v1836 = vadd.f32 %v1701, %v1702
    %1837 = vadd.xlane.f32.xlu0 %v1836
    %v1838 = vpop.xlane.xlu0 %1837
    %v1839 = vadd.f32 %v1703, %v1704
    %1840 = vadd.xlane.f32.xlu0 %v1839
    %v1841 = vpop.xlane.xlu0 %1840
    %v1842 = vadd.f32 %v1705, %v1706
    %1843 = vadd.xlane.f32.xlu0 %v1842
    %v1844 = vpop.xlane.xlu0 %1843
    %v1845 = vadd.f32 %v1707, %v1708
    %1846 = vadd.xlane.f32.xlu0 %v1845
    %v1847 = vpop.xlane.xlu0 %1846
    %v1848 = vadd.f32 %v1709, %v1710
    %1849 = vadd.xlane.f32.xlu0 %v1848
    %v1850 = vpop.xlane.xlu0 %1849
    %v1851 = vadd.f32 %v1711, %v1712
    %1852 = vadd.xlane.f32.xlu0 %v1851
    %v1853 = vpop.xlane.xlu0 %1852
    %v1854 = vadd.f32 %v1713, %v1714
    %1855 = vadd.xlane.f32.xlu0 %v1854
    %v1856 = vpop.xlane.xlu0 %1855
    %v1857 = vadd.f32 %v1715, %v1716
    %1858 = vadd.xlane.f32.xlu0 %v1857
    %v1859 = vpop.xlane.xlu0 %1858
    %v1860 = vadd.f32 %v1717, %v1718
    %1861 = vadd.xlane.f32.xlu0 %v1860
    %v1862 = vpop.xlane.xlu0 %1861
    %v1863 = vadd.f32 %v1719, %v1720
    %1864 = vadd.xlane.f32.xlu0 %v1863
    %v1865 = vpop.xlane.xlu0 %1864
    %v1866 = vadd.f32 %v1721, %v1722
    %1867 = vadd.xlane.f32.xlu0 %v1866
    %v1868 = vpop.xlane.xlu0 %1867
    %v1869 = vadd.f32 %v1723, %v1724
    %1870 = vadd.xlane.f32.xlu0 %v1869
    %v1871 = vpop.xlane.xlu0 %1870
    %v1872 = vadd.f32 %v1725, %v1726
    %1873 = vadd.xlane.f32.xlu0 %v1872
    %v1874 = vpop.xlane.xlu0 %1873
    %v1875 = vadd.f32 %v1727, %v1728
    %1876 = vadd.xlane.f32.xlu0 %v1875
    %v1877 = vpop.xlane.xlu0 %1876
    %v1878 = vadd.f32 %v1729, %v1730
    %1879 = vadd.xlane.f32.xlu0 %v1878
    %v1880 = vpop.xlane.xlu0 %1879
    %v1881 = vadd.f32 %v1731, %v1732
    %1882 = vadd.xlane.f32.xlu0 %v1881
    %v1883 = vpop.xlane.xlu0 %1882
    %v1884 = vadd.f32 %v1733, %v1734
    %1885 = vadd.xlane.f32.xlu0 %v1884
    %v1886 = vpop.xlane.xlu0 %1885
    %v1887 = vadd.f32 %v1735, %v1736
    %1888 = vadd.xlane.f32.xlu0 %v1887
    %v1889 = vpop.xlane.xlu0 %1888
    %v1890 = vadd.f32 %v1737, %v1738
    %1891 = vadd.xlane.f32.xlu0 %v1890
    %v1892 = vpop.xlane.xlu0 %1891
    %v1893 = vadd.f32 %v1739, %v1740
    %1894 = vadd.xlane.f32.xlu0 %v1893
    %v1895 = vpop.xlane.xlu0 %1894
    %v1896 = vadd.f32 %v1741, %v1742
    %1897 = vadd.xlane.f32.xlu0 %v1896
    %v1898 = vpop.xlane.xlu0 %1897
    %v1899 = vadd.f32 %v1743, %v1744
    %1900 = vadd.xlane.f32.xlu0 %v1899
    %v1901 = vpop.xlane.xlu0 %1900
    %v1902 = vadd.f32 %v1745, %v1746
    %1903 = vadd.xlane.f32.xlu0 %v1902
    %v1904 = vpop.xlane.xlu0 %1903
    %v1905 = vadd.f32 %v1747, %v1748
    %1906 = vadd.xlane.f32.xlu0 %v1905
    %v1907 = vpop.xlane.xlu0 %1906
    %v1908 = vadd.f32 %v1749, %v1750
    %1909 = vadd.xlane.f32.xlu0 %v1908
    %v1910 = vpop.xlane.xlu0 %1909
    %v1911 = vadd.f32 %v1783, %v1817
    %v1912 = vadd.f32 %v1784, %v1820
    %v1913 = vadd.f32 %v1785, %v1823
    %v1914 = vadd.f32 %v1786, %v1826
    %v1915 = vadd.f32 %v1787, %v1829
    %v1916 = vadd.f32 %v1788, %v1832
    %v1917 = vadd.f32 %v1789, %v1835
    %v1918 = vadd.f32 %v1790, %v1838
    %v1919 = vadd.f32 %v1791, %v1841
    %v1920 = vadd.f32 %v1792, %v1844
    %v1921 = vadd.f32 %v1793, %v1847
    %v1922 = vadd.f32 %v1794, %v1850
    %v1923 = vadd.f32 %v1795, %v1853
    %v1924 = vadd.f32 %v1796, %v1856
    %v1925 = vadd.f32 %v1797, %v1859
    %v1926 = vadd.f32 %v1798, %v1862
    %v1927 = vadd.f32 %v1799, %v1865
    %v1928 = vadd.f32 %v1800, %v1868
    %v1929 = vadd.f32 %v1801, %v1871
    %v1930 = vadd.f32 %v1802, %v1874
    %v1931 = vadd.f32 %v1803, %v1877
    %v1932 = vadd.f32 %v1804, %v1880
    %v1933 = vadd.f32 %v1805, %v1883
    %v1934 = vadd.f32 %v1806, %v1886
    %v1935 = vadd.f32 %v1807, %v1889
    %v1936 = vadd.f32 %v1808, %v1892
    %v1937 = vadd.f32 %v1809, %v1895
    %v1938 = vadd.f32 %v1810, %v1898
    %v1939 = vadd.f32 %v1811, %v1901
    %v1940 = vadd.f32 %v1812, %v1904
    %v1941 = vadd.f32 %v1813, %v1907
    %v1942 = vadd.f32 %v1814, %v1910
    %vm1943 = vcmask 7168
    %1944 = vst.msk [vmem:[#allocation4] sm:$0xff] %vm1943, %v1911
    %1945 = vst.msk [vmem:[#allocation4 + $0x8] sm:$0xff] %vm1943, %v1912
    %1946 = vst.msk [vmem:[#allocation4 + $0x10] sm:$0xff] %vm1943, %v1913
    %1947 = vst.msk [vmem:[#allocation4 + $0x18] sm:$0xff] %vm1943, %v1914
    %1948 = vst.msk [vmem:[#allocation4 + $0x20] sm:$0xff] %vm1943, %v1915
    %1949 = vst.msk [vmem:[#allocation4 + $0x28] sm:$0xff] %vm1943, %v1916
    %1950 = vst.msk [vmem:[#allocation4 + $0x30] sm:$0xff] %vm1943, %v1917
    %1951 = vst.msk [vmem:[#allocation4 + $0x38] sm:$0xff] %vm1943, %v1918
    %1952 = vst.msk [vmem:[#allocation4 + $0x40] sm:$0xff] %vm1943, %v1919
    %1953 = vst.msk [vmem:[#allocation4 + $0x48] sm:$0xff] %vm1943, %v1920
    %1954 = vst.msk [vmem:[#allocation4 + $0x50] sm:$0xff] %vm1943, %v1921
    %1955 = vst.msk [vmem:[#allocation4 + $0x58] sm:$0xff] %vm1943, %v1922
    %1956 = vst.msk [vmem:[#allocation4 + $0x60] sm:$0xff] %vm1943, %v1923
    %1957 = vst.msk [vmem:[#allocation4 + $0x68] sm:$0xff] %vm1943, %v1924
    %1958 = vst.msk [vmem:[#allocation4 + $0x70] sm:$0xff] %vm1943, %v1925
    %1959 = vst.msk [vmem:[#allocation4 + $0x78] sm:$0xff] %vm1943, %v1926
    %1960 = vst.msk [vmem:[#allocation4 + $0x80] sm:$0xff] %vm1943, %v1927
    %1961 = vst.msk [vmem:[#allocation4 + $0x88] sm:$0xff] %vm1943, %v1928
    %1962 = vst.msk [vmem:[#allocation4 + $0x90] sm:$0xff] %vm1943, %v1929
    %1963 = vst.msk [vmem:[#allocation4 + $0x98] sm:$0xff] %vm1943, %v1930
    %1964 = vst.msk [vmem:[#allocation4 + $0xa0] sm:$0xff] %vm1943, %v1931
    %1965 = vst.msk [vmem:[#allocation4 + $0xa8] sm:$0xff] %vm1943, %v1932
    %1966 = vst.msk [vmem:[#allocation4 + $0xb0] sm:$0xff] %vm1943, %v1933
    %1967 = vst.msk [vmem:[#allocation4 + $0xb8] sm:$0xff] %vm1943, %v1934
    %1968 = vst.msk [vmem:[#allocation4 + $0xc0] sm:$0xff] %vm1943, %v1935
    %1969 = vst.msk [vmem:[#allocation4 + $0xc8] sm:$0xff] %vm1943, %v1936
    %1970 = vst.msk [vmem:[#allocation4 + $0xd0] sm:$0xff] %vm1943, %v1937
    %1971 = vst.msk [vmem:[#allocation4 + $0xd8] sm:$0xff] %vm1943, %v1938
    %1972 = vst.msk [vmem:[#allocation4 + $0xe0] sm:$0xff] %vm1943, %v1939
    %1973 = vst.msk [vmem:[#allocation4 + $0xe8] sm:$0xff] %vm1943, %v1940
    %1974 = vst.msk [vmem:[#allocation4 + $0xf0] sm:$0xff] %vm1943, %v1941
    %1975 = vst.msk [vmem:[#allocation4 + $0xf8] sm:$0xff] %vm1943, %v1942
    %v1976 = vld [vmem:[#allocation5] sm:$0xff]
    %v1977 = vld [vmem:[#allocation5 + $0x8] sm:$0xff]
    %v1978 = vld [vmem:[#allocation5 + $0x10] sm:$0xff]
    %v1979 = vld [vmem:[#allocation5 + $0x18] sm:$0xff]
    %v1980 = vld [vmem:[#allocation5 + $0x20] sm:$0xff]
    %v1981 = vld [vmem:[#allocation5 + $0x28] sm:$0xff]
    %v1982 = vld [vmem:[#allocation5 + $0x30] sm:$0xff]
    %v1983 = vld [vmem:[#allocation5 + $0x38] sm:$0xff]
    %v1984 = vld [vmem:[#allocation5 + $0x40] sm:$0xff]
    %v1985 = vld [vmem:[#allocation5 + $0x48] sm:$0xff]
    %v1986 = vld [vmem:[#allocation5 + $0x50] sm:$0xff]
    %v1987 = vld [vmem:[#allocation5 + $0x58] sm:$0xff]
    %v1988 = vld [vmem:[#allocation5 + $0x60] sm:$0xff]
    %v1989 = vld [vmem:[#allocation5 + $0x68] sm:$0xff]
    %v1990 = vld [vmem:[#allocation5 + $0x70] sm:$0xff]
    %v1991 = vld [vmem:[#allocation5 + $0x78] sm:$0xff]
    %v1992 = vld [vmem:[#allocation5 + $0x80] sm:$0xff]
    %v1993 = vld [vmem:[#allocation5 + $0x88] sm:$0xff]
    %v1994 = vld [vmem:[#allocation5 + $0x90] sm:$0xff]
    %v1995 = vld [vmem:[#allocation5 + $0x98] sm:$0xff]
    %v1996 = vld [vmem:[#allocation5 + $0xa0] sm:$0xff]
    %v1997 = vld [vmem:[#allocation5 + $0xa8] sm:$0xff]
    %v1998 = vld [vmem:[#allocation5 + $0xb0] sm:$0xff]
    %v1999 = vld [vmem:[#allocation5 + $0xb8] sm:$0xff]
    %v2000 = vld [vmem:[#allocation5 + $0xc0] sm:$0xff]
    %v2001 = vld [vmem:[#allocation5 + $0xc8] sm:$0xff]
    %v2002 = vld [vmem:[#allocation5 + $0xd0] sm:$0xff]
    %v2003 = vld [vmem:[#allocation5 + $0xd8] sm:$0xff]
    %v2004 = vld [vmem:[#allocation5 + $0xe0] sm:$0xff]
    %v2005 = vld [vmem:[#allocation5 + $0xe8] sm:$0xff]
    %v2006 = vld [vmem:[#allocation5 + $0xf0] sm:$0xff]
    %v2007 = vld [vmem:[#allocation5 + $0xf8] sm:$0xff]
    %v2008 = vsel %vm1015, %v520, 0.0
    %v2009 = vsel %vm1016, %v522, 0.0
    %v2010 = vsel %vm1017, %v524, 0.0
    %v2011 = vsel %vm1018, %v526, 0.0
    %v2012 = vsel %vm1019, %v530, 0.0
    %v2013 = vsel %vm1020, %v532, 0.0
    %v2014 = vsel %vm1021, %v534, 0.0
    %v2015 = vsel %vm1022, %v536, 0.0
    %v2016 = vsel %vm1023, %v540, 0.0
    %v2017 = vsel %vm1024, %v542, 0.0
    %v2018 = vsel %vm1025, %v544, 0.0
    %v2019 = vsel %vm1026, %v546, 0.0
    %v2020 = vsel %vm1027, %v550, 0.0
    %v2021 = vsel %vm1028, %v552, 0.0
    %v2022 = vsel %vm1029, %v554, 0.0
    %v2023 = vsel %vm1030, %v556, 0.0
    %v2024 = vsel %vm1031, %v560, 0.0
    %v2025 = vsel %vm1032, %v562, 0.0
    %v2026 = vsel %vm1033, %v564, 0.0
    %v2027 = vsel %vm1034, %v566, 0.0
    %v2028 = vsel %vm1035, %v570, 0.0
    %v2029 = vsel %vm1036, %v572, 0.0
    %v2030 = vsel %vm1037, %v574, 0.0
    %v2031 = vsel %vm1038, %v576, 0.0
    %v2032 = vsel %vm1039, %v580, 0.0
    %v2033 = vsel %vm1040, %v582, 0.0
    %v2034 = vsel %vm1041, %v584, 0.0
    %v2035 = vsel %vm1042, %v586, 0.0
    %v2036 = vsel %vm1043, %v590, 0.0
    %v2037 = vsel %vm1044, %v592, 0.0
    %v2038 = vsel %vm1045, %v594, 0.0
    %v2039 = vsel %vm1046, %v596, 0.0
    %v2040 = vsel %vm1047, %v600, 0.0
    %v2041 = vsel %vm1048, %v602, 0.0
    %v2042 = vsel %vm1049, %v604, 0.0
    %v2043 = vsel %vm1050, %v606, 0.0
    %v2044 = vsel %vm1051, %v610, 0.0
    %v2045 = vsel %vm1052, %v612, 0.0
    %v2046 = vsel %vm1053, %v614, 0.0
    %v2047 = vsel %vm1054, %v616, 0.0
    %v2048 = vsel %vm1055, %v620, 0.0
    %v2049 = vsel %vm1056, %v622, 0.0
    %v2050 = vsel %vm1057, %v624, 0.0
    %v2051 = vsel %vm1058, %v626, 0.0
    %v2052 = vsel %vm1059, %v630, 0.0
    %v2053 = vsel %vm1060, %v632, 0.0
    %v2054 = vsel %vm1061, %v634, 0.0
    %v2055 = vsel %vm1062, %v636, 0.0
    %v2056 = vsel %vm1063, %v640, 0.0
    %v2057 = vsel %vm1064, %v642, 0.0
    %v2058 = vsel %vm1065, %v644, 0.0
    %v2059 = vsel %vm1066, %v646, 0.0
    %v2060 = vsel %vm1067, %v650, 0.0
    %v2061 = vsel %vm1068, %v652, 0.0
    %v2062 = vsel %vm1069, %v654, 0.0
    %v2063 = vsel %vm1070, %v656, 0.0
    %v2064 = vsel %vm1071, %v660, 0.0
    %v2065 = vsel %vm1072, %v662, 0.0
    %v2066 = vsel %vm1073, %v664, 0.0
    %v2067 = vsel %vm1074, %v666, 0.0
    %v2068 = vsel %vm1075, %v670, 0.0
    %v2069 = vsel %vm1076, %v672, 0.0
    %v2070 = vsel %vm1077, %v674, 0.0
    %v2071 = vsel %vm1078, %v676, 0.0
    %v2072 = vadd.f32 %v2008, %v2009
    %2073 = vadd.xlane.f32.xlu0 %v2072
    %v2074 = vpop.xlane.xlu0 %2073
    %v2075 = vadd.f32 %v2010, %v2011
    %2076 = vadd.xlane.f32.xlu0 %v2075
    %v2077 = vpop.xlane.xlu0 %2076
    %v2078 = vadd.f32 %v2012, %v2013
    %2079 = vadd.xlane.f32.xlu0 %v2078
    %v2080 = vpop.xlane.xlu0 %2079
    %v2081 = vadd.f32 %v2014, %v2015
    %2082 = vadd.xlane.f32.xlu0 %v2081
    %v2083 = vpop.xlane.xlu0 %2082
    %v2084 = vadd.f32 %v2016, %v2017
    %2085 = vadd.xlane.f32.xlu0 %v2084
    %v2086 = vpop.xlane.xlu0 %2085
    %v2087 = vadd.f32 %v2018, %v2019
    %2088 = vadd.xlane.f32.xlu0 %v2087
    %v2089 = vpop.xlane.xlu0 %2088
    %v2090 = vadd.f32 %v2020, %v2021
    %2091 = vadd.xlane.f32.xlu0 %v2090
    %v2092 = vpop.xlane.xlu0 %2091
    %v2093 = vadd.f32 %v2022, %v2023
    %2094 = vadd.xlane.f32.xlu0 %v2093
    %v2095 = vpop.xlane.xlu0 %2094
    %v2096 = vadd.f32 %v2024, %v2025
    %2097 = vadd.xlane.f32.xlu0 %v2096
    %v2098 = vpop.xlane.xlu0 %2097
    %v2099 = vadd.f32 %v2026, %v2027
    %2100 = vadd.xlane.f32.xlu0 %v2099
    %v2101 = vpop.xlane.xlu0 %2100
    %v2102 = vadd.f32 %v2028, %v2029
    %2103 = vadd.xlane.f32.xlu0 %v2102
    %v2104 = vpop.xlane.xlu0 %2103
    %v2105 = vadd.f32 %v2030, %v2031
    %2106 = vadd.xlane.f32.xlu0 %v2105
    %v2107 = vpop.xlane.xlu0 %2106
    %v2108 = vadd.f32 %v2032, %v2033
    %2109 = vadd.xlane.f32.xlu0 %v2108
    %v2110 = vpop.xlane.xlu0 %2109
    %v2111 = vadd.f32 %v2034, %v2035
    %2112 = vadd.xlane.f32.xlu0 %v2111
    %v2113 = vpop.xlane.xlu0 %2112
    %v2114 = vadd.f32 %v2036, %v2037
    %2115 = vadd.xlane.f32.xlu0 %v2114
    %v2116 = vpop.xlane.xlu0 %2115
    %v2117 = vadd.f32 %v2038, %v2039
    %2118 = vadd.xlane.f32.xlu0 %v2117
    %v2119 = vpop.xlane.xlu0 %2118
    %v2120 = vadd.f32 %v2040, %v2041
    %2121 = vadd.xlane.f32.xlu0 %v2120
    %v2122 = vpop.xlane.xlu0 %2121
    %v2123 = vadd.f32 %v2042, %v2043
    %2124 = vadd.xlane.f32.xlu0 %v2123
    %v2125 = vpop.xlane.xlu0 %2124
    %v2126 = vadd.f32 %v2044, %v2045
    %2127 = vadd.xlane.f32.xlu0 %v2126
    %v2128 = vpop.xlane.xlu0 %2127
    %v2129 = vadd.f32 %v2046, %v2047
    %2130 = vadd.xlane.f32.xlu0 %v2129
    %v2131 = vpop.xlane.xlu0 %2130
    %v2132 = vadd.f32 %v2048, %v2049
    %2133 = vadd.xlane.f32.xlu0 %v2132
    %v2134 = vpop.xlane.xlu0 %2133
    %v2135 = vadd.f32 %v2050, %v2051
    %2136 = vadd.xlane.f32.xlu0 %v2135
    %v2137 = vpop.xlane.xlu0 %2136
    %v2138 = vadd.f32 %v2052, %v2053
    %2139 = vadd.xlane.f32.xlu0 %v2138
    %v2140 = vpop.xlane.xlu0 %2139
    %v2141 = vadd.f32 %v2054, %v2055
    %2142 = vadd.xlane.f32.xlu0 %v2141
    %v2143 = vpop.xlane.xlu0 %2142
    %v2144 = vadd.f32 %v2056, %v2057
    %2145 = vadd.xlane.f32.xlu0 %v2144
    %v2146 = vpop.xlane.xlu0 %2145
    %v2147 = vadd.f32 %v2058, %v2059
    %2148 = vadd.xlane.f32.xlu0 %v2147
    %v2149 = vpop.xlane.xlu0 %2148
    %v2150 = vadd.f32 %v2060, %v2061
    %2151 = vadd.xlane.f32.xlu0 %v2150
    %v2152 = vpop.xlane.xlu0 %2151
    %v2153 = vadd.f32 %v2062, %v2063
    %2154 = vadd.xlane.f32.xlu0 %v2153
    %v2155 = vpop.xlane.xlu0 %2154
    %v2156 = vadd.f32 %v2064, %v2065
    %2157 = vadd.xlane.f32.xlu0 %v2156
    %v2158 = vpop.xlane.xlu0 %2157
    %v2159 = vadd.f32 %v2066, %v2067
    %2160 = vadd.xlane.f32.xlu0 %v2159
    %v2161 = vpop.xlane.xlu0 %2160
    %v2162 = vadd.f32 %v2068, %v2069
    %2163 = vadd.xlane.f32.xlu0 %v2162
    %v2164 = vpop.xlane.xlu0 %2163
    %v2165 = vadd.f32 %v2070, %v2071
    %2166 = vadd.xlane.f32.xlu0 %v2165
    %v2167 = vpop.xlane.xlu0 %2166
    %v2168 = vadd.f32 %v1976, %v2074
    %v2169 = vadd.f32 %v1977, %v2077
    %v2170 = vadd.f32 %v1978, %v2080
    %v2171 = vadd.f32 %v1979, %v2083
    %v2172 = vadd.f32 %v1980, %v2086
    %v2173 = vadd.f32 %v1981, %v2089
    %v2174 = vadd.f32 %v1982, %v2092
    %v2175 = vadd.f32 %v1983, %v2095
    %v2176 = vadd.f32 %v1984, %v2098
    %v2177 = vadd.f32 %v1985, %v2101
    %v2178 = vadd.f32 %v1986, %v2104
    %v2179 = vadd.f32 %v1987, %v2107
    %v2180 = vadd.f32 %v1988, %v2110
    %v2181 = vadd.f32 %v1989, %v2113
    %v2182 = vadd.f32 %v1990, %v2116
    %v2183 = vadd.f32 %v1991, %v2119
    %v2184 = vadd.f32 %v1992, %v2122
    %v2185 = vadd.f32 %v1993, %v2125
    %v2186 = vadd.f32 %v1994, %v2128
    %v2187 = vadd.f32 %v1995, %v2131
    %v2188 = vadd.f32 %v1996, %v2134
    %v2189 = vadd.f32 %v1997, %v2137
    %v2190 = vadd.f32 %v1998, %v2140
    %v2191 = vadd.f32 %v1999, %v2143
    %v2192 = vadd.f32 %v2000, %v2146
    %v2193 = vadd.f32 %v2001, %v2149
    %v2194 = vadd.f32 %v2002, %v2152
    %v2195 = vadd.f32 %v2003, %v2155
    %v2196 = vadd.f32 %v2004, %v2158
    %v2197 = vadd.f32 %v2005, %v2161
    %v2198 = vadd.f32 %v2006, %v2164
    %v2199 = vadd.f32 %v2007, %v2167
    %2200 = vst.msk [vmem:[#allocation5] sm:$0xff] %vm1943, %v2168
    %2201 = vst.msk [vmem:[#allocation5 + $0x8] sm:$0xff] %vm1943, %v2169
    %2202 = vst.msk [vmem:[#allocation5 + $0x10] sm:$0xff] %vm1943, %v2170
    %2203 = vst.msk [vmem:[#allocation5 + $0x18] sm:$0xff] %vm1943, %v2171
    %2204 = vst.msk [vmem:[#allocation5 + $0x20] sm:$0xff] %vm1943, %v2172
    %2205 = vst.msk [vmem:[#allocation5 + $0x28] sm:$0xff] %vm1943, %v2173
    %2206 = vst.msk [vmem:[#allocation5 + $0x30] sm:$0xff] %vm1943, %v2174
    %2207 = vst.msk [vmem:[#allocation5 + $0x38] sm:$0xff] %vm1943, %v2175
    %2208 = vst.msk [vmem:[#allocation5 + $0x40] sm:$0xff] %vm1943, %v2176
    %2209 = vst.msk [vmem:[#allocation5 + $0x48] sm:$0xff] %vm1943, %v2177
    %2210 = vst.msk [vmem:[#allocation5 + $0x50] sm:$0xff] %vm1943, %v2178
    %2211 = vst.msk [vmem:[#allocation5 + $0x58] sm:$0xff] %vm1943, %v2179
    %2212 = vst.msk [vmem:[#allocation5 + $0x60] sm:$0xff] %vm1943, %v2180
    %2213 = vst.msk [vmem:[#allocation5 + $0x68] sm:$0xff] %vm1943, %v2181
    %2214 = vst.msk [vmem:[#allocation5 + $0x70] sm:$0xff] %vm1943, %v2182
    %2215 = vst.msk [vmem:[#allocation5 + $0x78] sm:$0xff] %vm1943, %v2183
    %2216 = vst.msk [vmem:[#allocation5 + $0x80] sm:$0xff] %vm1943, %v2184
    %2217 = vst.msk [vmem:[#allocation5 + $0x88] sm:$0xff] %vm1943, %v2185
    %2218 = vst.msk [vmem:[#allocation5 + $0x90] sm:$0xff] %vm1943, %v2186
    %2219 = vst.msk [vmem:[#allocation5 + $0x98] sm:$0xff] %vm1943, %v2187
    %2220 = vst.msk [vmem:[#allocation5 + $0xa0] sm:$0xff] %vm1943, %v2188
    %2221 = vst.msk [vmem:[#allocation5 + $0xa8] sm:$0xff] %vm1943, %v2189
    %2222 = vst.msk [vmem:[#allocation5 + $0xb0] sm:$0xff] %vm1943, %v2190
    %2223 = vst.msk [vmem:[#allocation5 + $0xb8] sm:$0xff] %vm1943, %v2191
    %2224 = vst.msk [vmem:[#allocation5 + $0xc0] sm:$0xff] %vm1943, %v2192
    %2225 = vst.msk [vmem:[#allocation5 + $0xc8] sm:$0xff] %vm1943, %v2193
    %2226 = vst.msk [vmem:[#allocation5 + $0xd0] sm:$0xff] %vm1943, %v2194
    %2227 = vst.msk [vmem:[#allocation5 + $0xd8] sm:$0xff] %vm1943, %v2195
    %2228 = vst.msk [vmem:[#allocation5 + $0xe0] sm:$0xff] %vm1943, %v2196
    %2229 = vst.msk [vmem:[#allocation5 + $0xe8] sm:$0xff] %vm1943, %v2197
    %2230 = vst.msk [vmem:[#allocation5 + $0xf0] sm:$0xff] %vm1943, %v2198
    %2231 = vst.msk [vmem:[#allocation5 + $0xf8] sm:$0xff] %vm1943, %v2199
    %v2232 = vld [vmem:[#allocation6] sm:$0xff]
    %v2233 = vld [vmem:[#allocation6 + $0x8] sm:$0xff]
    %v2234 = vld [vmem:[#allocation6 + $0x10] sm:$0xff]
    %v2235 = vld [vmem:[#allocation6 + $0x18] sm:$0xff]
    %v2236 = vld [vmem:[#allocation6 + $0x20] sm:$0xff]
    %v2237 = vld [vmem:[#allocation6 + $0x28] sm:$0xff]
    %v2238 = vld [vmem:[#allocation6 + $0x30] sm:$0xff]
    %v2239 = vld [vmem:[#allocation6 + $0x38] sm:$0xff]
    %v2240 = vld [vmem:[#allocation6 + $0x40] sm:$0xff]
    %v2241 = vld [vmem:[#allocation6 + $0x48] sm:$0xff]
    %v2242 = vld [vmem:[#allocation6 + $0x50] sm:$0xff]
    %v2243 = vld [vmem:[#allocation6 + $0x58] sm:$0xff]
    %v2244 = vld [vmem:[#allocation6 + $0x60] sm:$0xff]
    %v2245 = vld [vmem:[#allocation6 + $0x68] sm:$0xff]
    %v2246 = vld [vmem:[#allocation6 + $0x70] sm:$0xff]
    %v2247 = vld [vmem:[#allocation6 + $0x78] sm:$0xff]
    %v2248 = vld [vmem:[#allocation6 + $0x80] sm:$0xff]
    %v2249 = vld [vmem:[#allocation6 + $0x88] sm:$0xff]
    %v2250 = vld [vmem:[#allocation6 + $0x90] sm:$0xff]
    %v2251 = vld [vmem:[#allocation6 + $0x98] sm:$0xff]
    %v2252 = vld [vmem:[#allocation6 + $0xa0] sm:$0xff]
    %v2253 = vld [vmem:[#allocation6 + $0xa8] sm:$0xff]
    %v2254 = vld [vmem:[#allocation6 + $0xb0] sm:$0xff]
    %v2255 = vld [vmem:[#allocation6 + $0xb8] sm:$0xff]
    %v2256 = vld [vmem:[#allocation6 + $0xc0] sm:$0xff]
    %v2257 = vld [vmem:[#allocation6 + $0xc8] sm:$0xff]
    %v2258 = vld [vmem:[#allocation6 + $0xd0] sm:$0xff]
    %v2259 = vld [vmem:[#allocation6 + $0xd8] sm:$0xff]
    %v2260 = vld [vmem:[#allocation6 + $0xe0] sm:$0xff]
    %v2261 = vld [vmem:[#allocation6 + $0xe8] sm:$0xff]
    %v2262 = vld [vmem:[#allocation6 + $0xf0] sm:$0xff]
    %v2263 = vld [vmem:[#allocation6 + $0xf8] sm:$0xff]
    %v2264 = vsel %vm1015, 1, 0
    %v2265 = vsel %vm1016, 1, 0
    %v2266 = vsel %vm1017, 1, 0
    %v2267 = vsel %vm1018, 1, 0
    %v2268 = vsel %vm1019, 1, 0
    %v2269 = vsel %vm1020, 1, 0
    %v2270 = vsel %vm1021, 1, 0
    %v2271 = vsel %vm1022, 1, 0
    %v2272 = vsel %vm1023, 1, 0
    %v2273 = vsel %vm1024, 1, 0
    %v2274 = vsel %vm1025, 1, 0
    %v2275 = vsel %vm1026, 1, 0
    %v2276 = vsel %vm1027, 1, 0
    %v2277 = vsel %vm1028, 1, 0
    %v2278 = vsel %vm1029, 1, 0
    %v2279 = vsel %vm1030, 1, 0
    %v2280 = vsel %vm1031, 1, 0
    %v2281 = vsel %vm1032, 1, 0
    %v2282 = vsel %vm1033, 1, 0
    %v2283 = vsel %vm1034, 1, 0
    %v2284 = vsel %vm1035, 1, 0
    %v2285 = vsel %vm1036, 1, 0
    %v2286 = vsel %vm1037, 1, 0
    %v2287 = vsel %vm1038, 1, 0
    %v2288 = vsel %vm1039, 1, 0
    %v2289 = vsel %vm1040, 1, 0
    %v2290 = vsel %vm1041, 1, 0
    %v2291 = vsel %vm1042, 1, 0
    %v2292 = vsel %vm1043, 1, 0
    %v2293 = vsel %vm1044, 1, 0
    %v2294 = vsel %vm1045, 1, 0
    %v2295 = vsel %vm1046, 1, 0
    %v2296 = vsel %vm1047, 1, 0
    %v2297 = vsel %vm1048, 1, 0
    %v2298 = vsel %vm1049, 1, 0
    %v2299 = vsel %vm1050, 1, 0
    %v2300 = vsel %vm1051, 1, 0
    %v2301 = vsel %vm1052, 1, 0
    %v2302 = vsel %vm1053, 1, 0
    %v2303 = vsel %vm1054, 1, 0
    %v2304 = vsel %vm1055, 1, 0
    %v2305 = vsel %vm1056, 1, 0
    %v2306 = vsel %vm1057, 1, 0
    %v2307 = vsel %vm1058, 1, 0
    %v2308 = vsel %vm1059, 1, 0
    %v2309 = vsel %vm1060, 1, 0
    %v2310 = vsel %vm1061, 1, 0
    %v2311 = vsel %vm1062, 1, 0
    %v2312 = vsel %vm1063, 1, 0
    %v2313 = vsel %vm1064, 1, 0
    %v2314 = vsel %vm1065, 1, 0
    %v2315 = vsel %vm1066, 1, 0
    %v2316 = vsel %vm1067, 1, 0
    %v2317 = vsel %vm1068, 1, 0
    %v2318 = vsel %vm1069, 1, 0
    %v2319 = vsel %vm1070, 1, 0
    %v2320 = vsel %vm1071, 1, 0
    %v2321 = vsel %vm1072, 1, 0
    %v2322 = vsel %vm1073, 1, 0
    %v2323 = vsel %vm1074, 1, 0
    %v2324 = vsel %vm1075, 1, 0
    %v2325 = vsel %vm1076, 1, 0
    %v2326 = vsel %vm1077, 1, 0
    %v2327 = vsel %vm1078, 1, 0
    %v2328 = vcvt.s32.f32 %v2264
    %v2329 = vcvt.s32.f32 %v2265
    %v2330 = vcvt.s32.f32 %v2266
    %v2331 = vcvt.s32.f32 %v2267
    %v2332 = vcvt.s32.f32 %v2268
    %v2333 = vcvt.s32.f32 %v2269
    %v2334 = vcvt.s32.f32 %v2270
    %v2335 = vcvt.s32.f32 %v2271
    %v2336 = vcvt.s32.f32 %v2272
    %v2337 = vcvt.s32.f32 %v2273
    %v2338 = vcvt.s32.f32 %v2274
    %v2339 = vcvt.s32.f32 %v2275
    %v2340 = vcvt.s32.f32 %v2276
    %v2341 = vcvt.s32.f32 %v2277
    %v2342 = vcvt.s32.f32 %v2278
    %v2343 = vcvt.s32.f32 %v2279
    %v2344 = vcvt.s32.f32 %v2280
    %v2345 = vcvt.s32.f32 %v2281
    %v2346 = vcvt.s32.f32 %v2282
    %v2347 = vcvt.s32.f32 %v2283
    %v2348 = vcvt.s32.f32 %v2284
    %v2349 = vcvt.s32.f32 %v2285
    %v2350 = vcvt.s32.f32 %v2286
    %v2351 = vcvt.s32.f32 %v2287
    %v2352 = vcvt.s32.f32 %v2288
    %v2353 = vcvt.s32.f32 %v2289
    %v2354 = vcvt.s32.f32 %v2290
    %v2355 = vcvt.s32.f32 %v2291
    %v2356 = vcvt.s32.f32 %v2292
    %v2357 = vcvt.s32.f32 %v2293
    %v2358 = vcvt.s32.f32 %v2294
    %v2359 = vcvt.s32.f32 %v2295
    %v2360 = vcvt.s32.f32 %v2296
    %v2361 = vcvt.s32.f32 %v2297
    %v2362 = vcvt.s32.f32 %v2298
    %v2363 = vcvt.s32.f32 %v2299
    %v2364 = vcvt.s32.f32 %v2300
    %v2365 = vcvt.s32.f32 %v2301
    %v2366 = vcvt.s32.f32 %v2302
    %v2367 = vcvt.s32.f32 %v2303
    %v2368 = vcvt.s32.f32 %v2304
    %v2369 = vcvt.s32.f32 %v2305
    %v2370 = vcvt.s32.f32 %v2306
    %v2371 = vcvt.s32.f32 %v2307
    %v2372 = vcvt.s32.f32 %v2308
    %v2373 = vcvt.s32.f32 %v2309
    %v2374 = vcvt.s32.f32 %v2310
    %v2375 = vcvt.s32.f32 %v2311
    %v2376 = vcvt.s32.f32 %v2312
    %v2377 = vcvt.s32.f32 %v2313
    %v2378 = vcvt.s32.f32 %v2314
    %v2379 = vcvt.s32.f32 %v2315
    %v2380 = vcvt.s32.f32 %v2316
    %v2381 = vcvt.s32.f32 %v2317
    %v2382 = vcvt.s32.f32 %v2318
    %v2383 = vcvt.s32.f32 %v2319
    %v2384 = vcvt.s32.f32 %v2320
    %v2385 = vcvt.s32.f32 %v2321
    %v2386 = vcvt.s32.f32 %v2322
    %v2387 = vcvt.s32.f32 %v2323
    %v2388 = vcvt.s32.f32 %v2324
    %v2389 = vcvt.s32.f32 %v2325
    %v2390 = vcvt.s32.f32 %v2326
    %v2391 = vcvt.s32.f32 %v2327
    %v2392 = vadd.f32 %v2328, %v2329
    %2393 = vadd.xlane.f32.xlu0 %v2392
    %v2394 = vpop.xlane.xlu0 %2393
    %v2395 = vadd.f32 %v2330, %v2331
    %2396 = vadd.xlane.f32.xlu0 %v2395
    %v2397 = vpop.xlane.xlu0 %2396
    %v2398 = vadd.f32 %v2332, %v2333
    %2399 = vadd.xlane.f32.xlu0 %v2398
    %v2400 = vpop.xlane.xlu0 %2399
    %v2401 = vadd.f32 %v2334, %v2335
    %2402 = vadd.xlane.f32.xlu0 %v2401
    %v2403 = vpop.xlane.xlu0 %2402
    %v2404 = vadd.f32 %v2336, %v2337
    %2405 = vadd.xlane.f32.xlu0 %v2404
    %v2406 = vpop.xlane.xlu0 %2405
    %v2407 = vadd.f32 %v2338, %v2339
    %2408 = vadd.xlane.f32.xlu0 %v2407
    %v2409 = vpop.xlane.xlu0 %2408
    %v2410 = vadd.f32 %v2340, %v2341
    %2411 = vadd.xlane.f32.xlu0 %v2410
    %v2412 = vpop.xlane.xlu0 %2411
    %v2413 = vadd.f32 %v2342, %v2343
    %2414 = vadd.xlane.f32.xlu0 %v2413
    %v2415 = vpop.xlane.xlu0 %2414
    %v2416 = vadd.f32 %v2344, %v2345
    %2417 = vadd.xlane.f32.xlu0 %v2416
    %v2418 = vpop.xlane.xlu0 %2417
    %v2419 = vadd.f32 %v2346, %v2347
    %2420 = vadd.xlane.f32.xlu0 %v2419
    %v2421 = vpop.xlane.xlu0 %2420
    %v2422 = vadd.f32 %v2348, %v2349
    %2423 = vadd.xlane.f32.xlu0 %v2422
    %v2424 = vpop.xlane.xlu0 %2423
    %v2425 = vadd.f32 %v2350, %v2351
    %2426 = vadd.xlane.f32.xlu0 %v2425
    %v2427 = vpop.xlane.xlu0 %2426
    %v2428 = vadd.f32 %v2352, %v2353
    %2429 = vadd.xlane.f32.xlu0 %v2428
    %v2430 = vpop.xlane.xlu0 %2429
    %v2431 = vadd.f32 %v2354, %v2355
    %2432 = vadd.xlane.f32.xlu0 %v2431
    %v2433 = vpop.xlane.xlu0 %2432
    %v2434 = vadd.f32 %v2356, %v2357
    %2435 = vadd.xlane.f32.xlu0 %v2434
    %v2436 = vpop.xlane.xlu0 %2435
    %v2437 = vadd.f32 %v2358, %v2359
    %2438 = vadd.xlane.f32.xlu0 %v2437
    %v2439 = vpop.xlane.xlu0 %2438
    %v2440 = vadd.f32 %v2360, %v2361
    %2441 = vadd.xlane.f32.xlu0 %v2440
    %v2442 = vpop.xlane.xlu0 %2441
    %v2443 = vadd.f32 %v2362, %v2363
    %2444 = vadd.xlane.f32.xlu0 %v2443
    %v2445 = vpop.xlane.xlu0 %2444
    %v2446 = vadd.f32 %v2364, %v2365
    %2447 = vadd.xlane.f32.xlu0 %v2446
    %v2448 = vpop.xlane.xlu0 %2447
    %v2449 = vadd.f32 %v2366, %v2367
    %2450 = vadd.xlane.f32.xlu0 %v2449
    %v2451 = vpop.xlane.xlu0 %2450
    %v2452 = vadd.f32 %v2368, %v2369
    %2453 = vadd.xlane.f32.xlu0 %v2452
    %v2454 = vpop.xlane.xlu0 %2453
    %v2455 = vadd.f32 %v2370, %v2371
    %2456 = vadd.xlane.f32.xlu0 %v2455
    %v2457 = vpop.xlane.xlu0 %2456
    %v2458 = vadd.f32 %v2372, %v2373
    %2459 = vadd.xlane.f32.xlu0 %v2458
    %v2460 = vpop.xlane.xlu0 %2459
    %v2461 = vadd.f32 %v2374, %v2375
    %2462 = vadd.xlane.f32.xlu0 %v2461
    %v2463 = vpop.xlane.xlu0 %2462
    %v2464 = vadd.f32 %v2376, %v2377
    %2465 = vadd.xlane.f32.xlu0 %v2464
    %v2466 = vpop.xlane.xlu0 %2465
    %v2467 = vadd.f32 %v2378, %v2379
    %2468 = vadd.xlane.f32.xlu0 %v2467
    %v2469 = vpop.xlane.xlu0 %2468
    %v2470 = vadd.f32 %v2380, %v2381
    %2471 = vadd.xlane.f32.xlu0 %v2470
    %v2472 = vpop.xlane.xlu0 %2471
    %v2473 = vadd.f32 %v2382, %v2383
    %2474 = vadd.xlane.f32.xlu0 %v2473
    %v2475 = vpop.xlane.xlu0 %2474
    %v2476 = vadd.f32 %v2384, %v2385
    %2477 = vadd.xlane.f32.xlu0 %v2476
    %v2478 = vpop.xlane.xlu0 %2477
    %v2479 = vadd.f32 %v2386, %v2387
    %2480 = vadd.xlane.f32.xlu0 %v2479
    %v2481 = vpop.xlane.xlu0 %2480
    %v2482 = vadd.f32 %v2388, %v2389
    %2483 = vadd.xlane.f32.xlu0 %v2482
    %v2484 = vpop.xlane.xlu0 %2483
    %v2485 = vadd.f32 %v2390, %v2391
    %2486 = vadd.xlane.f32.xlu0 %v2485
    %v2487 = vpop.xlane.xlu0 %2486
    %v2488 = vadd.f32 %v2232, %v2394
    %v2489 = vadd.f32 %v2233, %v2397
    %v2490 = vadd.f32 %v2234, %v2400
    %v2491 = vadd.f32 %v2235, %v2403
    %v2492 = vadd.f32 %v2236, %v2406
    %v2493 = vadd.f32 %v2237, %v2409
    %v2494 = vadd.f32 %v2238, %v2412
    %v2495 = vadd.f32 %v2239, %v2415
    %v2496 = vadd.f32 %v2240, %v2418
    %v2497 = vadd.f32 %v2241, %v2421
    %v2498 = vadd.f32 %v2242, %v2424
    %v2499 = vadd.f32 %v2243, %v2427
    %v2500 = vadd.f32 %v2244, %v2430
    %v2501 = vadd.f32 %v2245, %v2433
    %v2502 = vadd.f32 %v2246, %v2436
    %v2503 = vadd.f32 %v2247, %v2439
    %v2504 = vadd.f32 %v2248, %v2442
    %v2505 = vadd.f32 %v2249, %v2445
    %v2506 = vadd.f32 %v2250, %v2448
    %v2507 = vadd.f32 %v2251, %v2451
    %v2508 = vadd.f32 %v2252, %v2454
    %v2509 = vadd.f32 %v2253, %v2457
    %v2510 = vadd.f32 %v2254, %v2460
    %v2511 = vadd.f32 %v2255, %v2463
    %v2512 = vadd.f32 %v2256, %v2466
    %v2513 = vadd.f32 %v2257, %v2469
    %v2514 = vadd.f32 %v2258, %v2472
    %v2515 = vadd.f32 %v2259, %v2475
    %v2516 = vadd.f32 %v2260, %v2478
    %v2517 = vadd.f32 %v2261, %v2481
    %v2518 = vadd.f32 %v2262, %v2484
    %v2519 = vadd.f32 %v2263, %v2487
    %2520 = vst.msk [vmem:[#allocation6] sm:$0xff] %vm1943, %v2488
    %2521 = vst.msk [vmem:[#allocation6 + $0x8] sm:$0xff] %vm1943, %v2489
    %2522 = vst.msk [vmem:[#allocation6 + $0x10] sm:$0xff] %vm1943, %v2490
    %2523 = vst.msk [vmem:[#allocation6 + $0x18] sm:$0xff] %vm1943, %v2491
    %2524 = vst.msk [vmem:[#allocation6 + $0x20] sm:$0xff] %vm1943, %v2492
    %2525 = vst.msk [vmem:[#allocation6 + $0x28] sm:$0xff] %vm1943, %v2493
    %2526 = vst.msk [vmem:[#allocation6 + $0x30] sm:$0xff] %vm1943, %v2494
    %2527 = vst.msk [vmem:[#allocation6 + $0x38] sm:$0xff] %vm1943, %v2495
    %2528 = vst.msk [vmem:[#allocation6 + $0x40] sm:$0xff] %vm1943, %v2496
    %2529 = vst.msk [vmem:[#allocation6 + $0x48] sm:$0xff] %vm1943, %v2497
    %2530 = vst.msk [vmem:[#allocation6 + $0x50] sm:$0xff] %vm1943, %v2498
    %2531 = vst.msk [vmem:[#allocation6 + $0x58] sm:$0xff] %vm1943, %v2499
    %2532 = vst.msk [vmem:[#allocation6 + $0x60] sm:$0xff] %vm1943, %v2500
    %2533 = vst.msk [vmem:[#allocation6 + $0x68] sm:$0xff] %vm1943, %v2501
    %2534 = vst.msk [vmem:[#allocation6 + $0x70] sm:$0xff] %vm1943, %v2502
    %2535 = vst.msk [vmem:[#allocation6 + $0x78] sm:$0xff] %vm1943, %v2503
    %2536 = vst.msk [vmem:[#allocation6 + $0x80] sm:$0xff] %vm1943, %v2504
    %2537 = vst.msk [vmem:[#allocation6 + $0x88] sm:$0xff] %vm1943, %v2505
    %2538 = vst.msk [vmem:[#allocation6 + $0x90] sm:$0xff] %vm1943, %v2506
    %2539 = vst.msk [vmem:[#allocation6 + $0x98] sm:$0xff] %vm1943, %v2507
    %2540 = vst.msk [vmem:[#allocation6 + $0xa0] sm:$0xff] %vm1943, %v2508
    %2541 = vst.msk [vmem:[#allocation6 + $0xa8] sm:$0xff] %vm1943, %v2509
    %2542 = vst.msk [vmem:[#allocation6 + $0xb0] sm:$0xff] %vm1943, %v2510
    %2543 = vst.msk [vmem:[#allocation6 + $0xb8] sm:$0xff] %vm1943, %v2511
    %2544 = vst.msk [vmem:[#allocation6 + $0xc0] sm:$0xff] %vm1943, %v2512
    %2545 = vst.msk [vmem:[#allocation6 + $0xc8] sm:$0xff] %vm1943, %v2513
    %2546 = vst.msk [vmem:[#allocation6 + $0xd0] sm:$0xff] %vm1943, %v2514
    %2547 = vst.msk [vmem:[#allocation6 + $0xd8] sm:$0xff] %vm1943, %v2515
    %2548 = vst.msk [vmem:[#allocation6 + $0xe0] sm:$0xff] %vm1943, %v2516
    %2549 = vst.msk [vmem:[#allocation6 + $0xe8] sm:$0xff] %vm1943, %v2517
    %2550 = vst.msk [vmem:[#allocation6 + $0xf0] sm:$0xff] %vm1943, %v2518
    %2551 = vst.msk [vmem:[#allocation6 + $0xf8] sm:$0xff] %vm1943, %v2519
    %2552 = vst.msk [vmem:[#allocation3] sm:$0xff] %vm1943, %v1207
    %2553 = vst.msk [vmem:[#allocation3 + $0x8] sm:$0xff] %vm1943, %v1208
    %2554 = vst.msk [vmem:[#allocation3 + $0x10] sm:$0xff] %vm1943, %v1209
    %2555 = vst.msk [vmem:[#allocation3 + $0x18] sm:$0xff] %vm1943, %v1210
    %2556 = vst.msk [vmem:[#allocation3 + $0x20] sm:$0xff] %vm1943, %v1211
    %2557 = vst.msk [vmem:[#allocation3 + $0x28] sm:$0xff] %vm1943, %v1212
    %2558 = vst.msk [vmem:[#allocation3 + $0x30] sm:$0xff] %vm1943, %v1213
    %2559 = vst.msk [vmem:[#allocation3 + $0x38] sm:$0xff] %vm1943, %v1214
    %2560 = vst.msk [vmem:[#allocation3 + $0x40] sm:$0xff] %vm1943, %v1215
    %2561 = vst.msk [vmem:[#allocation3 + $0x48] sm:$0xff] %vm1943, %v1216
    %2562 = vst.msk [vmem:[#allocation3 + $0x50] sm:$0xff] %vm1943, %v1217
    %2563 = vst.msk [vmem:[#allocation3 + $0x58] sm:$0xff] %vm1943, %v1218
    %2564 = vst.msk [vmem:[#allocation3 + $0x60] sm:$0xff] %vm1943, %v1219
    %2565 = vst.msk [vmem:[#allocation3 + $0x68] sm:$0xff] %vm1943, %v1220
    %2566 = vst.msk [vmem:[#allocation3 + $0x70] sm:$0xff] %vm1943, %v1221
    %2567 = vst.msk [vmem:[#allocation3 + $0x78] sm:$0xff] %vm1943, %v1222
    %2568 = vst.msk [vmem:[#allocation3 + $0x80] sm:$0xff] %vm1943, %v1223
    %2569 = vst.msk [vmem:[#allocation3 + $0x88] sm:$0xff] %vm1943, %v1224
    %2570 = vst.msk [vmem:[#allocation3 + $0x90] sm:$0xff] %vm1943, %v1225
    %2571 = vst.msk [vmem:[#allocation3 + $0x98] sm:$0xff] %vm1943, %v1226
    %2572 = vst.msk [vmem:[#allocation3 + $0xa0] sm:$0xff] %vm1943, %v1227
    %2573 = vst.msk [vmem:[#allocation3 + $0xa8] sm:$0xff] %vm1943, %v1228
    %2574 = vst.msk [vmem:[#allocation3 + $0xb0] sm:$0xff] %vm1943, %v1229
    %2575 = vst.msk [vmem:[#allocation3 + $0xb8] sm:$0xff] %vm1943, %v1230
    %2576 = vst.msk [vmem:[#allocation3 + $0xc0] sm:$0xff] %vm1943, %v1231
    %2577 = vst.msk [vmem:[#allocation3 + $0xc8] sm:$0xff] %vm1943, %v1232
    %2578 = vst.msk [vmem:[#allocation3 + $0xd0] sm:$0xff] %vm1943, %v1233
    %2579 = vst.msk [vmem:[#allocation3 + $0xd8] sm:$0xff] %vm1943, %v1234
    %2580 = vst.msk [vmem:[#allocation3 + $0xe0] sm:$0xff] %vm1943, %v1235
    %2581 = vst.msk [vmem:[#allocation3 + $0xe8] sm:$0xff] %vm1943, %v1236
    %2582 = vst.msk [vmem:[#allocation3 + $0xf0] sm:$0xff] %vm1943, %v1237
    %2583 = vst.msk [vmem:[#allocation3 + $0xf8] sm:$0xff] %vm1943, %v1238
  $region25: #{contrastive_loss.1} parent=0 // pred_fallthru
    _
  // Predicated region
  $region26: #{contrastive_loss.1} parent=0 // pred_check
    %p2584 = pneg %p23
  $region27: #{contrastive_loss.1} parent=0 // pred_check_branch
    %2586 = sbr.rel (%p2584) target = $region29
  $region28: #{contrastive_loss.1} parent=0 // pred_region
    // Predicated region
    $region30: #{contrastive_loss.1} parent=28 // pred_check
      %p2587 = pneg %p21
    $region31: #{contrastive_loss.1} parent=28 // pred_check_branch
      %2589 = sbr.rel (%p2587) target = $region33
    $region32: #{contrastive_loss.1} parent=28 // pred_region
      %v2590 = vlaneseq
      %v2591 = vshrl.u32 %v2590, 7
      %v2592 = vadd.s32 %v2591, 8
      %v2593 = vadd.s32 %v2591, 16
      %v2594 = vadd.s32 %v2591, 24
      %v2595 = vadd.s32 %v2591, 32
      %v2596 = vadd.s32 %v2591, 40
      %v2597 = vadd.s32 %v2591, 48
      %v2598 = vadd.s32 %v2591, 56
      %v2599 = vadd.s32 %v2591, 64
      %v2600 = vadd.s32 %v2591, 72
      %v2601 = vadd.s32 %v2591, 80
      %v2602 = vadd.s32 %v2591, 88
      %v2603 = vadd.s32 %v2591, 96
      %v2604 = vadd.s32 %v2591, 104
      %v2605 = vadd.s32 %v2591, 112
      %v2606 = vadd.s32 %v2591, 120
      %v2607 = vadd.s32 %v2591, 128
      %v2608 = vadd.s32 %v2591, 136
      %v2609 = vadd.s32 %v2591, 144
      %v2610 = vadd.s32 %v2591, 152
      %v2611 = vadd.s32 %v2591, 160
      %v2612 = vadd.s32 %v2591, 168
      %v2613 = vadd.s32 %v2591, 176
      %v2614 = vadd.s32 %v2591, 184
      %v2615 = vadd.s32 %v2591, 192
      %v2616 = vadd.s32 %v2591, 200
      %v2617 = vadd.s32 %v2591, 208
      %v2618 = vadd.s32 %v2591, 216
      %v2619 = vadd.s32 %v2591, 224
      %v2620 = vadd.s32 %v2591, 232
      %v2621 = vadd.s32 %v2591, 240
      %v2622 = vadd.s32 %v2591, 248
      %v2623 = vstv %s19
      %v2624 = vadd.s32 %v2623, %v2591
      %v2625 = vadd.s32 %v2623, %v2592
      %v2626 = vadd.s32 %v2623, %v2593
      %v2627 = vadd.s32 %v2623, %v2594
      %v2628 = vadd.s32 %v2623, %v2595
      %v2629 = vadd.s32 %v2623, %v2596
      %v2630 = vadd.s32 %v2623, %v2597
      %v2631 = vadd.s32 %v2623, %v2598
      %v2632 = vadd.s32 %v2623, %v2599
      %v2633 = vadd.s32 %v2623, %v2600
      %v2634 = vadd.s32 %v2623, %v2601
      %v2635 = vadd.s32 %v2623, %v2602
      %v2636 = vadd.s32 %v2623, %v2603
      %v2637 = vadd.s32 %v2623, %v2604
      %v2638 = vadd.s32 %v2623, %v2605
      %v2639 = vadd.s32 %v2623, %v2606
      %v2640 = vadd.s32 %v2623, %v2607
      %v2641 = vadd.s32 %v2623, %v2608
      %v2642 = vadd.s32 %v2623, %v2609
      %v2643 = vadd.s32 %v2623, %v2610
      %v2644 = vadd.s32 %v2623, %v2611
      %v2645 = vadd.s32 %v2623, %v2612
      %v2646 = vadd.s32 %v2623, %v2613
      %v2647 = vadd.s32 %v2623, %v2614
      %v2648 = vadd.s32 %v2623, %v2615
      %v2649 = vadd.s32 %v2623, %v2616
      %v2650 = vadd.s32 %v2623, %v2617
      %v2651 = vadd.s32 %v2623, %v2618
      %v2652 = vadd.s32 %v2623, %v2619
      %v2653 = vadd.s32 %v2623, %v2620
      %v2654 = vadd.s32 %v2623, %v2621
      %v2655 = vadd.s32 %v2623, %v2622
      %v2656 = vld [vmem:[#allocation5] sm:$0xff]
      %v2657 = vld [vmem:[#allocation5 + $0x8] sm:$0xff]
      %v2658 = vld [vmem:[#allocation5 + $0x10] sm:$0xff]
      %v2659 = vld [vmem:[#allocation5 + $0x18] sm:$0xff]
      %v2660 = vld [vmem:[#allocation5 + $0x20] sm:$0xff]
      %v2661 = vld [vmem:[#allocation5 + $0x28] sm:$0xff]
      %v2662 = vld [vmem:[#allocation5 + $0x30] sm:$0xff]
      %v2663 = vld [vmem:[#allocation5 + $0x38] sm:$0xff]
      %v2664 = vld [vmem:[#allocation5 + $0x40] sm:$0xff]
      %v2665 = vld [vmem:[#allocation5 + $0x48] sm:$0xff]
      %v2666 = vld [vmem:[#allocation5 + $0x50] sm:$0xff]
      %v2667 = vld [vmem:[#allocation5 + $0x58] sm:$0xff]
      %v2668 = vld [vmem:[#allocation5 + $0x60] sm:$0xff]
      %v2669 = vld [vmem:[#allocation5 + $0x68] sm:$0xff]
      %v2670 = vld [vmem:[#allocation5 + $0x70] sm:$0xff]
      %v2671 = vld [vmem:[#allocation5 + $0x78] sm:$0xff]
      %v2672 = vld [vmem:[#allocation5 + $0x80] sm:$0xff]
      %v2673 = vld [vmem:[#allocation5 + $0x88] sm:$0xff]
      %v2674 = vld [vmem:[#allocation5 + $0x90] sm:$0xff]
      %v2675 = vld [vmem:[#allocation5 + $0x98] sm:$0xff]
      %v2676 = vld [vmem:[#allocation5 + $0xa0] sm:$0xff]
      %v2677 = vld [vmem:[#allocation5 + $0xa8] sm:$0xff]
      %v2678 = vld [vmem:[#allocation5 + $0xb0] sm:$0xff]
      %v2679 = vld [vmem:[#allocation5 + $0xb8] sm:$0xff]
      %v2680 = vld [vmem:[#allocation5 + $0xc0] sm:$0xff]
      %v2681 = vld [vmem:[#allocation5 + $0xc8] sm:$0xff]
      %v2682 = vld [vmem:[#allocation5 + $0xd0] sm:$0xff]
      %v2683 = vld [vmem:[#allocation5 + $0xd8] sm:$0xff]
      %v2684 = vld [vmem:[#allocation5 + $0xe0] sm:$0xff]
      %v2685 = vld [vmem:[#allocation5 + $0xe8] sm:$0xff]
      %v2686 = vld [vmem:[#allocation5 + $0xf0] sm:$0xff]
      %v2687 = vld [vmem:[#allocation5 + $0xf8] sm:$0xff]
      %v2688 = vld [vmem:[#allocation6] sm:$0xff]
      %v2689 = vld [vmem:[#allocation6 + $0x8] sm:$0xff]
      %v2690 = vld [vmem:[#allocation6 + $0x10] sm:$0xff]
      %v2691 = vld [vmem:[#allocation6 + $0x18] sm:$0xff]
      %v2692 = vld [vmem:[#allocation6 + $0x20] sm:$0xff]
      %v2693 = vld [vmem:[#allocation6 + $0x28] sm:$0xff]
      %v2694 = vld [vmem:[#allocation6 + $0x30] sm:$0xff]
      %v2695 = vld [vmem:[#allocation6 + $0x38] sm:$0xff]
      %v2696 = vld [vmem:[#allocation6 + $0x40] sm:$0xff]
      %v2697 = vld [vmem:[#allocation6 + $0x48] sm:$0xff]
      %v2698 = vld [vmem:[#allocation6 + $0x50] sm:$0xff]
      %v2699 = vld [vmem:[#allocation6 + $0x58] sm:$0xff]
      %v2700 = vld [vmem:[#allocation6 + $0x60] sm:$0xff]
      %v2701 = vld [vmem:[#allocation6 + $0x68] sm:$0xff]
      %v2702 = vld [vmem:[#allocation6 + $0x70] sm:$0xff]
      %v2703 = vld [vmem:[#allocation6 + $0x78] sm:$0xff]
      %v2704 = vld [vmem:[#allocation6 + $0x80] sm:$0xff]
      %v2705 = vld [vmem:[#allocation6 + $0x88] sm:$0xff]
      %v2706 = vld [vmem:[#allocation6 + $0x90] sm:$0xff]
      %v2707 = vld [vmem:[#allocation6 + $0x98] sm:$0xff]
      %v2708 = vld [vmem:[#allocation6 + $0xa0] sm:$0xff]
      %v2709 = vld [vmem:[#allocation6 + $0xa8] sm:$0xff]
      %v2710 = vld [vmem:[#allocation6 + $0xb0] sm:$0xff]
      %v2711 = vld [vmem:[#allocation6 + $0xb8] sm:$0xff]
      %v2712 = vld [vmem:[#allocation6 + $0xc0] sm:$0xff]
      %v2713 = vld [vmem:[#allocation6 + $0xc8] sm:$0xff]
      %v2714 = vld [vmem:[#allocation6 + $0xd0] sm:$0xff]
      %v2715 = vld [vmem:[#allocation6 + $0xd8] sm:$0xff]
      %v2716 = vld [vmem:[#allocation6 + $0xe0] sm:$0xff]
      %v2717 = vld [vmem:[#allocation6 + $0xe8] sm:$0xff]
      %v2718 = vld [vmem:[#allocation6 + $0xf0] sm:$0xff]
      %v2719 = vld [vmem:[#allocation6 + $0xf8] sm:$0xff]
      %v2720 = vrcp.pop %v2688
      %v2721 = vmul.f32 %v2656, %v2720
      %v2722 = vrcp.pop %v2689
      %v2723 = vmul.f32 %v2657, %v2722
      %v2724 = vrcp.pop %v2690
      %v2725 = vmul.f32 %v2658, %v2724
      %v2726 = vrcp.pop %v2691
      %v2727 = vmul.f32 %v2659, %v2726
      %v2728 = vrcp.pop %v2692
      %v2729 = vmul.f32 %v2660, %v2728
      %v2730 = vrcp.pop %v2693
      %v2731 = vmul.f32 %v2661, %v2730
      %v2732 = vrcp.pop %v2694
      %v2733 = vmul.f32 %v2662, %v2732
      %v2734 = vrcp.pop %v2695
      %v2735 = vmul.f32 %v2663, %v2734
      %v2736 = vrcp.pop %v2696
      %v2737 = vmul.f32 %v2664, %v2736
      %v2738 = vrcp.pop %v2697
      %v2739 = vmul.f32 %v2665, %v2738
      %v2740 = vrcp.pop %v2698
      %v2741 = vmul.f32 %v2666, %v2740
      %v2742 = vrcp.pop %v2699
      %v2743 = vmul.f32 %v2667, %v2742
      %v2744 = vrcp.pop %v2700
      %v2745 = vmul.f32 %v2668, %v2744
      %v2746 = vrcp.pop %v2701
      %v2747 = vmul.f32 %v2669, %v2746
      %v2748 = vrcp.pop %v2702
      %v2749 = vmul.f32 %v2670, %v2748
      %v2750 = vrcp.pop %v2703
      %v2751 = vmul.f32 %v2671, %v2750
      %v2752 = vrcp.pop %v2704
      %v2753 = vmul.f32 %v2672, %v2752
      %v2754 = vrcp.pop %v2705
      %v2755 = vmul.f32 %v2673, %v2754
      %v2756 = vrcp.pop %v2706
      %v2757 = vmul.f32 %v2674, %v2756
      %v2758 = vrcp.pop %v2707
      %v2759 = vmul.f32 %v2675, %v2758
      %v2760 = vrcp.pop %v2708
      %v2761 = vmul.f32 %v2676, %v2760
      %v2762 = vrcp.pop %v2709
      %v2763 = vmul.f32 %v2677, %v2762
      %v2764 = vrcp.pop %v2710
      %v2765 = vmul.f32 %v2678, %v2764
      %v2766 = vrcp.pop %v2711
      %v2767 = vmul.f32 %v2679, %v2766
      %v2768 = vrcp.pop %v2712
      %v2769 = vmul.f32 %v2680, %v2768
      %v2770 = vrcp.pop %v2713
      %v2771 = vmul.f32 %v2681, %v2770
      %v2772 = vrcp.pop %v2714
      %v2773 = vmul.f32 %v2682, %v2772
      %v2774 = vrcp.pop %v2715
      %v2775 = vmul.f32 %v2683, %v2774
      %v2776 = vrcp.pop %v2716
      %v2777 = vmul.f32 %v2684, %v2776
      %v2778 = vrcp.pop %v2717
      %v2779 = vmul.f32 %v2685, %v2778
      %v2780 = vrcp.pop %v2718
      %v2781 = vmul.f32 %v2686, %v2780
      %v2782 = vrcp.pop %v2719
      %v2783 = vmul.f32 %v2687, %v2782
      %v2784 = vld [vmem:[#allocation3] sm:$0xff]
      %v2785 = vld [vmem:[#allocation3 + $0x8] sm:$0xff]
      %v2786 = vld [vmem:[#allocation3 + $0x10] sm:$0xff]
      %v2787 = vld [vmem:[#allocation3 + $0x18] sm:$0xff]
      %v2788 = vld [vmem:[#allocation3 + $0x20] sm:$0xff]
      %v2789 = vld [vmem:[#allocation3 + $0x28] sm:$0xff]
      %v2790 = vld [vmem:[#allocation3 + $0x30] sm:$0xff]
      %v2791 = vld [vmem:[#allocation3 + $0x38] sm:$0xff]
      %v2792 = vld [vmem:[#allocation3 + $0x40] sm:$0xff]
      %v2793 = vld [vmem:[#allocation3 + $0x48] sm:$0xff]
      %v2794 = vld [vmem:[#allocation3 + $0x50] sm:$0xff]
      %v2795 = vld [vmem:[#allocation3 + $0x58] sm:$0xff]
      %v2796 = vld [vmem:[#allocation3 + $0x60] sm:$0xff]
      %v2797 = vld [vmem:[#allocation3 + $0x68] sm:$0xff]
      %v2798 = vld [vmem:[#allocation3 + $0x70] sm:$0xff]
      %v2799 = vld [vmem:[#allocation3 + $0x78] sm:$0xff]
      %v2800 = vld [vmem:[#allocation3 + $0x80] sm:$0xff]
      %v2801 = vld [vmem:[#allocation3 + $0x88] sm:$0xff]
      %v2802 = vld [vmem:[#allocation3 + $0x90] sm:$0xff]
      %v2803 = vld [vmem:[#allocation3 + $0x98] sm:$0xff]
      %v2804 = vld [vmem:[#allocation3 + $0xa0] sm:$0xff]
      %v2805 = vld [vmem:[#allocation3 + $0xa8] sm:$0xff]
      %v2806 = vld [vmem:[#allocation3 + $0xb0] sm:$0xff]
      %v2807 = vld [vmem:[#allocation3 + $0xb8] sm:$0xff]
      %v2808 = vld [vmem:[#allocation3 + $0xc0] sm:$0xff]
      %v2809 = vld [vmem:[#allocation3 + $0xc8] sm:$0xff]
      %v2810 = vld [vmem:[#allocation3 + $0xd0] sm:$0xff]
      %v2811 = vld [vmem:[#allocation3 + $0xd8] sm:$0xff]
      %v2812 = vld [vmem:[#allocation3 + $0xe0] sm:$0xff]
      %v2813 = vld [vmem:[#allocation3 + $0xe8] sm:$0xff]
      %v2814 = vld [vmem:[#allocation3 + $0xf0] sm:$0xff]
      %v2815 = vld [vmem:[#allocation3 + $0xf8] sm:$0xff]
      %v2816 = vsub.f32 %v2721, %v2784
      %v2817 = vsub.f32 %v2723, %v2785
      %v2818 = vsub.f32 %v2725, %v2786
      %v2819 = vsub.f32 %v2727, %v2787
      %v2820 = vsub.f32 %v2729, %v2788
      %v2821 = vsub.f32 %v2731, %v2789
      %v2822 = vsub.f32 %v2733, %v2790
      %v2823 = vsub.f32 %v2735, %v2791
      %v2824 = vsub.f32 %v2737, %v2792
      %v2825 = vsub.f32 %v2739, %v2793
      %v2826 = vsub.f32 %v2741, %v2794
      %v2827 = vsub.f32 %v2743, %v2795
      %v2828 = vsub.f32 %v2745, %v2796
      %v2829 = vsub.f32 %v2747, %v2797
      %v2830 = vsub.f32 %v2749, %v2798
      %v2831 = vsub.f32 %v2751, %v2799
      %v2832 = vsub.f32 %v2753, %v2800
      %v2833 = vsub.f32 %v2755, %v2801
      %v2834 = vsub.f32 %v2757, %v2802
      %v2835 = vsub.f32 %v2759, %v2803
      %v2836 = vsub.f32 %v2761, %v2804
      %v2837 = vsub.f32 %v2763, %v2805
      %v2838 = vsub.f32 %v2765, %v2806
      %v2839 = vsub.f32 %v2767, %v2807
      %v2840 = vsub.f32 %v2769, %v2808
      %v2841 = vsub.f32 %v2771, %v2809
      %v2842 = vsub.f32 %v2773, %v2810
      %v2843 = vsub.f32 %v2775, %v2811
      %v2844 = vsub.f32 %v2777, %v2812
      %v2845 = vsub.f32 %v2779, %v2813
      %v2846 = vsub.f32 %v2781, %v2814
      %v2847 = vsub.f32 %v2783, %v2815
      %v2848 = vld [vmem:[#allocation4] sm:$0xff]
      %v2849 = vld [vmem:[#allocation4 + $0x8] sm:$0xff]
      %v2850 = vld [vmem:[#allocation4 + $0x10] sm:$0xff]
      %v2851 = vld [vmem:[#allocation4 + $0x18] sm:$0xff]
      %v2852 = vld [vmem:[#allocation4 + $0x20] sm:$0xff]
      %v2853 = vld [vmem:[#allocation4 + $0x28] sm:$0xff]
      %v2854 = vld [vmem:[#allocation4 + $0x30] sm:$0xff]
      %v2855 = vld [vmem:[#allocation4 + $0x38] sm:$0xff]
      %v2856 = vld [vmem:[#allocation4 + $0x40] sm:$0xff]
      %v2857 = vld [vmem:[#allocation4 + $0x48] sm:$0xff]
      %v2858 = vld [vmem:[#allocation4 + $0x50] sm:$0xff]
      %v2859 = vld [vmem:[#allocation4 + $0x58] sm:$0xff]
      %v2860 = vld [vmem:[#allocation4 + $0x60] sm:$0xff]
      %v2861 = vld [vmem:[#allocation4 + $0x68] sm:$0xff]
      %v2862 = vld [vmem:[#allocation4 + $0x70] sm:$0xff]
      %v2863 = vld [vmem:[#allocation4 + $0x78] sm:$0xff]
      %v2864 = vld [vmem:[#allocation4 + $0x80] sm:$0xff]
      %v2865 = vld [vmem:[#allocation4 + $0x88] sm:$0xff]
      %v2866 = vld [vmem:[#allocation4 + $0x90] sm:$0xff]
      %v2867 = vld [vmem:[#allocation4 + $0x98] sm:$0xff]
      %v2868 = vld [vmem:[#allocation4 + $0xa0] sm:$0xff]
      %v2869 = vld [vmem:[#allocation4 + $0xa8] sm:$0xff]
      %v2870 = vld [vmem:[#allocation4 + $0xb0] sm:$0xff]
      %v2871 = vld [vmem:[#allocation4 + $0xb8] sm:$0xff]
      %v2872 = vld [vmem:[#allocation4 + $0xc0] sm:$0xff]
      %v2873 = vld [vmem:[#allocation4 + $0xc8] sm:$0xff]
      %v2874 = vld [vmem:[#allocation4 + $0xd0] sm:$0xff]
      %v2875 = vld [vmem:[#allocation4 + $0xd8] sm:$0xff]
      %v2876 = vld [vmem:[#allocation4 + $0xe0] sm:$0xff]
      %v2877 = vld [vmem:[#allocation4 + $0xe8] sm:$0xff]
      %v2878 = vld [vmem:[#allocation4 + $0xf0] sm:$0xff]
      %v2879 = vld [vmem:[#allocation4 + $0xf8] sm:$0xff]
      %v2880 = vlog2.pop %v2848
      %v2881 = vmul.f32 %v2880, 0.6931472
      %v2882 = vlog2.pop %v2849
      %v2883 = vmul.f32 %v2882, 0.6931472
      %v2884 = vlog2.pop %v2850
      %v2885 = vmul.f32 %v2884, 0.6931472
      %v2886 = vlog2.pop %v2851
      %v2887 = vmul.f32 %v2886, 0.6931472
      %v2888 = vlog2.pop %v2852
      %v2889 = vmul.f32 %v2888, 0.6931472
      %v2890 = vlog2.pop %v2853
      %v2891 = vmul.f32 %v2890, 0.6931472
      %v2892 = vlog2.pop %v2854
      %v2893 = vmul.f32 %v2892, 0.6931472
      %v2894 = vlog2.pop %v2855
      %v2895 = vmul.f32 %v2894, 0.6931472
      %v2896 = vlog2.pop %v2856
      %v2897 = vmul.f32 %v2896, 0.6931472
      %v2898 = vlog2.pop %v2857
      %v2899 = vmul.f32 %v2898, 0.6931472
      %v2900 = vlog2.pop %v2858
      %v2901 = vmul.f32 %v2900, 0.6931472
      %v2902 = vlog2.pop %v2859
      %v2903 = vmul.f32 %v2902, 0.6931472
      %v2904 = vlog2.pop %v2860
      %v2905 = vmul.f32 %v2904, 0.6931472
      %v2906 = vlog2.pop %v2861
      %v2907 = vmul.f32 %v2906, 0.6931472
      %v2908 = vlog2.pop %v2862
      %v2909 = vmul.f32 %v2908, 0.6931472
      %v2910 = vlog2.pop %v2863
      %v2911 = vmul.f32 %v2910, 0.6931472
      %v2912 = vlog2.pop %v2864
      %v2913 = vmul.f32 %v2912, 0.6931472
      %v2914 = vlog2.pop %v2865
      %v2915 = vmul.f32 %v2914, 0.6931472
      %v2916 = vlog2.pop %v2866
      %v2917 = vmul.f32 %v2916, 0.6931472
      %v2918 = vlog2.pop %v2867
      %v2919 = vmul.f32 %v2918, 0.6931472
      %v2920 = vlog2.pop %v2868
      %v2921 = vmul.f32 %v2920, 0.6931472
      %v2922 = vlog2.pop %v2869
      %v2923 = vmul.f32 %v2922, 0.6931472
      %v2924 = vlog2.pop %v2870
      %v2925 = vmul.f32 %v2924, 0.6931472
      %v2926 = vlog2.pop %v2871
      %v2927 = vmul.f32 %v2926, 0.6931472
      %v2928 = vlog2.pop %v2872
      %v2929 = vmul.f32 %v2928, 0.6931472
      %v2930 = vlog2.pop %v2873
      %v2931 = vmul.f32 %v2930, 0.6931472
      %v2932 = vlog2.pop %v2874
      %v2933 = vmul.f32 %v2932, 0.6931472
      %v2934 = vlog2.pop %v2875
      %v2935 = vmul.f32 %v2934, 0.6931472
      %v2936 = vlog2.pop %v2876
      %v2937 = vmul.f32 %v2936, 0.6931472
      %v2938 = vlog2.pop %v2877
      %v2939 = vmul.f32 %v2938, 0.6931472
      %v2940 = vlog2.pop %v2878
      %v2941 = vmul.f32 %v2940, 0.6931472
      %v2942 = vlog2.pop %v2879
      %v2943 = vmul.f32 %v2942, 0.6931472
      %v2944 = vsub.f32 %v2816, %v2881
      %v2945 = vsub.f32 %v2817, %v2883
      %v2946 = vsub.f32 %v2818, %v2885
      %v2947 = vsub.f32 %v2819, %v2887
      %v2948 = vsub.f32 %v2820, %v2889
      %v2949 = vsub.f32 %v2821, %v2891
      %v2950 = vsub.f32 %v2822, %v2893
      %v2951 = vsub.f32 %v2823, %v2895
      %v2952 = vsub.f32 %v2824, %v2897
      %v2953 = vsub.f32 %v2825, %v2899
      %v2954 = vsub.f32 %v2826, %v2901
      %v2955 = vsub.f32 %v2827, %v2903
      %v2956 = vsub.f32 %v2828, %v2905
      %v2957 = vsub.f32 %v2829, %v2907
      %v2958 = vsub.f32 %v2830, %v2909
      %v2959 = vsub.f32 %v2831, %v2911
      %v2960 = vsub.f32 %v2832, %v2913
      %v2961 = vsub.f32 %v2833, %v2915
      %v2962 = vsub.f32 %v2834, %v2917
      %v2963 = vsub.f32 %v2835, %v2919
      %v2964 = vsub.f32 %v2836, %v2921
      %v2965 = vsub.f32 %v2837, %v2923
      %v2966 = vsub.f32 %v2838, %v2925
      %v2967 = vsub.f32 %v2839, %v2927
      %v2968 = vsub.f32 %v2840, %v2929
      %v2969 = vsub.f32 %v2841, %v2931
      %v2970 = vsub.f32 %v2842, %v2933
      %v2971 = vsub.f32 %v2843, %v2935
      %v2972 = vsub.f32 %v2844, %v2937
      %v2973 = vsub.f32 %v2845, %v2939
      %v2974 = vsub.f32 %v2846, %v2941
      %v2975 = vsub.f32 %v2847, %v2943
      %vm2976 = vcmp.lt.s32.totalorder %v2624, 8
      %vm2977 = vcmp.lt.s32.totalorder %v2625, 8
      %vm2978 = vcmp.lt.s32.totalorder %v2626, 8
      %vm2979 = vcmp.lt.s32.totalorder %v2627, 8
      %vm2980 = vcmp.lt.s32.totalorder %v2628, 8
      %vm2981 = vcmp.lt.s32.totalorder %v2629, 8
      %vm2982 = vcmp.lt.s32.totalorder %v2630, 8
      %vm2983 = vcmp.lt.s32.totalorder %v2631, 8
      %vm2984 = vcmp.lt.s32.totalorder %v2632, 8
      %vm2985 = vcmp.lt.s32.totalorder %v2633, 8
      %vm2986 = vcmp.lt.s32.totalorder %v2634, 8
      %vm2987 = vcmp.lt.s32.totalorder %v2635, 8
      %vm2988 = vcmp.lt.s32.totalorder %v2636, 8
      %vm2989 = vcmp.lt.s32.totalorder %v2637, 8
      %vm2990 = vcmp.lt.s32.totalorder %v2638, 8
      %vm2991 = vcmp.lt.s32.totalorder %v2639, 8
      %vm2992 = vcmp.lt.s32.totalorder %v2640, 8
      %vm2993 = vcmp.lt.s32.totalorder %v2641, 8
      %vm2994 = vcmp.lt.s32.totalorder %v2642, 8
      %vm2995 = vcmp.lt.s32.totalorder %v2643, 8
      %vm2996 = vcmp.lt.s32.totalorder %v2644, 8
      %vm2997 = vcmp.lt.s32.totalorder %v2645, 8
      %vm2998 = vcmp.lt.s32.totalorder %v2646, 8
      %vm2999 = vcmp.lt.s32.totalorder %v2647, 8
      %vm3000 = vcmp.lt.s32.totalorder %v2648, 8
      %vm3001 = vcmp.lt.s32.totalorder %v2649, 8
      %vm3002 = vcmp.lt.s32.totalorder %v2650, 8
      %vm3003 = vcmp.lt.s32.totalorder %v2651, 8
      %vm3004 = vcmp.lt.s32.totalorder %v2652, 8
      %vm3005 = vcmp.lt.s32.totalorder %v2653, 8
      %vm3006 = vcmp.lt.s32.totalorder %v2654, 8
      %vm3007 = vcmp.lt.s32.totalorder %v2655, 8
      %v3008 = vsel %vm2976, %v2944, 0.0
      %v3009 = vsel %vm2977, %v2945, 0.0
      %v3010 = vsel %vm2978, %v2946, 0.0
      %v3011 = vsel %vm2979, %v2947, 0.0
      %v3012 = vsel %vm2980, %v2948, 0.0
      %v3013 = vsel %vm2981, %v2949, 0.0
      %v3014 = vsel %vm2982, %v2950, 0.0
      %v3015 = vsel %vm2983, %v2951, 0.0
      %v3016 = vsel %vm2984, %v2952, 0.0
      %v3017 = vsel %vm2985, %v2953, 0.0
      %v3018 = vsel %vm2986, %v2954, 0.0
      %v3019 = vsel %vm2987, %v2955, 0.0
      %v3020 = vsel %vm2988, %v2956, 0.0
      %v3021 = vsel %vm2989, %v2957, 0.0
      %v3022 = vsel %vm2990, %v2958, 0.0
      %v3023 = vsel %vm2991, %v2959, 0.0
      %v3024 = vsel %vm2992, %v2960, 0.0
      %v3025 = vsel %vm2993, %v2961, 0.0
      %v3026 = vsel %vm2994, %v2962, 0.0
      %v3027 = vsel %vm2995, %v2963, 0.0
      %v3028 = vsel %vm2996, %v2964, 0.0
      %v3029 = vsel %vm2997, %v2965, 0.0
      %v3030 = vsel %vm2998, %v2966, 0.0
      %v3031 = vsel %vm2999, %v2967, 0.0
      %v3032 = vsel %vm3000, %v2968, 0.0
      %v3033 = vsel %vm3001, %v2969, 0.0
      %v3034 = vsel %vm3002, %v2970, 0.0
      %v3035 = vsel %vm3003, %v2971, 0.0
      %v3036 = vsel %vm3004, %v2972, 0.0
      %v3037 = vsel %vm3005, %v2973, 0.0
      %v3038 = vsel %vm3006, %v2974, 0.0
      %v3039 = vsel %vm3007, %v2975, 0.0
      %vm3040 = vcmask 7168
      %3041 = vst.msk [vmem:[%s4] sm:$0xff] %vm3040, %v3008
      %3042 = vst.msk [vmem:[%s4 + $0x8] sm:$0xff] %vm3040, %v3009
      %3043 = vst.msk [vmem:[%s4 + $0x10] sm:$0xff] %vm3040, %v3010
      %3044 = vst.msk [vmem:[%s4 + $0x18] sm:$0xff] %vm3040, %v3011
      %3045 = vst.msk [vmem:[%s4 + $0x20] sm:$0xff] %vm3040, %v3012
      %3046 = vst.msk [vmem:[%s4 + $0x28] sm:$0xff] %vm3040, %v3013
      %3047 = vst.msk [vmem:[%s4 + $0x30] sm:$0xff] %vm3040, %v3014
      %3048 = vst.msk [vmem:[%s4 + $0x38] sm:$0xff] %vm3040, %v3015
      %3049 = vst.msk [vmem:[%s4 + $0x40] sm:$0xff] %vm3040, %v3016
      %3050 = vst.msk [vmem:[%s4 + $0x48] sm:$0xff] %vm3040, %v3017
      %3051 = vst.msk [vmem:[%s4 + $0x50] sm:$0xff] %vm3040, %v3018
      %3052 = vst.msk [vmem:[%s4 + $0x58] sm:$0xff] %vm3040, %v3019
      %3053 = vst.msk [vmem:[%s4 + $0x60] sm:$0xff] %vm3040, %v3020
      %3054 = vst.msk [vmem:[%s4 + $0x68] sm:$0xff] %vm3040, %v3021
      %3055 = vst.msk [vmem:[%s4 + $0x70] sm:$0xff] %vm3040, %v3022
      %3056 = vst.msk [vmem:[%s4 + $0x78] sm:$0xff] %vm3040, %v3023
      %3057 = vst.msk [vmem:[%s4 + $0x80] sm:$0xff] %vm3040, %v3024
      %3058 = vst.msk [vmem:[%s4 + $0x88] sm:$0xff] %vm3040, %v3025
      %3059 = vst.msk [vmem:[%s4 + $0x90] sm:$0xff] %vm3040, %v3026
      %3060 = vst.msk [vmem:[%s4 + $0x98] sm:$0xff] %vm3040, %v3027
      %3061 = vst.msk [vmem:[%s4 + $0xa0] sm:$0xff] %vm3040, %v3028
      %3062 = vst.msk [vmem:[%s4 + $0xa8] sm:$0xff] %vm3040, %v3029
      %3063 = vst.msk [vmem:[%s4 + $0xb0] sm:$0xff] %vm3040, %v3030
      %3064 = vst.msk [vmem:[%s4 + $0xb8] sm:$0xff] %vm3040, %v3031
      %3065 = vst.msk [vmem:[%s4 + $0xc0] sm:$0xff] %vm3040, %v3032
      %3066 = vst.msk [vmem:[%s4 + $0xc8] sm:$0xff] %vm3040, %v3033
      %3067 = vst.msk [vmem:[%s4 + $0xd0] sm:$0xff] %vm3040, %v3034
      %3068 = vst.msk [vmem:[%s4 + $0xd8] sm:$0xff] %vm3040, %v3035
      %3069 = vst.msk [vmem:[%s4 + $0xe0] sm:$0xff] %vm3040, %v3036
      %3070 = vst.msk [vmem:[%s4 + $0xe8] sm:$0xff] %vm3040, %v3037
      %3071 = vst.msk [vmem:[%s4 + $0xf0] sm:$0xff] %vm3040, %v3038
      %3072 = vst.msk [vmem:[%s4 + $0xf8] sm:$0xff] %vm3040, %v3039
    $region33: #{contrastive_loss.1} parent=28 // pred_fallthru
      _
    %p3073 = scmp.ge.s32.totalorder %s19, 8
    // Predicated region
    $region34: #{contrastive_loss.1} parent=28 // pred_check
      %p3074 = pneg %p3073
    $region35: #{contrastive_loss.1} parent=28 // pred_check_branch
      %3076 = sbr.rel (%p3074) target = $region37
    $region36: #{contrastive_loss.1} parent=28 // pred_region
      %vm3077 = vcmask 7168
      %3078 = vst.msk [vmem:[%s4] sm:$0xff] %vm3077, 0.0
      %3079 = vst.msk [vmem:[%s4 + $0x8] sm:$0xff] %vm3077, 0.0
      %3080 = vst.msk [vmem:[%s4 + $0x10] sm:$0xff] %vm3077, 0.0
      %3081 = vst.msk [vmem:[%s4 + $0x18] sm:$0xff] %vm3077, 0.0
      %3082 = vst.msk [vmem:[%s4 + $0x20] sm:$0xff] %vm3077, 0.0
      %3083 = vst.msk [vmem:[%s4 + $0x28] sm:$0xff] %vm3077, 0.0
      %3084 = vst.msk [vmem:[%s4 + $0x30] sm:$0xff] %vm3077, 0.0
      %3085 = vst.msk [vmem:[%s4 + $0x38] sm:$0xff] %vm3077, 0.0
      %3086 = vst.msk [vmem:[%s4 + $0x40] sm:$0xff] %vm3077, 0.0
      %3087 = vst.msk [vmem:[%s4 + $0x48] sm:$0xff] %vm3077, 0.0
      %3088 = vst.msk [vmem:[%s4 + $0x50] sm:$0xff] %vm3077, 0.0
      %3089 = vst.msk [vmem:[%s4 + $0x58] sm:$0xff] %vm3077, 0.0
      %3090 = vst.msk [vmem:[%s4 + $0x60] sm:$0xff] %vm3077, 0.0
      %3091 = vst.msk [vmem:[%s4 + $0x68] sm:$0xff] %vm3077, 0.0
      %3092 = vst.msk [vmem:[%s4 + $0x70] sm:$0xff] %vm3077, 0.0
      %3093 = vst.msk [vmem:[%s4 + $0x78] sm:$0xff] %vm3077, 0.0
      %3094 = vst.msk [vmem:[%s4 + $0x80] sm:$0xff] %vm3077, 0.0
      %3095 = vst.msk [vmem:[%s4 + $0x88] sm:$0xff] %vm3077, 0.0
      %3096 = vst.msk [vmem:[%s4 + $0x90] sm:$0xff] %vm3077, 0.0
      %3097 = vst.msk [vmem:[%s4 + $0x98] sm:$0xff] %vm3077, 0.0
      %3098 = vst.msk [vmem:[%s4 + $0xa0] sm:$0xff] %vm3077, 0.0
      %3099 = vst.msk [vmem:[%s4 + $0xa8] sm:$0xff] %vm3077, 0.0
      %3100 = vst.msk [vmem:[%s4 + $0xb0] sm:$0xff] %vm3077, 0.0
      %3101 = vst.msk [vmem:[%s4 + $0xb8] sm:$0xff] %vm3077, 0.0
      %3102 = vst.msk [vmem:[%s4 + $0xc0] sm:$0xff] %vm3077, 0.0
      %3103 = vst.msk [vmem:[%s4 + $0xc8] sm:$0xff] %vm3077, 0.0
      %3104 = vst.msk [vmem:[%s4 + $0xd0] sm:$0xff] %vm3077, 0.0
      %3105 = vst.msk [vmem:[%s4 + $0xd8] sm:$0xff] %vm3077, 0.0
      %3106 = vst.msk [vmem:[%s4 + $0xe0] sm:$0xff] %vm3077, 0.0
      %3107 = vst.msk [vmem:[%s4 + $0xe8] sm:$0xff] %vm3077, 0.0
      %3108 = vst.msk [vmem:[%s4 + $0xf0] sm:$0xff] %vm3077, 0.0
      %3109 = vst.msk [vmem:[%s4 + $0xf8] sm:$0xff] %vm3077, 0.0
    $region37: #{contrastive_loss.1} parent=28 // pred_fallthru
      _
  $region29: #{contrastive_loss.1} parent=0 // pred_fallthru
    _
  // Predicated region
  $region38: #{contrastive_loss.1} parent=0 // pred_check
    _
  $region39: #{contrastive_loss.1} parent=0 // pred_check_branch
    %3111 = sbr.rel (0) target = $region41
  $region40: #{contrastive_loss.1} parent=0 // pred_region
    _
  $region41: #{contrastive_loss.1} parent=0 // pred_fallthru
    _
  // Predicated region
  $region42: #{contrastive_loss.1} parent=0 // pred_check
    _
  $region43: #{contrastive_loss.1} parent=0 // pred_check_branch
    %3113 = sbr.rel (0) target = $region45
  $region44: #{contrastive_loss.1} parent=0 // pred_region
    _
  $region45: #{contrastive_loss.1} parent=0 // pred_fallthru
    _

</llo_original>
